<compile_context>
chip_gen: v6e
topology: v6e:2x2x1
jax: 0.10.0
libtpu: 0.0.40
codegen_flags: <defaults>
</compile_context>

<pallas_src>
import jax
import jax.numpy as jnp
from jax.experimental import pallas as pl
from jax.experimental.pallas import tpu as pltpu

LANE = 128


def _round_up(n, m):
    return ((n + m - 1) // m) * m


def _linear(v, w_ref, b_ref):
    # bf16 operands on the MXU, f32 accumulation, f32 bias add.
    return (
        jnp.dot(v.astype(w_ref.dtype), w_ref[...], preferred_element_type=jnp.float32)
        + b_ref[...]
    )


def _leaky_relu(v, slope):
    return jnp.where(v > 0, v, slope * v)


def predictor_kernel(
    x_ref,
    wu_ref, bu_ref,                                     # up: Linear(features, hidden)
    w1_ref, b1_ref, w2_ref, b2_ref, w3_ref, b3_ref,     # ResBlock "long"
    wd1_ref, bd1_ref,                                   # down: Linear(hidden, 128)
    wd2_ref, bd2_ref,                                   # down: Linear(128, 64)  (lane-padded)
    wd3_ref, bd3_ref,                                   # down: Linear(64, 32)   (lane-padded)
    wd4_ref, bd4_ref,                                   # down: Linear(32, out)  (lane-padded)
    o_ref,
):
    x = x_ref[...]

    # up
    y = _linear(x, wu_ref, bu_ref)                      # [TB, hidden] f32

    # ResBlock: join = ReLU(long(y) + y)
    h = _leaky_relu(_linear(y, w1_ref, b1_ref), 0.1)
    h = _leaky_relu(_linear(h, w2_ref, b2_ref), 0.1)
    h = _linear(h, w3_ref, b3_ref)
    y = jnp.maximum(h + y, 0.0)

    # down (all widths lane-padded to 128; padded columns stay exactly zero)
    z = _linear(y, wd1_ref, bd1_ref)                    # [TB, 128]
    z = _linear(z, wd2_ref, bd2_ref)                    # [TB, 128] (64 live)
    # Dropout(0.1): identity at inference time.
    z = _leaky_relu(z, 0.01)                            # nn.LeakyReLU default slope
    z = _linear(z, wd3_ref, bd3_ref)                    # [TB, 128] (32 live)
    z = _linear(z, wd4_ref, bd4_ref)                    # [TB, 128] (outputs live)

    # outputs == 1 branch: (tanh(z) + 1) / 2   (padded cols become 0.5, sliced off later)
    o_ref[...] = (jnp.tanh(z) + 1.0) * 0.5


def predictor_forward(x, params, *, outputs=1, batch_tile=None):
    """x: [B, features] float32. params: list of (w, b) pairs with w stored [in, out]."""
    b, f = x.shape

    # Batch tile: 256 fills the 256x256 MXU rows on v6e/v7x; for tiny batches
    # just round up to a sublane multiple so we don't burn compute on padding.
    if batch_tile is None:
        batch_tile = 256 if b >= 256 else max(8, _round_up(b, 8))
    tb = batch_tile
    b_pad = _round_up(max(b, tb), tb)

    f_pad = _round_up(f, LANE)
    x_p = jnp.pad(x, ((0, b_pad - b), (0, f_pad - f))).astype(jnp.bfloat16)

    # Lane-pad every layer to multiples of 128 (zeros), weights -> bf16, biases f32 [1, out].
    flat_params = []
    prev_out_pad = f_pad
    total_flops = 0
    weight_bytes = 0
    max_width = f_pad
    for w, bias in params:
        d_in, d_out = w.shape
        d_in_p = _round_up(d_in, LANE)
        d_out_p = _round_up(d_out, LANE)
        assert d_in_p == prev_out_pad, "layer dims must chain"
        wp = (
            jnp.zeros((d_in_p, d_out_p), jnp.bfloat16)
            .at[:d_in, :d_out].set(w.astype(jnp.bfloat16))
        )
        bp = (
            jnp.zeros((1, d_out_p), jnp.float32)
            .at[0, :d_out].set(bias.astype(jnp.float32))
        )
        flat_params += [wp, bp]
        total_flops += 2 * d_in_p * d_out_p
        weight_bytes += wp.size * 2 + bp.size * 4
        max_width = max(max_width, d_out_p)
        prev_out_pad = d_out_p
    out_pad = prev_out_pad

    grid = (pl.cdiv(b_pad, tb),)

    # x / out stream per grid step; weights pinned via constant index_map.
    in_specs = [pl.BlockSpec((tb, f_pad), lambda i: (i, 0))]
    in_specs += [pl.BlockSpec(arr.shape, lambda i: (0, 0)) for arr in flat_params]
    out_specs = pl.BlockSpec((tb, out_pad), lambda i: (i, 0))
    out_shape = jax.ShapeDtypeStruct((b_pad, out_pad), jnp.float32)

    # Size VMEM to actual need (weights x2 for buffering slack + streamed tiles +
    # f32 activation working set), capped at 64 MiB (v7x physical VMEM).
    act_bytes = 6 * tb * max_width * 4
    needed = 2 * weight_bytes + 2 * (tb * f_pad * 2) + 2 * (tb * out_pad * 4) + act_bytes
    vmem_limit = int(min(max(int(needed * 1.25), 16 << 20), 64 << 20))

    cost = pl.CostEstimate(
        flops=int(total_flops) * b_pad,
        transcendentals=b_pad * out_pad,
        bytes_accessed=b_pad * f_pad * 2 + weight_bytes + b_pad * out_pad * 4,
    )

    out = pl.pallas_call(
        predictor_kernel,
        grid=grid,
        in_specs=in_specs,
        out_specs=out_specs,
        out_shape=out_shape,
        compiler_params=pltpu.CompilerParams(
            dimension_semantics=("parallel",),
            vmem_limit_bytes=vmem_limit,
        ),
        cost_estimate=cost,
    )(x_p, *flat_params)

    return out[:b, :outputs]


def init_params(key, features, hidden, outputs):
    """Deterministic synthetic parameters; weights stored as [in, out]."""
    dims = [
        (features, hidden),   # up.0
        (hidden, hidden),     # ResBlock.long.0
        (hidden, hidden),     # ResBlock.long.2
        (hidden, hidden),     # ResBlock.long.4
        (hidden, 128),        # down.0
        (128, 64),            # down.1
        (64, 32),             # down.4
        (32, outputs),        # down.5
    ]
    params = []
    for (d_in, d_out) in dims:
        key, kw, kb = jax.random.split(key, 3)
        scale = 1.0 / jnp.sqrt(jnp.float32(d_in))
        w = jax.random.uniform(kw, (d_in, d_out), jnp.float32, -scale, scale)
        bias = jax.random.uniform(kb, (d_out,), jnp.float32, -scale, scale)
        params.append((w, bias))
    return params


if __name__ == "__main__":
    # Small shapes consistent with PredictorModel(features, outputs=1, hidden).
    FEATURES, HIDDEN, OUTPUTS, BATCH = 256, 512, 1, 2

    key = jax.random.PRNGKey(0)
    key, kx = jax.random.split(key)
    x = jax.random.normal(kx, (BATCH, FEATURES), jnp.float32)
    params = init_params(key, FEATURES, HIDDEN, OUTPUTS)

    y = predictor_forward(x, params, outputs=OUTPUTS)
    y = jax.block_until_ready(y)

    assert y.shape == (BATCH, OUTPUTS), y.shape
    assert bool(jnp.all(jnp.isfinite(y)))
    assert bool(jnp.all((y >= 0.0) & (y <= 1.0)))  # (tanh+1)/2 range
    print("KERNEL_OK")
</pallas_src>

<mosaic_0001>
module attributes {stable_mosaic.version = 11 : i64} {
  func.func @predictor_kernel(%arg0: i32, %arg1: memref<8x256xbf16, #tpu.memory_space<vmem>>, %arg2: memref<256x512xbf16, #tpu.memory_space<vmem>>, %arg3: memref<1x512xf32, #tpu.memory_space<vmem>>, %arg4: memref<512x512xbf16, #tpu.memory_space<vmem>>, %arg5: memref<1x512xf32, #tpu.memory_space<vmem>>, %arg6: memref<512x512xbf16, #tpu.memory_space<vmem>>, %arg7: memref<1x512xf32, #tpu.memory_space<vmem>>, %arg8: memref<512x512xbf16, #tpu.memory_space<vmem>>, %arg9: memref<1x512xf32, #tpu.memory_space<vmem>>, %arg10: memref<512x128xbf16, #tpu.memory_space<vmem>>, %arg11: memref<1x128xf32, #tpu.memory_space<vmem>>, %arg12: memref<128x128xbf16, #tpu.memory_space<vmem>>, %arg13: memref<1x128xf32, #tpu.memory_space<vmem>>, %arg14: memref<128x128xbf16, #tpu.memory_space<vmem>>, %arg15: memref<1x128xf32, #tpu.memory_space<vmem>>, %arg16: memref<128x128xbf16, #tpu.memory_space<vmem>>, %arg17: memref<1x128xf32, #tpu.memory_space<vmem>>, %arg18: memref<8x128xf32, #tpu.memory_space<vmem>>) attributes {dimension_semantics = [#tpu.dimension_semantics<parallel>], iteration_bounds = array<i64: 1>, scalar_prefetch = 0 : i64, scratch_operands = 0 : i64, tpu.core_type = #tpu.core_type<tc>, window_params = [{transform_indices = @transform_0, window_bounds = array<i64: 8, 256>}, {pipeline_mode = #tpu.pipeline_mode<synchronous>, transform_indices = @transform_1, window_bounds = array<i64: 256, 512>}, {pipeline_mode = #tpu.pipeline_mode<synchronous>, transform_indices = @transform_2, window_bounds = array<i64: 1, 512>}, {pipeline_mode = #tpu.pipeline_mode<synchronous>, transform_indices = @transform_3, window_bounds = array<i64: 512, 512>}, {pipeline_mode = #tpu.pipeline_mode<synchronous>, transform_indices = @transform_4, window_bounds = array<i64: 1, 512>}, {pipeline_mode = #tpu.pipeline_mode<synchronous>, transform_indices = @transform_5, window_bounds = array<i64: 512, 512>}, {pipeline_mode = #tpu.pipeline_mode<synchronous>, transform_indices = @transform_6, window_bounds = array<i64: 1, 512>}, {pipeline_mode = #tpu.pipeline_mode<synchronous>, transform_indices = @transform_7, window_bounds = array<i64: 512, 512>}, {pipeline_mode = #tpu.pipeline_mode<synchronous>, transform_indices = @transform_8, window_bounds = array<i64: 1, 512>}, {pipeline_mode = #tpu.pipeline_mode<synchronous>, transform_indices = @transform_9, window_bounds = array<i64: 512, 128>}, {pipeline_mode = #tpu.pipeline_mode<synchronous>, transform_indices = @transform_10, window_bounds = array<i64: 1, 128>}, {pipeline_mode = #tpu.pipeline_mode<synchronous>, transform_indices = @transform_11, window_bounds = array<i64: 128, 128>}, {pipeline_mode = #tpu.pipeline_mode<synchronous>, transform_indices = @transform_12, window_bounds = array<i64: 1, 128>}, {pipeline_mode = #tpu.pipeline_mode<synchronous>, transform_indices = @transform_13, window_bounds = array<i64: 128, 128>}, {pipeline_mode = #tpu.pipeline_mode<synchronous>, transform_indices = @transform_14, window_bounds = array<i64: 1, 128>}, {pipeline_mode = #tpu.pipeline_mode<synchronous>, transform_indices = @transform_15, window_bounds = array<i64: 128, 128>}, {pipeline_mode = #tpu.pipeline_mode<synchronous>, transform_indices = @transform_16, window_bounds = array<i64: 1, 128>}, {transform_indices = @transform_17, window_bounds = array<i64: 8, 128>}]} {
    %c0 = arith.constant 0 : index
    %c0_0 = arith.constant 0 : index
    %0 = vector.load %arg1[%c0, %c0_0] : memref<8x256xbf16, #tpu.memory_space<vmem>>, vector<8x256xbf16>
    %c0_1 = arith.constant 0 : index
    %c0_2 = arith.constant 0 : index
    %1 = vector.load %arg2[%c0_1, %c0_2] : memref<256x512xbf16, #tpu.memory_space<vmem>>, vector<256x512xbf16>
    %cst = arith.constant dense<0.000000e+00> : vector<8x512xf32>
    %2 = tpu.matmul %0, %1, %cst {dimension_numbers = #tpu.dot_dimension_numbers<[1], [0], [0], [1], [0, 0, 1, 1], [], []>} : vector<8x256xbf16>, vector<256x512xbf16>, vector<8x512xf32> -> vector<8x512xf32>
    %c0_3 = arith.constant 0 : index
    %c0_4 = arith.constant 0 : index
    %3 = vector.load %arg3[%c0_3, %c0_4] : memref<1x512xf32, #tpu.memory_space<vmem>>, vector<1x512xf32>
    %4 = vector.broadcast %3 : vector<1x512xf32> to vector<8x512xf32>
    %5 = arith.addf %2, %4 : vector<8x512xf32>
    %6 = arith.truncf %5 : vector<8x512xf32> to vector<8x512xbf16>
    %c0_5 = arith.constant 0 : index
    %c0_6 = arith.constant 0 : index
    %7 = vector.load %arg4[%c0_5, %c0_6] : memref<512x512xbf16, #tpu.memory_space<vmem>>, vector<512x512xbf16>
    %cst_7 = arith.constant dense<0.000000e+00> : vector<8x512xf32>
    %8 = tpu.matmul %6, %7, %cst_7 {dimension_numbers = #tpu.dot_dimension_numbers<[1], [0], [0], [1], [0, 0, 1, 1], [], []>} : vector<8x512xbf16>, vector<512x512xbf16>, vector<8x512xf32> -> vector<8x512xf32>
    %c0_8 = arith.constant 0 : index
    %c0_9 = arith.constant 0 : index
    %9 = vector.load %arg5[%c0_8, %c0_9] : memref<1x512xf32, #tpu.memory_space<vmem>>, vector<1x512xf32>
    %10 = vector.broadcast %9 : vector<1x512xf32> to vector<8x512xf32>
    %11 = arith.addf %8, %10 : vector<8x512xf32>
    %cst_10 = arith.constant 0.000000e+00 : f32
    %12 = vector.broadcast %cst_10 : f32 to vector<8x512xf32>
    %13 = arith.cmpf ogt, %11, %12 : vector<8x512xf32>
    %cst_11 = arith.constant 1.000000e-01 : f32
    %14 = vector.broadcast %cst_11 : f32 to vector<8x512xf32>
    %15 = arith.mulf %14, %11 : vector<8x512xf32>
    %16 = arith.select %13, %11, %15 : vector<8x512xi1>, vector<8x512xf32>
    %17 = arith.truncf %16 : vector<8x512xf32> to vector<8x512xbf16>
    %c0_12 = arith.constant 0 : index
    %c0_13 = arith.constant 0 : index
    %18 = vector.load %arg6[%c0_12, %c0_13] : memref<512x512xbf16, #tpu.memory_space<vmem>>, vector<512x512xbf16>
    %cst_14 = arith.constant dense<0.000000e+00> : vector<8x512xf32>
    %19 = tpu.matmul %17, %18, %cst_14 {dimension_numbers = #tpu.dot_dimension_numbers<[1], [0], [0], [1], [0, 0, 1, 1], [], []>} : vector<8x512xbf16>, vector<512x512xbf16>, vector<8x512xf32> -> vector<8x512xf32>
    %c0_15 = arith.constant 0 : index
    %c0_16 = arith.constant 0 : index
    %20 = vector.load %arg7[%c0_15, %c0_16] : memref<1x512xf32, #tpu.memory_space<vmem>>, vector<1x512xf32>
    %21 = vector.broadcast %20 : vector<1x512xf32> to vector<8x512xf32>
    %22 = arith.addf %19, %21 : vector<8x512xf32>
    %cst_17 = arith.constant 0.000000e+00 : f32
    %23 = vector.broadcast %cst_17 : f32 to vector<8x512xf32>
    %24 = arith.cmpf ogt, %22, %23 : vector<8x512xf32>
    %cst_18 = arith.constant 1.000000e-01 : f32
    %25 = vector.broadcast %cst_18 : f32 to vector<8x512xf32>
    %26 = arith.mulf %25, %22 : vector<8x512xf32>
    %27 = arith.select %24, %22, %26 : vector<8x512xi1>, vector<8x512xf32>
    %28 = arith.truncf %27 : vector<8x512xf32> to vector<8x512xbf16>
    %c0_19 = arith.constant 0 : index
    %c0_20 = arith.constant 0 : index
    %29 = vector.load %arg8[%c0_19, %c0_20] : memref<512x512xbf16, #tpu.memory_space<vmem>>, vector<512x512xbf16>
    %cst_21 = arith.constant dense<0.000000e+00> : vector<8x512xf32>
    %30 = tpu.matmul %28, %29, %cst_21 {dimension_numbers = #tpu.dot_dimension_numbers<[1], [0], [0], [1], [0, 0, 1, 1], [], []>} : vector<8x512xbf16>, vector<512x512xbf16>, vector<8x512xf32> -> vector<8x512xf32>
    %c0_22 = arith.constant 0 : index
    %c0_23 = arith.constant 0 : index
    %31 = vector.load %arg9[%c0_22, %c0_23] : memref<1x512xf32, #tpu.memory_space<vmem>>, vector<1x512xf32>
    %32 = vector.broadcast %31 : vector<1x512xf32> to vector<8x512xf32>
    %33 = arith.addf %30, %32 : vector<8x512xf32>
    %34 = arith.addf %33, %5 : vector<8x512xf32>
    %cst_24 = arith.constant 0.000000e+00 : f32
    %35 = vector.broadcast %cst_24 : f32 to vector<8x512xf32>
    %36 = arith.maximumf %34, %35 : vector<8x512xf32>
    %37 = arith.truncf %36 : vector<8x512xf32> to vector<8x512xbf16>
    %c0_25 = arith.constant 0 : index
    %c0_26 = arith.constant 0 : index
    %38 = vector.load %arg10[%c0_25, %c0_26] : memref<512x128xbf16, #tpu.memory_space<vmem>>, vector<512x128xbf16>
    %cst_27 = arith.constant dense<0.000000e+00> : vector<8x128xf32>
    %39 = tpu.matmul %37, %38, %cst_27 {dimension_numbers = #tpu.dot_dimension_numbers<[1], [0], [0], [1], [0, 0, 1, 1], [], []>} : vector<8x512xbf16>, vector<512x128xbf16>, vector<8x128xf32> -> vector<8x128xf32>
    %c0_28 = arith.constant 0 : index
    %c0_29 = arith.constant 0 : index
    %40 = vector.load %arg11[%c0_28, %c0_29] : memref<1x128xf32, #tpu.memory_space<vmem>>, vector<1x128xf32>
    %41 = vector.broadcast %40 : vector<1x128xf32> to vector<8x128xf32>
    %42 = arith.addf %39, %41 : vector<8x128xf32>
    %43 = arith.truncf %42 : vector<8x128xf32> to vector<8x128xbf16>
    %c0_30 = arith.constant 0 : index
    %c0_31 = arith.constant 0 : index
    %44 = vector.load %arg12[%c0_30, %c0_31] : memref<128x128xbf16, #tpu.memory_space<vmem>>, vector<128x128xbf16>
    %cst_32 = arith.constant dense<0.000000e+00> : vector<8x128xf32>
    %45 = tpu.matmul %43, %44, %cst_32 {dimension_numbers = #tpu.dot_dimension_numbers<[1], [0], [0], [1], [0, 0, 1, 1], [], []>} : vector<8x128xbf16>, vector<128x128xbf16>, vector<8x128xf32> -> vector<8x128xf32>
    %c0_33 = arith.constant 0 : index
    %c0_34 = arith.constant 0 : index
    %46 = vector.load %arg13[%c0_33, %c0_34] : memref<1x128xf32, #tpu.memory_space<vmem>>, vector<1x128xf32>
    %47 = vector.broadcast %46 : vector<1x128xf32> to vector<8x128xf32>
    %48 = arith.addf %45, %47 : vector<8x128xf32>
    %cst_35 = arith.constant 0.000000e+00 : f32
    %49 = vector.broadcast %cst_35 : f32 to vector<8x128xf32>
    %50 = arith.cmpf ogt, %48, %49 : vector<8x128xf32>
    %cst_36 = arith.constant 0.00999999977 : f32
    %51 = vector.broadcast %cst_36 : f32 to vector<8x128xf32>
    %52 = arith.mulf %51, %48 : vector<8x128xf32>
    %53 = arith.select %50, %48, %52 : vector<8x128xi1>, vector<8x128xf32>
    %54 = arith.truncf %53 : vector<8x128xf32> to vector<8x128xbf16>
    %c0_37 = arith.constant 0 : index
    %c0_38 = arith.constant 0 : index
    %55 = vector.load %arg14[%c0_37, %c0_38] : memref<128x128xbf16, #tpu.memory_space<vmem>>, vector<128x128xbf16>
    %cst_39 = arith.constant dense<0.000000e+00> : vector<8x128xf32>
    %56 = tpu.matmul %54, %55, %cst_39 {dimension_numbers = #tpu.dot_dimension_numbers<[1], [0], [0], [1], [0, 0, 1, 1], [], []>} : vector<8x128xbf16>, vector<128x128xbf16>, vector<8x128xf32> -> vector<8x128xf32>
    %c0_40 = arith.constant 0 : index
    %c0_41 = arith.constant 0 : index
    %57 = vector.load %arg15[%c0_40, %c0_41] : memref<1x128xf32, #tpu.memory_space<vmem>>, vector<1x128xf32>
    %58 = vector.broadcast %57 : vector<1x128xf32> to vector<8x128xf32>
    %59 = arith.addf %56, %58 : vector<8x128xf32>
    %60 = arith.truncf %59 : vector<8x128xf32> to vector<8x128xbf16>
    %c0_42 = arith.constant 0 : index
    %c0_43 = arith.constant 0 : index
    %61 = vector.load %arg16[%c0_42, %c0_43] : memref<128x128xbf16, #tpu.memory_space<vmem>>, vector<128x128xbf16>
    %cst_44 = arith.constant dense<0.000000e+00> : vector<8x128xf32>
    %62 = tpu.matmul %60, %61, %cst_44 {dimension_numbers = #tpu.dot_dimension_numbers<[1], [0], [0], [1], [0, 0, 1, 1], [], []>} : vector<8x128xbf16>, vector<128x128xbf16>, vector<8x128xf32> -> vector<8x128xf32>
    %c0_45 = arith.constant 0 : index
    %c0_46 = arith.constant 0 : index
    %63 = vector.load %arg17[%c0_45, %c0_46] : memref<1x128xf32, #tpu.memory_space<vmem>>, vector<1x128xf32>
    %64 = vector.broadcast %63 : vector<1x128xf32> to vector<8x128xf32>
    %65 = arith.addf %62, %64 : vector<8x128xf32>
    %66 = math.tanh %65 : vector<8x128xf32>
    %cst_47 = arith.constant 1.000000e+00 : f32
    %67 = vector.broadcast %cst_47 : f32 to vector<8x128xf32>
    %68 = arith.addf %66, %67 : vector<8x128xf32>
    %cst_48 = arith.constant 5.000000e-01 : f32
    %69 = vector.broadcast %cst_48 : f32 to vector<8x128xf32>
    %70 = arith.mulf %68, %69 : vector<8x128xf32>
    %c0_49 = arith.constant 0 : index
    %c0_50 = arith.constant 0 : index
    %71 = vector.load %arg18[%c0_49, %c0_50] : memref<8x128xf32, #tpu.memory_space<vmem>>, vector<8x128xf32>
    tpu.vector_store %arg18[%c0_49, %c0_50], %70 {strides = array<i32>} : memref<8x128xf32, #tpu.memory_space<vmem>>, vector<8x128xf32>,
    return
  }
  func.func @transform_0(%arg0: i32) -> (i32, i32) {
    %c0_i32 = arith.constant 0 : i32
    %c0_i32_0 = arith.constant 0 : i32
    return %arg0, %c0_i32 : i32, i32
  }
  func.func @transform_1(%arg0: i32) -> (i32, i32) {
    %c0_i32 = arith.constant 0 : i32
    %c0_i32_0 = arith.constant 0 : i32
    %c0_i32_1 = arith.constant 0 : i32
    return %c0_i32, %c0_i32_0 : i32, i32
  }
  func.func @transform_2(%arg0: i32) -> (i32, i32) {
    %c0_i32 = arith.constant 0 : i32
    %c0_i32_0 = arith.constant 0 : i32
    %c0_i32_1 = arith.constant 0 : i32
    return %c0_i32, %c0_i32_0 : i32, i32
  }
  func.func @transform_3(%arg0: i32) -> (i32, i32) {
    %c0_i32 = arith.constant 0 : i32
    %c0_i32_0 = arith.constant 0 : i32
    %c0_i32_1 = arith.constant 0 : i32
    return %c0_i32, %c0_i32_0 : i32, i32
  }
  func.func @transform_4(%arg0: i32) -> (i32, i32) {
    %c0_i32 = arith.constant 0 : i32
    %c0_i32_0 = arith.constant 0 : i32
    %c0_i32_1 = arith.constant 0 : i32
    return %c0_i32, %c0_i32_0 : i32, i32
  }
  func.func @transform_5(%arg0: i32) -> (i32, i32) {
    %c0_i32 = arith.constant 0 : i32
    %c0_i32_0 = arith.constant 0 : i32
    %c0_i32_1 = arith.constant 0 : i32
    return %c0_i32, %c0_i32_0 : i32, i32
  }
  func.func @transform_6(%arg0: i32) -> (i32, i32) {
    %c0_i32 = arith.constant 0 : i32
    %c0_i32_0 = arith.constant 0 : i32
    %c0_i32_1 = arith.constant 0 : i32
    return %c0_i32, %c0_i32_0 : i32, i32
  }
  func.func @transform_7(%arg0: i32) -> (i32, i32) {
    %c0_i32 = arith.constant 0 : i32
    %c0_i32_0 = arith.constant 0 : i32
    %c0_i32_1 = arith.constant 0 : i32
    return %c0_i32, %c0_i32_0 : i32, i32
  }
  func.func @transform_8(%arg0: i32) -> (i32, i32) {
    %c0_i32 = arith.constant 0 : i32
    %c0_i32_0 = arith.constant 0 : i32
    %c0_i32_1 = arith.constant 0 : i32
    return %c0_i32, %c0_i32_0 : i32, i32
  }
  func.func @transform_9(%arg0: i32) -> (i32, i32) {
    %c0_i32 = arith.constant 0 : i32
    %c0_i32_0 = arith.constant 0 : i32
    %c0_i32_1 = arith.constant 0 : i32
    return %c0_i32, %c0_i32_0 : i32, i32
  }
  func.func @transform_10(%arg0: i32) -> (i32, i32) {
    %c0_i32 = arith.constant 0 : i32
    %c0_i32_0 = arith.constant 0 : i32
    %c0_i32_1 = arith.constant 0 : i32
    return %c0_i32, %c0_i32_0 : i32, i32
  }
  func.func @transform_11(%arg0: i32) -> (i32, i32) {
    %c0_i32 = arith.constant 0 : i32
    %c0_i32_0 = arith.constant 0 : i32
    %c0_i32_1 = arith.constant 0 : i32
    return %c0_i32, %c0_i32_0 : i32, i32
  }
  func.func @transform_12(%arg0: i32) -> (i32, i32) {
    %c0_i32 = arith.constant 0 : i32
    %c0_i32_0 = arith.constant 0 : i32
    %c0_i32_1 = arith.constant 0 : i32
    return %c0_i32, %c0_i32_0 : i32, i32
  }
  func.func @transform_13(%arg0: i32) -> (i32, i32) {
    %c0_i32 = arith.constant 0 : i32
    %c0_i32_0 = arith.constant 0 : i32
    %c0_i32_1 = arith.constant 0 : i32
    return %c0_i32, %c0_i32_0 : i32, i32
  }
  func.func @transform_14(%arg0: i32) -> (i32, i32) {
    %c0_i32 = arith.constant 0 : i32
    %c0_i32_0 = arith.constant 0 : i32
    %c0_i32_1 = arith.constant 0 : i32
    return %c0_i32, %c0_i32_0 : i32, i32
  }
  func.func @transform_15(%arg0: i32) -> (i32, i32) {
    %c0_i32 = arith.constant 0 : i32
    %c0_i32_0 = arith.constant 0 : i32
    %c0_i32_1 = arith.constant 0 : i32
    return %c0_i32, %c0_i32_0 : i32, i32
  }
  func.func @transform_16(%arg0: i32) -> (i32, i32) {
    %c0_i32 = arith.constant 0 : i32
    %c0_i32_0 = arith.constant 0 : i32
    %c0_i32_1 = arith.constant 0 : i32
    return %c0_i32, %c0_i32_0 : i32, i32
  }
  func.func @transform_17(%arg0: i32) -> (i32, i32) {
    %c0_i32 = arith.constant 0 : i32
    %c0_i32_0 = arith.constant 0 : i32
    return %arg0, %c0_i32 : i32, i32
  }
}

</mosaic_0001>

<llo_original>
// kernel: tpu_custom_call.1
$region0: #{tpu_custom_call.1}
  #allocation0 [shape = 'u32[]', space=smem, size = 0x4, offset = 0x4, fixed_abs, tag = 'smem constant byte address 0x4 - core index']
  #allocation1 [shape = 'u32[144,128]{1,0:T(1,128)}', space=vmem, size = 0x12000, scoped, tag = 'internal scratch']
  %s0 = inlined_call_operand.hbm [shape: bf16[8,256], index: 0, kind: input, shape index: {}]
  %s1 = inlined_call_operand.hbm [shape: bf16[256,512], index: 1, kind: input, shape index: {}]
  %s2 = inlined_call_operand.hbm [shape: f32[1,512], index: 2, kind: input, shape index: {}]
  %s3 = inlined_call_operand.hbm [shape: bf16[512,512], index: 3, kind: input, shape index: {}]
  %s4 = inlined_call_operand.vmem [shape: f32[1,512], index: 4, kind: input, shape index: {}]
  %s5 = inlined_call_operand.hbm [shape: bf16[512,512], index: 5, kind: input, shape index: {}]
  %s6 = inlined_call_operand.vmem [shape: f32[1,512], index: 6, kind: input, shape index: {}]
  %s7 = inlined_call_operand.hbm [shape: bf16[512,512], index: 7, kind: input, shape index: {}]
  %s8 = inlined_call_operand.vmem [shape: f32[1,512], index: 8, kind: input, shape index: {}]
  %s9 = inlined_call_operand.hbm [shape: bf16[512,128], index: 9, kind: input, shape index: {}]
  %s10 = inlined_call_operand.vmem [shape: f32[1,128], index: 10, kind: input, shape index: {}]
  %s11 = inlined_call_operand.hbm [shape: bf16[128,128], index: 11, kind: input, shape index: {}]
  %s12 = inlined_call_operand.vmem [shape: f32[1,128], index: 12, kind: input, shape index: {}]
  %s13 = inlined_call_operand.hbm [shape: bf16[128,128], index: 13, kind: input, shape index: {}]
  %s14 = inlined_call_operand.vmem [shape: f32[1,128], index: 14, kind: input, shape index: {}]
  %s15 = inlined_call_operand.hbm [shape: bf16[128,128], index: 15, kind: input, shape index: {}]
  %s16 = inlined_call_operand.vmem [shape: f32[1,128], index: 16, kind: input, shape index: {}]
  %s17 = inlined_call_operand.hbm [shape: f32[8,128], index: 17, kind: output, shape index: {}]
  %s18 = sld [smem:[#allocation0]]
  $region118: #{tpu_custom_call.1} parent=0
    _
  %s20 = ssub.s32 1, %s18
  %s21 = scalar_select 0, %s20, %s18
  $region1: #{tpu_custom_call.1} parent=0
    #allocation2 [shape = 'u8[4096]{0}', space=vmem, size = 0x1000, scoped, tag = 'input window, operand 0, single buffered']
    #allocation3 [shape = 's32[1]{0}', space=sflag, size = 0x4, scoped, tag = 'scoped memory for tpu_custom_call.1']
    #allocation4 [shape = 's32[1]{0}', space=sflag, size = 0x4, scoped, tag = 'scoped memory for tpu_custom_call.1']
    #allocation5 [shape = 'u8[262144]{0}', space=vmem, size = 0x40000, scoped, tag = 'input window, operand 1, single buffered']
    #allocation6 [shape = 's32[1]{0}', space=sflag, size = 0x4, scoped, tag = 'scoped memory for tpu_custom_call.1']
    #allocation7 [shape = 'u8[2048]{0}', space=vmem, size = 0x800, scoped, tag = 'input window, operand 2, single buffered']
    #allocation8 [shape = 'u8[524288]{0}', space=vmem, size = 0x80000, scoped, tag = 'input window, operand 3, single buffered']
    #allocation9 [shape = 's32[1]{0}', space=sflag, size = 0x4, scoped, tag = 'scoped memory for tpu_custom_call.1']
    #allocation10 [shape = 'u8[524288]{0}', space=vmem, size = 0x80000, scoped, tag = 'input window, operand 5, single buffered']
    #allocation11 [shape = 'u8[524288]{0}', space=vmem, size = 0x80000, scoped, tag = 'input window, operand 7, single buffered']
    #allocation12 [shape = 's32[1]{0}', space=sflag, size = 0x4, scoped, tag = 'scoped memory for tpu_custom_call.1']
    #allocation13 [shape = 'u8[131072]{0}', space=vmem, size = 0x20000, scoped, tag = 'input window, operand 9, single buffered']
    #allocation14 [shape = 'u8[32768]{0}', space=vmem, size = 0x8000, scoped, tag = 'input window, operand 11, single buffered']
    #allocation15 [shape = 's32[1]{0}', space=sflag, size = 0x4, scoped, tag = 'scoped memory for tpu_custom_call.1']
    #allocation16 [shape = 'u8[32768]{0}', space=vmem, size = 0x8000, scoped, tag = 'input window, operand 13, single buffered']
    #allocation17 [shape = 'u8[32768]{0}', space=vmem, size = 0x8000, scoped, tag = 'input window, operand 15, single buffered']
    #allocation18 [shape = 's32[1]{0}', space=sflag, size = 0x4, scoped, tag = 'scoped memory for tpu_custom_call.1']
    #allocation19 [shape = 'u8[4096]{0}', space=vmem, size = 0x1000, scoped, tag = 'output window, operand 0, single buffered']
    %22 = vsyncpa [#allocation3], 0
    %23 = vsyncpa [#allocation6], 0
    %24 = vsyncpa [#allocation9], 0
    %25 = vsyncpa [#allocation12], 0
    %26 = vsyncpa [#allocation15], 0
    %27 = vsyncpa [#allocation18], 0
    %28 = vsyncpa [#allocation4], 0
    // Predicated region
    $region2: #{tpu_custom_call.1} parent=1 // pred_check
      _
    $region3: #{tpu_custom_call.1} parent=1 // pred_check_branch
      %30 = sbr.rel (0) target = $region5
    $region4: #{tpu_custom_call.1} parent=1 // pred_region
      %s32 = ssub.s32 128, 128
      %33 = vsyncadd [#allocation3], %s32
      %s35 = sshll.u32 [#allocation2], 4
      %s36 = int_to_ptr.vmem [resolvable:$true] %s35
      %38 = dma.hbm_to_vmem [thread:$0]  %s0, 128, %s36, [#allocation3]
    $region5: #{tpu_custom_call.1} parent=1 // pred_fallthru
      _
    // Predicated region
    $region6: #{tpu_custom_call.1} parent=1 // pred_check
      _
    $region7: #{tpu_custom_call.1} parent=1 // pred_check_branch
      %40 = sbr.rel (0) target = $region9
    $region8: #{tpu_custom_call.1} parent=1 // pred_region
      %s42 = ssub.s32 8192, 8192
      %43 = vsyncadd [#allocation6], %s42
      %s44 = sshll.u32 [#allocation5], 4
      %s45 = int_to_ptr.vmem [resolvable:$true] %s44
      %50 = dma.hbm_to_vmem [thread:$0]  %s1, 8192, %s45, [#allocation6], 256, 256, 16
    $region9: #{tpu_custom_call.1} parent=1 // pred_fallthru
      _
    // Predicated region
    $region10: #{tpu_custom_call.1} parent=1 // pred_check
      _
    $region11: #{tpu_custom_call.1} parent=1 // pred_check_branch
      %52 = sbr.rel (0) target = $region13
    $region12: #{tpu_custom_call.1} parent=1 // pred_region
      %s54 = ssub.s32 64, 64
      %55 = vsyncadd [#allocation6], %s54
      %s57 = sshll.u32 [#allocation7], 4
      %s58 = int_to_ptr.vmem [resolvable:$true] %s57
      %60 = dma.hbm_to_vmem [thread:$0]  %s2, 64, %s58, [#allocation6]
    $region13: #{tpu_custom_call.1} parent=1 // pred_fallthru
      _
    // Predicated region
    $region14: #{tpu_custom_call.1} parent=1 // pred_check
      _
    $region15: #{tpu_custom_call.1} parent=1 // pred_check_branch
      %62 = sbr.rel (0) target = $region17
    $region16: #{tpu_custom_call.1} parent=1 // pred_region
      %s64 = ssub.s32 16384, 16384
      %65 = vsyncadd [#allocation9], %s64
      %s66 = sshll.u32 [#allocation8], 4
      %s67 = int_to_ptr.vmem [resolvable:$true] %s66
      %72 = dma.hbm_to_vmem [thread:$0]  %s3, 16384, %s67, [#allocation9], 256, 256, 16
    $region17: #{tpu_custom_call.1} parent=1 // pred_fallthru
      _
    // Predicated region
    $region18: #{tpu_custom_call.1} parent=1 // pred_check
      _
    $region19: #{tpu_custom_call.1} parent=1 // pred_check_branch
      %74 = sbr.rel (0) target = $region21
    $region20: #{tpu_custom_call.1} parent=1 // pred_region
      _
    $region21: #{tpu_custom_call.1} parent=1 // pred_fallthru
      _
    // Predicated region
    $region22: #{tpu_custom_call.1} parent=1 // pred_check
      _
    $region23: #{tpu_custom_call.1} parent=1 // pred_check_branch
      %76 = sbr.rel (0) target = $region25
    $region24: #{tpu_custom_call.1} parent=1 // pred_region
      %s78 = ssub.s32 16384, 16384
      %79 = vsyncadd [#allocation9], %s78
      %s80 = sshll.u32 [#allocation10], 4
      %s81 = int_to_ptr.vmem [resolvable:$true] %s80
      %86 = dma.hbm_to_vmem [thread:$0]  %s5, 16384, %s81, [#allocation9], 256, 256, 16
    $region25: #{tpu_custom_call.1} parent=1 // pred_fallthru
      _
    // Predicated region
    $region26: #{tpu_custom_call.1} parent=1 // pred_check
      _
    $region27: #{tpu_custom_call.1} parent=1 // pred_check_branch
      %88 = sbr.rel (0) target = $region29
    $region28: #{tpu_custom_call.1} parent=1 // pred_region
      _
    $region29: #{tpu_custom_call.1} parent=1 // pred_fallthru
      _
    // Predicated region
    $region30: #{tpu_custom_call.1} parent=1 // pred_check
      _
    $region31: #{tpu_custom_call.1} parent=1 // pred_check_branch
      %90 = sbr.rel (0) target = $region33
    $region32: #{tpu_custom_call.1} parent=1 // pred_region
      %s92 = ssub.s32 16384, 16384
      %93 = vsyncadd [#allocation12], %s92
      %s94 = sshll.u32 [#allocation11], 4
      %s95 = int_to_ptr.vmem [resolvable:$true] %s94
      %100 = dma.hbm_to_vmem [thread:$0]  %s7, 16384, %s95, [#allocation12], 256, 256, 16
    $region33: #{tpu_custom_call.1} parent=1 // pred_fallthru
      _
    // Predicated region
    $region34: #{tpu_custom_call.1} parent=1 // pred_check
      _
    $region35: #{tpu_custom_call.1} parent=1 // pred_check_branch
      %102 = sbr.rel (0) target = $region37
    $region36: #{tpu_custom_call.1} parent=1 // pred_region
      _
    $region37: #{tpu_custom_call.1} parent=1 // pred_fallthru
      _
    // Predicated region
    $region38: #{tpu_custom_call.1} parent=1 // pred_check
      _
    $region39: #{tpu_custom_call.1} parent=1 // pred_check_branch
      %104 = sbr.rel (0) target = $region41
    $region40: #{tpu_custom_call.1} parent=1 // pred_region
      %s106 = ssub.s32 4096, 4096
      %107 = vsyncadd [#allocation12], %s106
      %s108 = sshll.u32 [#allocation13], 4
      %s109 = int_to_ptr.vmem [resolvable:$true] %s108
      %114 = dma.hbm_to_vmem [thread:$0]  %s9, 4096, %s109, [#allocation12], 64, 64, 4
    $region41: #{tpu_custom_call.1} parent=1 // pred_fallthru
      _
    // Predicated region
    $region42: #{tpu_custom_call.1} parent=1 // pred_check
      _
    $region43: #{tpu_custom_call.1} parent=1 // pred_check_branch
      %116 = sbr.rel (0) target = $region45
    $region44: #{tpu_custom_call.1} parent=1 // pred_region
      _
    $region45: #{tpu_custom_call.1} parent=1 // pred_fallthru
      _
    // Predicated region
    $region46: #{tpu_custom_call.1} parent=1 // pred_check
      _
    $region47: #{tpu_custom_call.1} parent=1 // pred_check_branch
      %118 = sbr.rel (0) target = $region49
    $region48: #{tpu_custom_call.1} parent=1 // pred_region
      %s120 = ssub.s32 1024, 1024
      %121 = vsyncadd [#allocation15], %s120
      %s122 = sshll.u32 [#allocation14], 4
      %s123 = int_to_ptr.vmem [resolvable:$true] %s122
      %128 = dma.hbm_to_vmem [thread:$0]  %s11, 1024, %s123, [#allocation15], 64, 64, 4
    $region49: #{tpu_custom_call.1} parent=1 // pred_fallthru
      _
    // Predicated region
    $region50: #{tpu_custom_call.1} parent=1 // pred_check
      _
    $region51: #{tpu_custom_call.1} parent=1 // pred_check_branch
      %130 = sbr.rel (0) target = $region53
    $region52: #{tpu_custom_call.1} parent=1 // pred_region
      _
    $region53: #{tpu_custom_call.1} parent=1 // pred_fallthru
      _
    // Predicated region
    $region54: #{tpu_custom_call.1} parent=1 // pred_check
      _
    $region55: #{tpu_custom_call.1} parent=1 // pred_check_branch
      %132 = sbr.rel (0) target = $region57
    $region56: #{tpu_custom_call.1} parent=1 // pred_region
      %s134 = ssub.s32 1024, 1024
      %135 = vsyncadd [#allocation15], %s134
      %s136 = sshll.u32 [#allocation16], 4
      %s137 = int_to_ptr.vmem [resolvable:$true] %s136
      %142 = dma.hbm_to_vmem [thread:$0]  %s13, 1024, %s137, [#allocation15], 64, 64, 4
    $region57: #{tpu_custom_call.1} parent=1 // pred_fallthru
      _
    // Predicated region
    $region58: #{tpu_custom_call.1} parent=1 // pred_check
      _
    $region59: #{tpu_custom_call.1} parent=1 // pred_check_branch
      %144 = sbr.rel (0) target = $region61
    $region60: #{tpu_custom_call.1} parent=1 // pred_region
      _
    $region61: #{tpu_custom_call.1} parent=1 // pred_fallthru
      _
    // Predicated region
    $region62: #{tpu_custom_call.1} parent=1 // pred_check
      _
    $region63: #{tpu_custom_call.1} parent=1 // pred_check_branch
      %146 = sbr.rel (0) target = $region65
    $region64: #{tpu_custom_call.1} parent=1 // pred_region
      %s148 = ssub.s32 1024, 1024
      %149 = vsyncadd [#allocation18], %s148
      %s150 = sshll.u32 [#allocation17], 4
      %s151 = int_to_ptr.vmem [resolvable:$true] %s150
      %156 = dma.hbm_to_vmem [thread:$0]  %s15, 1024, %s151, [#allocation18], 64, 64, 4
    $region65: #{tpu_custom_call.1} parent=1 // pred_fallthru
      _
    // Predicated region
    $region66: #{tpu_custom_call.1} parent=1 // pred_check
      _
    $region67: #{tpu_custom_call.1} parent=1 // pred_check_branch
      %158 = sbr.rel (0) target = $region69
    $region68: #{tpu_custom_call.1} parent=1 // pred_region
      _
    $region69: #{tpu_custom_call.1} parent=1 // pred_fallthru
      _
    // Predicated region
    $region70: #{tpu_custom_call.1} parent=1 // pred_check
      _
    $region71: #{tpu_custom_call.1} parent=1 // pred_check_branch
      %160 = sbr.rel (0) target = $region73
    $region72: #{tpu_custom_call.1} parent=1 // pred_region
      %161 = dma.done [#allocation3], 128
    $region73: #{tpu_custom_call.1} parent=1 // pred_fallthru
      _
    // Predicated region
    $region74: #{tpu_custom_call.1} parent=1 // pred_check
      _
    $region75: #{tpu_custom_call.1} parent=1 // pred_check_branch
      %163 = sbr.rel (0) target = $region77
    $region76: #{tpu_custom_call.1} parent=1 // pred_region
      %164 = dma.done [#allocation6], 8192
    $region77: #{tpu_custom_call.1} parent=1 // pred_fallthru
      _
    // Predicated region
    $region78: #{tpu_custom_call.1} parent=1 // pred_check
      _
    $region79: #{tpu_custom_call.1} parent=1 // pred_check_branch
      %166 = sbr.rel (0) target = $region81
    $region80: #{tpu_custom_call.1} parent=1 // pred_region
      %167 = dma.done [#allocation6], 64
    $region81: #{tpu_custom_call.1} parent=1 // pred_fallthru
      _
    // Predicated region
    $region82: #{tpu_custom_call.1} parent=1 // pred_check
      _
    $region83: #{tpu_custom_call.1} parent=1 // pred_check_branch
      %169 = sbr.rel (0) target = $region85
    $region84: #{tpu_custom_call.1} parent=1 // pred_region
      %170 = dma.done [#allocation9], 16384
    $region85: #{tpu_custom_call.1} parent=1 // pred_fallthru
      _
    // Predicated region
    $region86: #{tpu_custom_call.1} parent=1 // pred_check
      _
    $region87: #{tpu_custom_call.1} parent=1 // pred_check_branch
      %172 = sbr.rel (0) target = $region89
    $region88: #{tpu_custom_call.1} parent=1 // pred_region
      %173 = dma.done [#allocation9], 16384
    $region89: #{tpu_custom_call.1} parent=1 // pred_fallthru
      _
    // Predicated region
    $region90: #{tpu_custom_call.1} parent=1 // pred_check
      _
    $region91: #{tpu_custom_call.1} parent=1 // pred_check_branch
      %175 = sbr.rel (0) target = $region93
    $region92: #{tpu_custom_call.1} parent=1 // pred_region
      %176 = dma.done [#allocation12], 16384
    $region93: #{tpu_custom_call.1} parent=1 // pred_fallthru
      _
    // Predicated region
    $region94: #{tpu_custom_call.1} parent=1 // pred_check
      _
    $region95: #{tpu_custom_call.1} parent=1 // pred_check_branch
      %178 = sbr.rel (0) target = $region97
    $region96: #{tpu_custom_call.1} parent=1 // pred_region
      %179 = dma.done [#allocation12], 4096
    $region97: #{tpu_custom_call.1} parent=1 // pred_fallthru
      _
    // Predicated region
    $region98: #{tpu_custom_call.1} parent=1 // pred_check
      _
    $region99: #{tpu_custom_call.1} parent=1 // pred_check_branch
      %181 = sbr.rel (0) target = $region101
    $region100: #{tpu_custom_call.1} parent=1 // pred_region
      %182 = dma.done [#allocation15], 1024
    $region101: #{tpu_custom_call.1} parent=1 // pred_fallthru
      _
    // Predicated region
    $region102: #{tpu_custom_call.1} parent=1 // pred_check
      _
    $region103: #{tpu_custom_call.1} parent=1 // pred_check_branch
      %184 = sbr.rel (0) target = $region105
    $region104: #{tpu_custom_call.1} parent=1 // pred_region
      %185 = dma.done [#allocation15], 1024
    $region105: #{tpu_custom_call.1} parent=1 // pred_fallthru
      _
    // Predicated region
    $region106: #{tpu_custom_call.1} parent=1 // pred_check
      _
    $region107: #{tpu_custom_call.1} parent=1 // pred_check_branch
      %187 = sbr.rel (0) target = $region109
    $region108: #{tpu_custom_call.1} parent=1 // pred_region
      %188 = dma.done [#allocation18], 1024
    $region109: #{tpu_custom_call.1} parent=1 // pred_fallthru
      _
    %v190 = vld [vmem:[#allocation2] sm:$0xff]
    %v191 = vld [vmem:[#allocation5] sm:$0xff]
    %v192 = vld [vmem:[#allocation5 + $0x8] sm:$0xff]
    %v193 = vld [vmem:[#allocation5 + $0x10] sm:$0xff]
    %v194 = vld [vmem:[#allocation5 + $0x18] sm:$0xff]
    %v195 = vld [vmem:[#allocation5 + $0x20] sm:$0xff]
    %v196 = vld [vmem:[#allocation5 + $0x28] sm:$0xff]
    %v197 = vld [vmem:[#allocation5 + $0x30] sm:$0xff]
    %v198 = vld [vmem:[#allocation5 + $0x38] sm:$0xff]
    %v199 = vld [vmem:[#allocation5 + $0x40] sm:$0xff]
    %v200 = vld [vmem:[#allocation5 + $0x48] sm:$0xff]
    %v201 = vld [vmem:[#allocation5 + $0x50] sm:$0xff]
    %v202 = vld [vmem:[#allocation5 + $0x58] sm:$0xff]
    %v203 = vld [vmem:[#allocation5 + $0x60] sm:$0xff]
    %v204 = vld [vmem:[#allocation5 + $0x68] sm:$0xff]
    %v205 = vld [vmem:[#allocation5 + $0x70] sm:$0xff]
    %v206 = vld [vmem:[#allocation5 + $0x78] sm:$0xff]
    %v207 = vld [vmem:[#allocation5 + $0x80] sm:$0xff]
    %v208 = vld [vmem:[#allocation5 + $0x88] sm:$0xff]
    %v209 = vld [vmem:[#allocation5 + $0x90] sm:$0xff]
    %v210 = vld [vmem:[#allocation5 + $0x98] sm:$0xff]
    %v211 = vld [vmem:[#allocation5 + $0xa0] sm:$0xff]
    %v212 = vld [vmem:[#allocation5 + $0xa8] sm:$0xff]
    %v213 = vld [vmem:[#allocation5 + $0xb0] sm:$0xff]
    %v214 = vld [vmem:[#allocation5 + $0xb8] sm:$0xff]
    %v215 = vld [vmem:[#allocation5 + $0xc0] sm:$0xff]
    %v216 = vld [vmem:[#allocation5 + $0xc8] sm:$0xff]
    %v217 = vld [vmem:[#allocation5 + $0xd0] sm:$0xff]
    %v218 = vld [vmem:[#allocation5 + $0xd8] sm:$0xff]
    %v219 = vld [vmem:[#allocation5 + $0xe0] sm:$0xff]
    %v220 = vld [vmem:[#allocation5 + $0xe8] sm:$0xff]
    %v221 = vld [vmem:[#allocation5 + $0xf0] sm:$0xff]
    %v222 = vld [vmem:[#allocation5 + $0xf8] sm:$0xff]
    %v223 = vld [vmem:[#allocation5 + $0x100] sm:$0xff]
    %v224 = vld [vmem:[#allocation5 + $0x108] sm:$0xff]
    %v225 = vld [vmem:[#allocation5 + $0x110] sm:$0xff]
    %v226 = vld [vmem:[#allocation5 + $0x118] sm:$0xff]
    %v227 = vld [vmem:[#allocation5 + $0x120] sm:$0xff]
    %v228 = vld [vmem:[#allocation5 + $0x128] sm:$0xff]
    %v229 = vld [vmem:[#allocation5 + $0x130] sm:$0xff]
    %v230 = vld [vmem:[#allocation5 + $0x138] sm:$0xff]
    %v231 = vld [vmem:[#allocation5 + $0x140] sm:$0xff]
    %v232 = vld [vmem:[#allocation5 + $0x148] sm:$0xff]
    %v233 = vld [vmem:[#allocation5 + $0x150] sm:$0xff]
    %v234 = vld [vmem:[#allocation5 + $0x158] sm:$0xff]
    %v235 = vld [vmem:[#allocation5 + $0x160] sm:$0xff]
    %v236 = vld [vmem:[#allocation5 + $0x168] sm:$0xff]
    %v237 = vld [vmem:[#allocation5 + $0x170] sm:$0xff]
    %v238 = vld [vmem:[#allocation5 + $0x178] sm:$0xff]
    %v239 = vld [vmem:[#allocation5 + $0x180] sm:$0xff]
    %v240 = vld [vmem:[#allocation5 + $0x188] sm:$0xff]
    %v241 = vld [vmem:[#allocation5 + $0x190] sm:$0xff]
    %v242 = vld [vmem:[#allocation5 + $0x198] sm:$0xff]
    %v243 = vld [vmem:[#allocation5 + $0x1a0] sm:$0xff]
    %v244 = vld [vmem:[#allocation5 + $0x1a8] sm:$0xff]
    %v245 = vld [vmem:[#allocation5 + $0x1b0] sm:$0xff]
    %v246 = vld [vmem:[#allocation5 + $0x1b8] sm:$0xff]
    %v247 = vld [vmem:[#allocation5 + $0x1c0] sm:$0xff]
    %v248 = vld [vmem:[#allocation5 + $0x1c8] sm:$0xff]
    %v249 = vld [vmem:[#allocation5 + $0x1d0] sm:$0xff]
    %v250 = vld [vmem:[#allocation5 + $0x1d8] sm:$0xff]
    %v251 = vld [vmem:[#allocation5 + $0x1e0] sm:$0xff]
    %v252 = vld [vmem:[#allocation5 + $0x1e8] sm:$0xff]
    %v253 = vld [vmem:[#allocation5 + $0x1f0] sm:$0xff]
    %v254 = vld [vmem:[#allocation5 + $0x1f8] sm:$0xff]
    %v255 = vld [vmem:[#allocation7] sm:$0xf]
    %v257 = vlaneseq
    %v258 = vshrl.u32 %v257, 7
    %v259 = vsub.s32 0, %v258
    %v260 = vrot.slane %v255, %v259
    %v261 = vlaneseq
    %v262 = vshrl.u32 %v261, 7
    %v263 = vsub.s32 1, %v262
    %v264 = vrot.slane %v255, %v263
    %v265 = vlaneseq
    %v266 = vshrl.u32 %v265, 7
    %v267 = vsub.s32 2, %v266
    %v268 = vrot.slane %v255, %v267
    %v269 = vlaneseq
    %v270 = vshrl.u32 %v269, 7
    %v271 = vsub.s32 3, %v270
    %v272 = vrot.slane %v255, %v271
    %v278 = vunpack.c.l.b16 %v190
    %v279 = vunpack.c.h.b16 %v190
    %v280 = vpack.c.b16 %v278, %v278
    %v281 = vpack.c.b16 %v279, %v279
    %v348 = vunpack.c.l.b16 %v191
    %v349 = vunpack.c.h.b16 %v191
    %v350 = vunpack.c.l.b16 %v192
    %v351 = vunpack.c.h.b16 %v192
    %v352 = vunpack.c.l.b16 %v193
    %v353 = vunpack.c.h.b16 %v193
    %v354 = vunpack.c.l.b16 %v194
    %v355 = vunpack.c.h.b16 %v194
    %v356 = vunpack.c.l.b16 %v195
    %v357 = vunpack.c.h.b16 %v195
    %v358 = vunpack.c.l.b16 %v196
    %v359 = vunpack.c.h.b16 %v196
    %v360 = vunpack.c.l.b16 %v197
    %v361 = vunpack.c.h.b16 %v197
    %v362 = vunpack.c.l.b16 %v198
    %v363 = vunpack.c.h.b16 %v198
    %v364 = vunpack.c.l.b16 %v199
    %v365 = vunpack.c.h.b16 %v199
    %v366 = vunpack.c.l.b16 %v200
    %v367 = vunpack.c.h.b16 %v200
    %v368 = vunpack.c.l.b16 %v201
    %v369 = vunpack.c.h.b16 %v201
    %v370 = vunpack.c.l.b16 %v202
    %v371 = vunpack.c.h.b16 %v202
    %v372 = vunpack.c.l.b16 %v203
    %v373 = vunpack.c.h.b16 %v203
    %v374 = vunpack.c.l.b16 %v204
    %v375 = vunpack.c.h.b16 %v204
    %v376 = vunpack.c.l.b16 %v205
    %v377 = vunpack.c.h.b16 %v205
    %v378 = vunpack.c.l.b16 %v206
    %v379 = vunpack.c.h.b16 %v206
    %v380 = vunpack.c.l.b16 %v207
    %v381 = vunpack.c.h.b16 %v207
    %v382 = vunpack.c.l.b16 %v208
    %v383 = vunpack.c.h.b16 %v208
    %v384 = vunpack.c.l.b16 %v209
    %v385 = vunpack.c.h.b16 %v209
    %v386 = vunpack.c.l.b16 %v210
    %v387 = vunpack.c.h.b16 %v210
    %v388 = vunpack.c.l.b16 %v211
    %v389 = vunpack.c.h.b16 %v211
    %v390 = vunpack.c.l.b16 %v212
    %v391 = vunpack.c.h.b16 %v212
    %v392 = vunpack.c.l.b16 %v213
    %v393 = vunpack.c.h.b16 %v213
    %v394 = vunpack.c.l.b16 %v214
    %v395 = vunpack.c.h.b16 %v214
    %v396 = vunpack.c.l.b16 %v215
    %v397 = vunpack.c.h.b16 %v215
    %v398 = vunpack.c.l.b16 %v216
    %v399 = vunpack.c.h.b16 %v216
    %v400 = vunpack.c.l.b16 %v217
    %v401 = vunpack.c.h.b16 %v217
    %v402 = vunpack.c.l.b16 %v218
    %v403 = vunpack.c.h.b16 %v218
    %v404 = vunpack.c.l.b16 %v219
    %v405 = vunpack.c.h.b16 %v219
    %v406 = vunpack.c.l.b16 %v220
    %v407 = vunpack.c.h.b16 %v220
    %v408 = vunpack.c.l.b16 %v221
    %v409 = vunpack.c.h.b16 %v221
    %v410 = vunpack.c.l.b16 %v222
    %v411 = vunpack.c.h.b16 %v222
    %v412 = vunpack.c.l.b16 %v223
    %v413 = vunpack.c.h.b16 %v223
    %v414 = vunpack.c.l.b16 %v224
    %v415 = vunpack.c.h.b16 %v224
    %v416 = vunpack.c.l.b16 %v225
    %v417 = vunpack.c.h.b16 %v225
    %v418 = vunpack.c.l.b16 %v226
    %v419 = vunpack.c.h.b16 %v226
    %v420 = vunpack.c.l.b16 %v227
    %v421 = vunpack.c.h.b16 %v227
    %v422 = vunpack.c.l.b16 %v228
    %v423 = vunpack.c.h.b16 %v228
    %v424 = vunpack.c.l.b16 %v229
    %v425 = vunpack.c.h.b16 %v229
    %v426 = vunpack.c.l.b16 %v230
    %v427 = vunpack.c.h.b16 %v230
    %v428 = vunpack.c.l.b16 %v231
    %v429 = vunpack.c.h.b16 %v231
    %v430 = vunpack.c.l.b16 %v232
    %v431 = vunpack.c.h.b16 %v232
    %v432 = vunpack.c.l.b16 %v233
    %v433 = vunpack.c.h.b16 %v233
    %v434 = vunpack.c.l.b16 %v234
    %v435 = vunpack.c.h.b16 %v234
    %v436 = vunpack.c.l.b16 %v235
    %v437 = vunpack.c.h.b16 %v235
    %v438 = vunpack.c.l.b16 %v236
    %v439 = vunpack.c.h.b16 %v236
    %v440 = vunpack.c.l.b16 %v237
    %v441 = vunpack.c.h.b16 %v237
    %v442 = vunpack.c.l.b16 %v238
    %v443 = vunpack.c.h.b16 %v238
    %v444 = vunpack.c.l.b16 %v239
    %v445 = vunpack.c.h.b16 %v239
    %v446 = vunpack.c.l.b16 %v240
    %v447 = vunpack.c.h.b16 %v240
    %v448 = vunpack.c.l.b16 %v241
    %v449 = vunpack.c.h.b16 %v241
    %v450 = vunpack.c.l.b16 %v242
    %v451 = vunpack.c.h.b16 %v242
    %v452 = vunpack.c.l.b16 %v243
    %v453 = vunpack.c.h.b16 %v243
    %v454 = vunpack.c.l.b16 %v244
    %v455 = vunpack.c.h.b16 %v244
    %v456 = vunpack.c.l.b16 %v245
    %v457 = vunpack.c.h.b16 %v245
    %v458 = vunpack.c.l.b16 %v246
    %v459 = vunpack.c.h.b16 %v246
    %v460 = vunpack.c.l.b16 %v247
    %v461 = vunpack.c.h.b16 %v247
    %v462 = vunpack.c.l.b16 %v248
    %v463 = vunpack.c.h.b16 %v248
    %v464 = vunpack.c.l.b16 %v249
    %v465 = vunpack.c.h.b16 %v249
    %v466 = vunpack.c.l.b16 %v250
    %v467 = vunpack.c.h.b16 %v250
    %v468 = vunpack.c.l.b16 %v251
    %v469 = vunpack.c.h.b16 %v251
    %v470 = vunpack.c.l.b16 %v252
    %v471 = vunpack.c.h.b16 %v252
    %v472 = vunpack.c.l.b16 %v253
    %v473 = vunpack.c.h.b16 %v253
    %v474 = vunpack.c.l.b16 %v254
    %v475 = vunpack.c.h.b16 %v254
    %v476 = vpack.c.b16 %v352, %v348
    %v477 = vpack.c.b16 %v353, %v349
    %v478 = vpack.c.b16 %v354, %v350
    %v479 = vpack.c.b16 %v355, %v351
    %v480 = vpack.c.b16 %v360, %v356
    %v481 = vpack.c.b16 %v361, %v357
    %v482 = vpack.c.b16 %v362, %v358
    %v483 = vpack.c.b16 %v363, %v359
    %v484 = vpack.c.b16 %v368, %v364
    %v485 = vpack.c.b16 %v369, %v365
    %v486 = vpack.c.b16 %v370, %v366
    %v487 = vpack.c.b16 %v371, %v367
    %v488 = vpack.c.b16 %v376, %v372
    %v489 = vpack.c.b16 %v377, %v373
    %v490 = vpack.c.b16 %v378, %v374
    %v491 = vpack.c.b16 %v379, %v375
    %v492 = vpack.c.b16 %v384, %v380
    %v493 = vpack.c.b16 %v385, %v381
    %v494 = vpack.c.b16 %v386, %v382
    %v495 = vpack.c.b16 %v387, %v383
    %v496 = vpack.c.b16 %v392, %v388
    %v497 = vpack.c.b16 %v393, %v389
    %v498 = vpack.c.b16 %v394, %v390
    %v499 = vpack.c.b16 %v395, %v391
    %v500 = vpack.c.b16 %v400, %v396
    %v501 = vpack.c.b16 %v401, %v397
    %v502 = vpack.c.b16 %v402, %v398
    %v503 = vpack.c.b16 %v403, %v399
    %v504 = vpack.c.b16 %v408, %v404
    %v505 = vpack.c.b16 %v409, %v405
    %v506 = vpack.c.b16 %v410, %v406
    %v507 = vpack.c.b16 %v411, %v407
    %v508 = vpack.c.b16 %v416, %v412
    %v509 = vpack.c.b16 %v417, %v413
    %v510 = vpack.c.b16 %v418, %v414
    %v511 = vpack.c.b16 %v419, %v415
    %v512 = vpack.c.b16 %v424, %v420
    %v513 = vpack.c.b16 %v425, %v421
    %v514 = vpack.c.b16 %v426, %v422
    %v515 = vpack.c.b16 %v427, %v423
    %v516 = vpack.c.b16 %v432, %v428
    %v517 = vpack.c.b16 %v433, %v429
    %v518 = vpack.c.b16 %v434, %v430
    %v519 = vpack.c.b16 %v435, %v431
    %v520 = vpack.c.b16 %v440, %v436
    %v521 = vpack.c.b16 %v441, %v437
    %v522 = vpack.c.b16 %v442, %v438
    %v523 = vpack.c.b16 %v443, %v439
    %v524 = vpack.c.b16 %v448, %v444
    %v525 = vpack.c.b16 %v449, %v445
    %v526 = vpack.c.b16 %v450, %v446
    %v527 = vpack.c.b16 %v451, %v447
    %v528 = vpack.c.b16 %v456, %v452
    %v529 = vpack.c.b16 %v457, %v453
    %v530 = vpack.c.b16 %v458, %v454
    %v531 = vpack.c.b16 %v459, %v455
    %v532 = vpack.c.b16 %v464, %v460
    %v533 = vpack.c.b16 %v465, %v461
    %v534 = vpack.c.b16 %v466, %v462
    %v535 = vpack.c.b16 %v467, %v463
    %v536 = vpack.c.b16 %v472, %v468
    %v537 = vpack.c.b16 %v473, %v469
    %v538 = vpack.c.b16 %v474, %v470
    %v539 = vpack.c.b16 %v475, %v471
    %604 = vmatprep.subr.bf16.mxu0 %v505
    %605 = vmatpush1.bf16.msra.mxu0 %v504
    %606 = vmatprep.subr.bf16.mxu0 %v501
    %607 = vmatpush1.bf16.msra.mxu0 %v500
    %608 = vmatprep.subr.bf16.mxu0 %v497
    %609 = vmatpush1.bf16.msra.mxu0 %v496
    %610 = vmatprep.subr.bf16.mxu0 %v493
    %611 = vmatpush1.bf16.msra.mxu0 %v492
    %612 = vmatprep.subr.bf16.mxu0 %v489
    %613 = vmatpush1.bf16.msra.mxu0 %v488
    %614 = vmatprep.subr.bf16.mxu0 %v485
    %615 = vmatpush1.bf16.msra.mxu0 %v484
    %616 = vmatprep.subr.bf16.mxu0 %v481
    %617 = vmatpush1.bf16.msra.mxu0 %v480
    %618 = vmatprep.subr.bf16.mxu0 %v477
    %619 = vmatpush1.bf16.msra.mxu0 %v476
    %620 = vmatprep.subr.bf16.mxu0 %v537
    %621 = vmatpush2.bf16.msra.mxu0 %v536
    %622 = vmatprep.subr.bf16.mxu0 %v533
    %623 = vmatpush2.bf16.msra.mxu0 %v532
    %624 = vmatprep.subr.bf16.mxu0 %v529
    %625 = vmatpush2.bf16.msra.mxu0 %v528
    %626 = vmatprep.subr.bf16.mxu0 %v525
    %627 = vmatpush2.bf16.msra.mxu0 %v524
    %628 = vmatprep.subr.bf16.mxu0 %v521
    %629 = vmatpush2.bf16.msra.mxu0 %v520
    %630 = vmatprep.subr.bf16.mxu0 %v517
    %631 = vmatpush2.bf16.msra.mxu0 %v516
    %632 = vmatprep.subr.bf16.mxu0 %v513
    %633 = vmatpush2.bf16.msra.mxu0 %v512
    %634 = vmatprep.subr.bf16.mxu0 %v509
    %635 = vmatpush2.bf16.msra.mxu0 %v508
    %636 = vmatprep.mubr.bf16.mxu0 %v281
    %637 = vmatmul.mubr.bf16.gmra.mxu0 %v280
    %v638 = vpop.f32.mrf.mxu0
    %v639 = vadd.f32 %v260, %v638
    %v640 = vpop.f32.mrf.mxu0
    %v641 = vadd.f32 %v264, %v640
    %v642 = vpop.f32.mrf.mxu0
    %v643 = vpop.f32.mrf.mxu0
    %644 = vdwg.mxu0
    %645 = vmatprep.subr.bf16.mxu0 %v507
    %646 = vmatpush1.bf16.msra.mxu0 %v506
    %647 = vmatprep.subr.bf16.mxu0 %v503
    %648 = vmatpush1.bf16.msra.mxu0 %v502
    %649 = vmatprep.subr.bf16.mxu0 %v499
    %650 = vmatpush1.bf16.msra.mxu0 %v498
    %651 = vmatprep.subr.bf16.mxu0 %v495
    %652 = vmatpush1.bf16.msra.mxu0 %v494
    %653 = vmatprep.subr.bf16.mxu0 %v491
    %654 = vmatpush1.bf16.msra.mxu0 %v490
    %655 = vmatprep.subr.bf16.mxu0 %v487
    %656 = vmatpush1.bf16.msra.mxu0 %v486
    %657 = vmatprep.subr.bf16.mxu0 %v483
    %658 = vmatpush1.bf16.msra.mxu0 %v482
    %659 = vmatprep.subr.bf16.mxu0 %v479
    %660 = vmatpush1.bf16.msra.mxu0 %v478
    %661 = vmatprep.subr.bf16.mxu0 %v539
    %662 = vmatpush2.bf16.msra.mxu0 %v538
    %663 = vmatprep.subr.bf16.mxu0 %v535
    %664 = vmatpush2.bf16.msra.mxu0 %v534
    %665 = vmatprep.subr.bf16.mxu0 %v531
    %666 = vmatpush2.bf16.msra.mxu0 %v530
    %667 = vmatprep.subr.bf16.mxu0 %v527
    %668 = vmatpush2.bf16.msra.mxu0 %v526
    %669 = vmatprep.subr.bf16.mxu0 %v523
    %670 = vmatpush2.bf16.msra.mxu0 %v522
    %671 = vmatprep.subr.bf16.mxu0 %v519
    %672 = vmatpush2.bf16.msra.mxu0 %v518
    %673 = vmatprep.subr.bf16.mxu0 %v515
    %674 = vmatpush2.bf16.msra.mxu0 %v514
    %675 = vmatprep.subr.bf16.mxu0 %v511
    %676 = vmatpush2.bf16.msra.mxu0 %v510
    %677 = vmatprep.mubr.bf16.mxu0 %v281
    %678 = vmatmul.mubr.bf16.gmra.mxu0 %v280
    %v679 = vpop.f32.mrf.mxu0
    %v680 = vadd.f32 %v268, %v679
    %v681 = vpop.f32.mrf.mxu0
    %v682 = vadd.f32 %v272, %v681
    %v683 = vpop.f32.mrf.mxu0
    %v684 = vpop.f32.mrf.mxu0
    %685 = vdwg.mxu0
    %v686 = vpack.c.bf16 %v639, %v639
    %v687 = vpack.c.bf16 %v641, %v641
    %v688 = vpack.c.bf16 %v680, %v680
    %v689 = vpack.c.bf16 %v682, %v682
    %v690 = vld [vmem:[#allocation8] sm:$0xff]
    %v691 = vld [vmem:[#allocation8 + $0x8] sm:$0xff]
    %v692 = vld [vmem:[#allocation8 + $0x10] sm:$0xff]
    %v693 = vld [vmem:[#allocation8 + $0x18] sm:$0xff]
    %v694 = vld [vmem:[#allocation8 + $0x20] sm:$0xff]
    %v695 = vld [vmem:[#allocation8 + $0x28] sm:$0xff]
    %v696 = vld [vmem:[#allocation8 + $0x30] sm:$0xff]
    %v697 = vld [vmem:[#allocation8 + $0x38] sm:$0xff]
    %v698 = vld [vmem:[#allocation8 + $0x40] sm:$0xff]
    %v699 = vld [vmem:[#allocation8 + $0x48] sm:$0xff]
    %v700 = vld [vmem:[#allocation8 + $0x50] sm:$0xff]
    %v701 = vld [vmem:[#allocation8 + $0x58] sm:$0xff]
    %v702 = vld [vmem:[#allocation8 + $0x60] sm:$0xff]
    %v703 = vld [vmem:[#allocation8 + $0x68] sm:$0xff]
    %v704 = vld [vmem:[#allocation8 + $0x70] sm:$0xff]
    %v705 = vld [vmem:[#allocation8 + $0x78] sm:$0xff]
    %v706 = vld [vmem:[#allocation8 + $0x80] sm:$0xff]
    %v707 = vld [vmem:[#allocation8 + $0x88] sm:$0xff]
    %v708 = vld [vmem:[#allocation8 + $0x90] sm:$0xff]
    %v709 = vld [vmem:[#allocation8 + $0x98] sm:$0xff]
    %v710 = vld [vmem:[#allocation8 + $0xa0] sm:$0xff]
    %v711 = vld [vmem:[#allocation8 + $0xa8] sm:$0xff]
    %v712 = vld [vmem:[#allocation8 + $0xb0] sm:$0xff]
    %v713 = vld [vmem:[#allocation8 + $0xb8] sm:$0xff]
    %v714 = vld [vmem:[#allocation8 + $0xc0] sm:$0xff]
    %v715 = vld [vmem:[#allocation8 + $0xc8] sm:$0xff]
    %v716 = vld [vmem:[#allocation8 + $0xd0] sm:$0xff]
    %v717 = vld [vmem:[#allocation8 + $0xd8] sm:$0xff]
    %v718 = vld [vmem:[#allocation8 + $0xe0] sm:$0xff]
    %v719 = vld [vmem:[#allocation8 + $0xe8] sm:$0xff]
    %v720 = vld [vmem:[#allocation8 + $0xf0] sm:$0xff]
    %v721 = vld [vmem:[#allocation8 + $0xf8] sm:$0xff]
    %v722 = vld [vmem:[#allocation8 + $0x100] sm:$0xff]
    %v723 = vld [vmem:[#allocation8 + $0x108] sm:$0xff]
    %v724 = vld [vmem:[#allocation8 + $0x110] sm:$0xff]
    %v725 = vld [vmem:[#allocation8 + $0x118] sm:$0xff]
    %v726 = vld [vmem:[#allocation8 + $0x120] sm:$0xff]
    %v727 = vld [vmem:[#allocation8 + $0x128] sm:$0xff]
    %v728 = vld [vmem:[#allocation8 + $0x130] sm:$0xff]
    %v729 = vld [vmem:[#allocation8 + $0x138] sm:$0xff]
    %v730 = vld [vmem:[#allocation8 + $0x140] sm:$0xff]
    %v731 = vld [vmem:[#allocation8 + $0x148] sm:$0xff]
    %v732 = vld [vmem:[#allocation8 + $0x150] sm:$0xff]
    %v733 = vld [vmem:[#allocation8 + $0x158] sm:$0xff]
    %v734 = vld [vmem:[#allocation8 + $0x160] sm:$0xff]
    %v735 = vld [vmem:[#allocation8 + $0x168] sm:$0xff]
    %v736 = vld [vmem:[#allocation8 + $0x170] sm:$0xff]
    %v737 = vld [vmem:[#allocation8 + $0x178] sm:$0xff]
    %v738 = vld [vmem:[#allocation8 + $0x180] sm:$0xff]
    %v739 = vld [vmem:[#allocation8 + $0x188] sm:$0xff]
    %v740 = vld [vmem:[#allocation8 + $0x190] sm:$0xff]
    %v741 = vld [vmem:[#allocation8 + $0x198] sm:$0xff]
    %v742 = vld [vmem:[#allocation8 + $0x1a0] sm:$0xff]
    %v743 = vld [vmem:[#allocation8 + $0x1a8] sm:$0xff]
    %v744 = vld [vmem:[#allocation8 + $0x1b0] sm:$0xff]
    %v745 = vld [vmem:[#allocation8 + $0x1b8] sm:$0xff]
    %v746 = vld [vmem:[#allocation8 + $0x1c0] sm:$0xff]
    %v747 = vld [vmem:[#allocation8 + $0x1c8] sm:$0xff]
    %v748 = vld [vmem:[#allocation8 + $0x1d0] sm:$0xff]
    %v749 = vld [vmem:[#allocation8 + $0x1d8] sm:$0xff]
    %v750 = vld [vmem:[#allocation8 + $0x1e0] sm:$0xff]
    %v751 = vld [vmem:[#allocation8 + $0x1e8] sm:$0xff]
    %v752 = vld [vmem:[#allocation8 + $0x1f0] sm:$0xff]
    %v753 = vld [vmem:[#allocation8 + $0x1f8] sm:$0xff]
    %v754 = vld [vmem:[#allocation8 + $0x200] sm:$0xff]
    %v755 = vld [vmem:[#allocation8 + $0x208] sm:$0xff]
    %v756 = vld [vmem:[#allocation8 + $0x210] sm:$0xff]
    %v757 = vld [vmem:[#allocation8 + $0x218] sm:$0xff]
    %v758 = vld [vmem:[#allocation8 + $0x220] sm:$0xff]
    %v759 = vld [vmem:[#allocation8 + $0x228] sm:$0xff]
    %v760 = vld [vmem:[#allocation8 + $0x230] sm:$0xff]
    %v761 = vld [vmem:[#allocation8 + $0x238] sm:$0xff]
    %v762 = vld [vmem:[#allocation8 + $0x240] sm:$0xff]
    %v763 = vld [vmem:[#allocation8 + $0x248] sm:$0xff]
    %v764 = vld [vmem:[#allocation8 + $0x250] sm:$0xff]
    %v765 = vld [vmem:[#allocation8 + $0x258] sm:$0xff]
    %v766 = vld [vmem:[#allocation8 + $0x260] sm:$0xff]
    %v767 = vld [vmem:[#allocation8 + $0x268] sm:$0xff]
    %v768 = vld [vmem:[#allocation8 + $0x270] sm:$0xff]
    %v769 = vld [vmem:[#allocation8 + $0x278] sm:$0xff]
    %v770 = vld [vmem:[#allocation8 + $0x280] sm:$0xff]
    %v771 = vld [vmem:[#allocation8 + $0x288] sm:$0xff]
    %v772 = vld [vmem:[#allocation8 + $0x290] sm:$0xff]
    %v773 = vld [vmem:[#allocation8 + $0x298] sm:$0xff]
    %v774 = vld [vmem:[#allocation8 + $0x2a0] sm:$0xff]
    %v775 = vld [vmem:[#allocation8 + $0x2a8] sm:$0xff]
    %v776 = vld [vmem:[#allocation8 + $0x2b0] sm:$0xff]
    %v777 = vld [vmem:[#allocation8 + $0x2b8] sm:$0xff]
    %v778 = vld [vmem:[#allocation8 + $0x2c0] sm:$0xff]
    %v779 = vld [vmem:[#allocation8 + $0x2c8] sm:$0xff]
    %v780 = vld [vmem:[#allocation8 + $0x2d0] sm:$0xff]
    %v781 = vld [vmem:[#allocation8 + $0x2d8] sm:$0xff]
    %v782 = vld [vmem:[#allocation8 + $0x2e0] sm:$0xff]
    %v783 = vld [vmem:[#allocation8 + $0x2e8] sm:$0xff]
    %v784 = vld [vmem:[#allocation8 + $0x2f0] sm:$0xff]
    %v785 = vld [vmem:[#allocation8 + $0x2f8] sm:$0xff]
    %v786 = vld [vmem:[#allocation8 + $0x300] sm:$0xff]
    %v787 = vld [vmem:[#allocation8 + $0x308] sm:$0xff]
    %v788 = vld [vmem:[#allocation8 + $0x310] sm:$0xff]
    %v789 = vld [vmem:[#allocation8 + $0x318] sm:$0xff]
    %v790 = vld [vmem:[#allocation8 + $0x320] sm:$0xff]
    %v791 = vld [vmem:[#allocation8 + $0x328] sm:$0xff]
    %v792 = vld [vmem:[#allocation8 + $0x330] sm:$0xff]
    %v793 = vld [vmem:[#allocation8 + $0x338] sm:$0xff]
    %v794 = vld [vmem:[#allocation8 + $0x340] sm:$0xff]
    %v795 = vld [vmem:[#allocation8 + $0x348] sm:$0xff]
    %v796 = vld [vmem:[#allocation8 + $0x350] sm:$0xff]
    %v797 = vld [vmem:[#allocation8 + $0x358] sm:$0xff]
    %v798 = vld [vmem:[#allocation8 + $0x360] sm:$0xff]
    %v799 = vld [vmem:[#allocation8 + $0x368] sm:$0xff]
    %v800 = vld [vmem:[#allocation8 + $0x370] sm:$0xff]
    %v801 = vld [vmem:[#allocation8 + $0x378] sm:$0xff]
    %v802 = vld [vmem:[#allocation8 + $0x380] sm:$0xff]
    %v803 = vld [vmem:[#allocation8 + $0x388] sm:$0xff]
    %v804 = vld [vmem:[#allocation8 + $0x390] sm:$0xff]
    %v805 = vld [vmem:[#allocation8 + $0x398] sm:$0xff]
    %v806 = vld [vmem:[#allocation8 + $0x3a0] sm:$0xff]
    %v807 = vld [vmem:[#allocation8 + $0x3a8] sm:$0xff]
    %v808 = vld [vmem:[#allocation8 + $0x3b0] sm:$0xff]
    %v809 = vld [vmem:[#allocation8 + $0x3b8] sm:$0xff]
    %v810 = vld [vmem:[#allocation8 + $0x3c0] sm:$0xff]
    %v811 = vld [vmem:[#allocation8 + $0x3c8] sm:$0xff]
    %v812 = vld [vmem:[#allocation8 + $0x3d0] sm:$0xff]
    %v813 = vld [vmem:[#allocation8 + $0x3d8] sm:$0xff]
    %v814 = vld [vmem:[#allocation8 + $0x3e0] sm:$0xff]
    %v815 = vld [vmem:[#allocation8 + $0x3e8] sm:$0xff]
    %v816 = vld [vmem:[#allocation8 + $0x3f0] sm:$0xff]
    %v817 = vld [vmem:[#allocation8 + $0x3f8] sm:$0xff]
    %v818 = vld [vmem:[%s4] sm:$0xf]
    %v820 = vlaneseq
    %v821 = vshrl.u32 %v820, 7
    %v822 = vsub.s32 0, %v821
    %v823 = vrot.slane %v818, %v822
    %v824 = vlaneseq
    %v825 = vshrl.u32 %v824, 7
    %v826 = vsub.s32 1, %v825
    %v827 = vrot.slane %v818, %v826
    %v828 = vlaneseq
    %v829 = vshrl.u32 %v828, 7
    %v830 = vsub.s32 2, %v829
    %v831 = vrot.slane %v818, %v830
    %v832 = vlaneseq
    %v833 = vshrl.u32 %v832, 7
    %v834 = vsub.s32 3, %v833
    %v835 = vrot.slane %v818, %v834
    %v968 = vunpack.c.l.b16 %v690
    %v969 = vunpack.c.h.b16 %v690
    %v970 = vunpack.c.l.b16 %v691
    %v971 = vunpack.c.h.b16 %v691
    %v972 = vunpack.c.l.b16 %v692
    %v973 = vunpack.c.h.b16 %v692
    %v974 = vunpack.c.l.b16 %v693
    %v975 = vunpack.c.h.b16 %v693
    %v976 = vunpack.c.l.b16 %v694
    %v977 = vunpack.c.h.b16 %v694
    %v978 = vunpack.c.l.b16 %v695
    %v979 = vunpack.c.h.b16 %v695
    %v980 = vunpack.c.l.b16 %v696
    %v981 = vunpack.c.h.b16 %v696
    %v982 = vunpack.c.l.b16 %v697
    %v983 = vunpack.c.h.b16 %v697
    %v984 = vunpack.c.l.b16 %v698
    %v985 = vunpack.c.h.b16 %v698
    %v986 = vunpack.c.l.b16 %v699
    %v987 = vunpack.c.h.b16 %v699
    %v988 = vunpack.c.l.b16 %v700
    %v989 = vunpack.c.h.b16 %v700
    %v990 = vunpack.c.l.b16 %v701
    %v991 = vunpack.c.h.b16 %v701
    %v992 = vunpack.c.l.b16 %v702
    %v993 = vunpack.c.h.b16 %v702
    %v994 = vunpack.c.l.b16 %v703
    %v995 = vunpack.c.h.b16 %v703
    %v996 = vunpack.c.l.b16 %v704
    %v997 = vunpack.c.h.b16 %v704
    %v998 = vunpack.c.l.b16 %v705
    %v999 = vunpack.c.h.b16 %v705
    %v1000 = vunpack.c.l.b16 %v706
    %v1001 = vunpack.c.h.b16 %v706
    %v1002 = vunpack.c.l.b16 %v707
    %v1003 = vunpack.c.h.b16 %v707
    %v1004 = vunpack.c.l.b16 %v708
    %v1005 = vunpack.c.h.b16 %v708
    %v1006 = vunpack.c.l.b16 %v709
    %v1007 = vunpack.c.h.b16 %v709
    %v1008 = vunpack.c.l.b16 %v710
    %v1009 = vunpack.c.h.b16 %v710
    %v1010 = vunpack.c.l.b16 %v711
    %v1011 = vunpack.c.h.b16 %v711
    %v1012 = vunpack.c.l.b16 %v712
    %v1013 = vunpack.c.h.b16 %v712
    %v1014 = vunpack.c.l.b16 %v713
    %v1015 = vunpack.c.h.b16 %v713
    %v1016 = vunpack.c.l.b16 %v714
    %v1017 = vunpack.c.h.b16 %v714
    %v1018 = vunpack.c.l.b16 %v715
    %v1019 = vunpack.c.h.b16 %v715
    %v1020 = vunpack.c.l.b16 %v716
    %v1021 = vunpack.c.h.b16 %v716
    %v1022 = vunpack.c.l.b16 %v717
    %v1023 = vunpack.c.h.b16 %v717
    %v1024 = vunpack.c.l.b16 %v718
    %v1025 = vunpack.c.h.b16 %v718
    %v1026 = vunpack.c.l.b16 %v719
    %v1027 = vunpack.c.h.b16 %v719
    %v1028 = vunpack.c.l.b16 %v720
    %v1029 = vunpack.c.h.b16 %v720
    %v1030 = vunpack.c.l.b16 %v721
    %v1031 = vunpack.c.h.b16 %v721
    %v1032 = vunpack.c.l.b16 %v722
    %v1033 = vunpack.c.h.b16 %v722
    %v1034 = vunpack.c.l.b16 %v723
    %v1035 = vunpack.c.h.b16 %v723
    %v1036 = vunpack.c.l.b16 %v724
    %v1037 = vunpack.c.h.b16 %v724
    %v1038 = vunpack.c.l.b16 %v725
    %v1039 = vunpack.c.h.b16 %v725
    %v1040 = vunpack.c.l.b16 %v726
    %v1041 = vunpack.c.h.b16 %v726
    %v1042 = vunpack.c.l.b16 %v727
    %v1043 = vunpack.c.h.b16 %v727
    %v1044 = vunpack.c.l.b16 %v728
    %v1045 = vunpack.c.h.b16 %v728
    %v1046 = vunpack.c.l.b16 %v729
    %v1047 = vunpack.c.h.b16 %v729
    %v1048 = vunpack.c.l.b16 %v730
    %v1049 = vunpack.c.h.b16 %v730
    %v1050 = vunpack.c.l.b16 %v731
    %v1051 = vunpack.c.h.b16 %v731
    %v1052 = vunpack.c.l.b16 %v732
    %v1053 = vunpack.c.h.b16 %v732
    %v1054 = vunpack.c.l.b16 %v733
    %v1055 = vunpack.c.h.b16 %v733
    %v1056 = vunpack.c.l.b16 %v734
    %v1057 = vunpack.c.h.b16 %v734
    %v1058 = vunpack.c.l.b16 %v735
    %v1059 = vunpack.c.h.b16 %v735
    %v1060 = vunpack.c.l.b16 %v736
    %v1061 = vunpack.c.h.b16 %v736
    %v1062 = vunpack.c.l.b16 %v737
    %v1063 = vunpack.c.h.b16 %v737
    %v1064 = vunpack.c.l.b16 %v738
    %v1065 = vunpack.c.h.b16 %v738
    %v1066 = vunpack.c.l.b16 %v739
    %v1067 = vunpack.c.h.b16 %v739
    %v1068 = vunpack.c.l.b16 %v740
    %v1069 = vunpack.c.h.b16 %v740
    %v1070 = vunpack.c.l.b16 %v741
    %v1071 = vunpack.c.h.b16 %v741
    %v1072 = vunpack.c.l.b16 %v742
    %v1073 = vunpack.c.h.b16 %v742
    %v1074 = vunpack.c.l.b16 %v743
    %v1075 = vunpack.c.h.b16 %v743
    %v1076 = vunpack.c.l.b16 %v744
    %v1077 = vunpack.c.h.b16 %v744
    %v1078 = vunpack.c.l.b16 %v745
    %v1079 = vunpack.c.h.b16 %v745
    %v1080 = vunpack.c.l.b16 %v746
    %v1081 = vunpack.c.h.b16 %v746
    %v1082 = vunpack.c.l.b16 %v747
    %v1083 = vunpack.c.h.b16 %v747
    %v1084 = vunpack.c.l.b16 %v748
    %v1085 = vunpack.c.h.b16 %v748
    %v1086 = vunpack.c.l.b16 %v749
    %v1087 = vunpack.c.h.b16 %v749
    %v1088 = vunpack.c.l.b16 %v750
    %v1089 = vunpack.c.h.b16 %v750
    %v1090 = vunpack.c.l.b16 %v751
    %v1091 = vunpack.c.h.b16 %v751
    %v1092 = vunpack.c.l.b16 %v752
    %v1093 = vunpack.c.h.b16 %v752
    %v1094 = vunpack.c.l.b16 %v753
    %v1095 = vunpack.c.h.b16 %v753
    %v1096 = vunpack.c.l.b16 %v754
    %v1097 = vunpack.c.h.b16 %v754
    %v1098 = vunpack.c.l.b16 %v755
    %v1099 = vunpack.c.h.b16 %v755
    %v1100 = vunpack.c.l.b16 %v756
    %v1101 = vunpack.c.h.b16 %v756
    %v1102 = vunpack.c.l.b16 %v757
    %v1103 = vunpack.c.h.b16 %v757
    %v1104 = vunpack.c.l.b16 %v758
    %v1105 = vunpack.c.h.b16 %v758
    %v1106 = vunpack.c.l.b16 %v759
    %v1107 = vunpack.c.h.b16 %v759
    %v1108 = vunpack.c.l.b16 %v760
    %v1109 = vunpack.c.h.b16 %v760
    %v1110 = vunpack.c.l.b16 %v761
    %v1111 = vunpack.c.h.b16 %v761
    %v1112 = vunpack.c.l.b16 %v762
    %v1113 = vunpack.c.h.b16 %v762
    %v1114 = vunpack.c.l.b16 %v763
    %v1115 = vunpack.c.h.b16 %v763
    %v1116 = vunpack.c.l.b16 %v764
    %v1117 = vunpack.c.h.b16 %v764
    %v1118 = vunpack.c.l.b16 %v765
    %v1119 = vunpack.c.h.b16 %v765
    %v1120 = vunpack.c.l.b16 %v766
    %v1121 = vunpack.c.h.b16 %v766
    %v1122 = vunpack.c.l.b16 %v767
    %v1123 = vunpack.c.h.b16 %v767
    %v1124 = vunpack.c.l.b16 %v768
    %v1125 = vunpack.c.h.b16 %v768
    %v1126 = vunpack.c.l.b16 %v769
    %v1127 = vunpack.c.h.b16 %v769
    %v1128 = vunpack.c.l.b16 %v770
    %v1129 = vunpack.c.h.b16 %v770
    %v1130 = vunpack.c.l.b16 %v771
    %v1131 = vunpack.c.h.b16 %v771
    %v1132 = vunpack.c.l.b16 %v772
    %v1133 = vunpack.c.h.b16 %v772
    %v1134 = vunpack.c.l.b16 %v773
    %v1135 = vunpack.c.h.b16 %v773
    %v1136 = vunpack.c.l.b16 %v774
    %v1137 = vunpack.c.h.b16 %v774
    %v1138 = vunpack.c.l.b16 %v775
    %v1139 = vunpack.c.h.b16 %v775
    %v1140 = vunpack.c.l.b16 %v776
    %v1141 = vunpack.c.h.b16 %v776
    %v1142 = vunpack.c.l.b16 %v777
    %v1143 = vunpack.c.h.b16 %v777
    %v1144 = vunpack.c.l.b16 %v778
    %v1145 = vunpack.c.h.b16 %v778
    %v1146 = vunpack.c.l.b16 %v779
    %v1147 = vunpack.c.h.b16 %v779
    %v1148 = vunpack.c.l.b16 %v780
    %v1149 = vunpack.c.h.b16 %v780
    %v1150 = vunpack.c.l.b16 %v781
    %v1151 = vunpack.c.h.b16 %v781
    %v1152 = vunpack.c.l.b16 %v782
    %v1153 = vunpack.c.h.b16 %v782
    %v1154 = vunpack.c.l.b16 %v783
    %v1155 = vunpack.c.h.b16 %v783
    %v1156 = vunpack.c.l.b16 %v784
    %v1157 = vunpack.c.h.b16 %v784
    %v1158 = vunpack.c.l.b16 %v785
    %v1159 = vunpack.c.h.b16 %v785
    %v1160 = vunpack.c.l.b16 %v786
    %v1161 = vunpack.c.h.b16 %v786
    %v1162 = vunpack.c.l.b16 %v787
    %v1163 = vunpack.c.h.b16 %v787
    %v1164 = vunpack.c.l.b16 %v788
    %v1165 = vunpack.c.h.b16 %v788
    %v1166 = vunpack.c.l.b16 %v789
    %v1167 = vunpack.c.h.b16 %v789
    %v1168 = vunpack.c.l.b16 %v790
    %v1169 = vunpack.c.h.b16 %v790
    %v1170 = vunpack.c.l.b16 %v791
    %v1171 = vunpack.c.h.b16 %v791
    %v1172 = vunpack.c.l.b16 %v792
    %v1173 = vunpack.c.h.b16 %v792
    %v1174 = vunpack.c.l.b16 %v793
    %v1175 = vunpack.c.h.b16 %v793
    %v1176 = vunpack.c.l.b16 %v794
    %v1177 = vunpack.c.h.b16 %v794
    %v1178 = vunpack.c.l.b16 %v795
    %v1179 = vunpack.c.h.b16 %v795
    %v1180 = vunpack.c.l.b16 %v796
    %v1181 = vunpack.c.h.b16 %v796
    %v1182 = vunpack.c.l.b16 %v797
    %v1183 = vunpack.c.h.b16 %v797
    %v1184 = vunpack.c.l.b16 %v798
    %v1185 = vunpack.c.h.b16 %v798
    %v1186 = vunpack.c.l.b16 %v799
    %v1187 = vunpack.c.h.b16 %v799
    %v1188 = vunpack.c.l.b16 %v800
    %v1189 = vunpack.c.h.b16 %v800
    %v1190 = vunpack.c.l.b16 %v801
    %v1191 = vunpack.c.h.b16 %v801
    %v1192 = vunpack.c.l.b16 %v802
    %v1193 = vunpack.c.h.b16 %v802
    %v1194 = vunpack.c.l.b16 %v803
    %v1195 = vunpack.c.h.b16 %v803
    %v1196 = vunpack.c.l.b16 %v804
    %v1197 = vunpack.c.h.b16 %v804
    %v1198 = vunpack.c.l.b16 %v805
    %v1199 = vunpack.c.h.b16 %v805
    %v1200 = vunpack.c.l.b16 %v806
    %v1201 = vunpack.c.h.b16 %v806
    %v1202 = vunpack.c.l.b16 %v807
    %v1203 = vunpack.c.h.b16 %v807
    %v1204 = vunpack.c.l.b16 %v808
    %v1205 = vunpack.c.h.b16 %v808
    %v1206 = vunpack.c.l.b16 %v809
    %v1207 = vunpack.c.h.b16 %v809
    %v1208 = vunpack.c.l.b16 %v810
    %v1209 = vunpack.c.h.b16 %v810
    %v1210 = vunpack.c.l.b16 %v811
    %v1211 = vunpack.c.h.b16 %v811
    %v1212 = vunpack.c.l.b16 %v812
    %v1213 = vunpack.c.h.b16 %v812
    %v1214 = vunpack.c.l.b16 %v813
    %v1215 = vunpack.c.h.b16 %v813
    %v1216 = vunpack.c.l.b16 %v814
    %v1217 = vunpack.c.h.b16 %v814
    %v1218 = vunpack.c.l.b16 %v815
    %v1219 = vunpack.c.h.b16 %v815
    %v1220 = vunpack.c.l.b16 %v816
    %v1221 = vunpack.c.h.b16 %v816
    %v1222 = vunpack.c.l.b16 %v817
    %v1223 = vunpack.c.h.b16 %v817
    %v1224 = vpack.c.b16 %v972, %v968
    %v1225 = vpack.c.b16 %v973, %v969
    %v1226 = vpack.c.b16 %v974, %v970
    %v1227 = vpack.c.b16 %v975, %v971
    %v1228 = vpack.c.b16 %v980, %v976
    %v1229 = vpack.c.b16 %v981, %v977
    %v1230 = vpack.c.b16 %v982, %v978
    %v1231 = vpack.c.b16 %v983, %v979
    %v1232 = vpack.c.b16 %v988, %v984
    %v1233 = vpack.c.b16 %v989, %v985
    %v1234 = vpack.c.b16 %v990, %v986
    %v1235 = vpack.c.b16 %v991, %v987
    %v1236 = vpack.c.b16 %v996, %v992
    %v1237 = vpack.c.b16 %v997, %v993
    %v1238 = vpack.c.b16 %v998, %v994
    %v1239 = vpack.c.b16 %v999, %v995
    %v1240 = vpack.c.b16 %v1004, %v1000
    %v1241 = vpack.c.b16 %v1005, %v1001
    %v1242 = vpack.c.b16 %v1006, %v1002
    %v1243 = vpack.c.b16 %v1007, %v1003
    %v1244 = vpack.c.b16 %v1012, %v1008
    %v1245 = vpack.c.b16 %v1013, %v1009
    %v1246 = vpack.c.b16 %v1014, %v1010
    %v1247 = vpack.c.b16 %v1015, %v1011
    %v1248 = vpack.c.b16 %v1020, %v1016
    %v1249 = vpack.c.b16 %v1021, %v1017
    %v1250 = vpack.c.b16 %v1022, %v1018
    %v1251 = vpack.c.b16 %v1023, %v1019
    %v1252 = vpack.c.b16 %v1028, %v1024
    %v1253 = vpack.c.b16 %v1029, %v1025
    %v1254 = vpack.c.b16 %v1030, %v1026
    %v1255 = vpack.c.b16 %v1031, %v1027
    %v1256 = vpack.c.b16 %v1036, %v1032
    %v1257 = vpack.c.b16 %v1037, %v1033
    %v1258 = vpack.c.b16 %v1038, %v1034
    %v1259 = vpack.c.b16 %v1039, %v1035
    %v1260 = vpack.c.b16 %v1044, %v1040
    %v1261 = vpack.c.b16 %v1045, %v1041
    %v1262 = vpack.c.b16 %v1046, %v1042
    %v1263 = vpack.c.b16 %v1047, %v1043
    %v1264 = vpack.c.b16 %v1052, %v1048
    %v1265 = vpack.c.b16 %v1053, %v1049
    %v1266 = vpack.c.b16 %v1054, %v1050
    %v1267 = vpack.c.b16 %v1055, %v1051
    %v1268 = vpack.c.b16 %v1060, %v1056
    %v1269 = vpack.c.b16 %v1061, %v1057
    %v1270 = vpack.c.b16 %v1062, %v1058
    %v1271 = vpack.c.b16 %v1063, %v1059
    %v1272 = vpack.c.b16 %v1068, %v1064
    %v1273 = vpack.c.b16 %v1069, %v1065
    %v1274 = vpack.c.b16 %v1070, %v1066
    %v1275 = vpack.c.b16 %v1071, %v1067
    %v1276 = vpack.c.b16 %v1076, %v1072
    %v1277 = vpack.c.b16 %v1077, %v1073
    %v1278 = vpack.c.b16 %v1078, %v1074
    %v1279 = vpack.c.b16 %v1079, %v1075
    %v1280 = vpack.c.b16 %v1084, %v1080
    %v1281 = vpack.c.b16 %v1085, %v1081
    %v1282 = vpack.c.b16 %v1086, %v1082
    %v1283 = vpack.c.b16 %v1087, %v1083
    %v1284 = vpack.c.b16 %v1092, %v1088
    %v1285 = vpack.c.b16 %v1093, %v1089
    %v1286 = vpack.c.b16 %v1094, %v1090
    %v1287 = vpack.c.b16 %v1095, %v1091
    %v1288 = vpack.c.b16 %v1100, %v1096
    %v1289 = vpack.c.b16 %v1101, %v1097
    %v1290 = vpack.c.b16 %v1102, %v1098
    %v1291 = vpack.c.b16 %v1103, %v1099
    %v1292 = vpack.c.b16 %v1108, %v1104
    %v1293 = vpack.c.b16 %v1109, %v1105
    %v1294 = vpack.c.b16 %v1110, %v1106
    %v1295 = vpack.c.b16 %v1111, %v1107
    %v1296 = vpack.c.b16 %v1116, %v1112
    %v1297 = vpack.c.b16 %v1117, %v1113
    %v1298 = vpack.c.b16 %v1118, %v1114
    %v1299 = vpack.c.b16 %v1119, %v1115
    %v1300 = vpack.c.b16 %v1124, %v1120
    %v1301 = vpack.c.b16 %v1125, %v1121
    %v1302 = vpack.c.b16 %v1126, %v1122
    %v1303 = vpack.c.b16 %v1127, %v1123
    %v1304 = vpack.c.b16 %v1132, %v1128
    %v1305 = vpack.c.b16 %v1133, %v1129
    %v1306 = vpack.c.b16 %v1134, %v1130
    %v1307 = vpack.c.b16 %v1135, %v1131
    %v1308 = vpack.c.b16 %v1140, %v1136
    %v1309 = vpack.c.b16 %v1141, %v1137
    %v1310 = vpack.c.b16 %v1142, %v1138
    %v1311 = vpack.c.b16 %v1143, %v1139
    %v1312 = vpack.c.b16 %v1148, %v1144
    %v1313 = vpack.c.b16 %v1149, %v1145
    %v1314 = vpack.c.b16 %v1150, %v1146
    %v1315 = vpack.c.b16 %v1151, %v1147
    %v1316 = vpack.c.b16 %v1156, %v1152
    %v1317 = vpack.c.b16 %v1157, %v1153
    %v1318 = vpack.c.b16 %v1158, %v1154
    %v1319 = vpack.c.b16 %v1159, %v1155
    %v1320 = vpack.c.b16 %v1164, %v1160
    %v1321 = vpack.c.b16 %v1165, %v1161
    %v1322 = vpack.c.b16 %v1166, %v1162
    %v1323 = vpack.c.b16 %v1167, %v1163
    %v1324 = vpack.c.b16 %v1172, %v1168
    %v1325 = vpack.c.b16 %v1173, %v1169
    %v1326 = vpack.c.b16 %v1174, %v1170
    %v1327 = vpack.c.b16 %v1175, %v1171
    %v1328 = vpack.c.b16 %v1180, %v1176
    %v1329 = vpack.c.b16 %v1181, %v1177
    %v1330 = vpack.c.b16 %v1182, %v1178
    %v1331 = vpack.c.b16 %v1183, %v1179
    %v1332 = vpack.c.b16 %v1188, %v1184
    %v1333 = vpack.c.b16 %v1189, %v1185
    %v1334 = vpack.c.b16 %v1190, %v1186
    %v1335 = vpack.c.b16 %v1191, %v1187
    %v1336 = vpack.c.b16 %v1196, %v1192
    %v1337 = vpack.c.b16 %v1197, %v1193
    %v1338 = vpack.c.b16 %v1198, %v1194
    %v1339 = vpack.c.b16 %v1199, %v1195
    %v1340 = vpack.c.b16 %v1204, %v1200
    %v1341 = vpack.c.b16 %v1205, %v1201
    %v1342 = vpack.c.b16 %v1206, %v1202
    %v1343 = vpack.c.b16 %v1207, %v1203
    %v1344 = vpack.c.b16 %v1212, %v1208
    %v1345 = vpack.c.b16 %v1213, %v1209
    %v1346 = vpack.c.b16 %v1214, %v1210
    %v1347 = vpack.c.b16 %v1215, %v1211
    %v1348 = vpack.c.b16 %v1220, %v1216
    %v1349 = vpack.c.b16 %v1221, %v1217
    %v1350 = vpack.c.b16 %v1222, %v1218
    %v1351 = vpack.c.b16 %v1223, %v1219
    %1480 = vmatprep.subr.bf16.mxu0 %v1253
    %1481 = vmatpush1.bf16.msra.mxu0 %v1252
    %1482 = vmatprep.subr.bf16.mxu0 %v1249
    %1483 = vmatpush1.bf16.msra.mxu0 %v1248
    %1484 = vmatprep.subr.bf16.mxu0 %v1245
    %1485 = vmatpush1.bf16.msra.mxu0 %v1244
    %1486 = vmatprep.subr.bf16.mxu0 %v1241
    %1487 = vmatpush1.bf16.msra.mxu0 %v1240
    %1488 = vmatprep.subr.bf16.mxu0 %v1237
    %1489 = vmatpush1.bf16.msra.mxu0 %v1236
    %1490 = vmatprep.subr.bf16.mxu0 %v1233
    %1491 = vmatpush1.bf16.msra.mxu0 %v1232
    %1492 = vmatprep.subr.bf16.mxu0 %v1229
    %1493 = vmatpush1.bf16.msra.mxu0 %v1228
    %1494 = vmatprep.subr.bf16.mxu0 %v1225
    %1495 = vmatpush1.bf16.msra.mxu0 %v1224
    %1496 = vmatprep.subr.bf16.mxu0 %v1285
    %1497 = vmatpush2.bf16.msra.mxu0 %v1284
    %1498 = vmatprep.subr.bf16.mxu0 %v1281
    %1499 = vmatpush2.bf16.msra.mxu0 %v1280
    %1500 = vmatprep.subr.bf16.mxu0 %v1277
    %1501 = vmatpush2.bf16.msra.mxu0 %v1276
    %1502 = vmatprep.subr.bf16.mxu0 %v1273
    %1503 = vmatpush2.bf16.msra.mxu0 %v1272
    %1504 = vmatprep.subr.bf16.mxu0 %v1269
    %1505 = vmatpush2.bf16.msra.mxu0 %v1268
    %1506 = vmatprep.subr.bf16.mxu0 %v1265
    %1507 = vmatpush2.bf16.msra.mxu0 %v1264
    %1508 = vmatprep.subr.bf16.mxu0 %v1261
    %1509 = vmatpush2.bf16.msra.mxu0 %v1260
    %1510 = vmatprep.subr.bf16.mxu0 %v1257
    %1511 = vmatpush2.bf16.msra.mxu0 %v1256
    %1512 = vmatprep.mubr.bf16.mxu0 %v687
    %1513 = vmatmul.mubr.bf16.gmra.mxu0 %v686
    %v1514 = vpop.f32.mrf.mxu0
    %v1515 = vadd.f32 %v823, %v1514
    %v1516 = vpop.f32.mrf.mxu0
    %v1517 = vadd.f32 %v827, %v1516
    %v1518 = vpop.f32.mrf.mxu0
    %v1519 = vpop.f32.mrf.mxu0
    %1520 = vdwg.mxu0
    %1521 = vmatprep.subr.bf16.mxu0 %v1317
    %1522 = vmatpush1.bf16.msra.mxu0 %v1316
    %1523 = vmatprep.subr.bf16.mxu0 %v1313
    %1524 = vmatpush1.bf16.msra.mxu0 %v1312
    %1525 = vmatprep.subr.bf16.mxu0 %v1309
    %1526 = vmatpush1.bf16.msra.mxu0 %v1308
    %1527 = vmatprep.subr.bf16.mxu0 %v1305
    %1528 = vmatpush1.bf16.msra.mxu0 %v1304
    %1529 = vmatprep.subr.bf16.mxu0 %v1301
    %1530 = vmatpush1.bf16.msra.mxu0 %v1300
    %1531 = vmatprep.subr.bf16.mxu0 %v1297
    %1532 = vmatpush1.bf16.msra.mxu0 %v1296
    %1533 = vmatprep.subr.bf16.mxu0 %v1293
    %1534 = vmatpush1.bf16.msra.mxu0 %v1292
    %1535 = vmatprep.subr.bf16.mxu0 %v1289
    %1536 = vmatpush1.bf16.msra.mxu0 %v1288
    %1537 = vmatprep.subr.bf16.mxu0 %v1349
    %1538 = vmatpush2.bf16.msra.mxu0 %v1348
    %1539 = vmatprep.subr.bf16.mxu0 %v1345
    %1540 = vmatpush2.bf16.msra.mxu0 %v1344
    %1541 = vmatprep.subr.bf16.mxu0 %v1341
    %1542 = vmatpush2.bf16.msra.mxu0 %v1340
    %1543 = vmatprep.subr.bf16.mxu0 %v1337
    %1544 = vmatpush2.bf16.msra.mxu0 %v1336
    %1545 = vmatprep.subr.bf16.mxu0 %v1333
    %1546 = vmatpush2.bf16.msra.mxu0 %v1332
    %1547 = vmatprep.subr.bf16.mxu0 %v1329
    %1548 = vmatpush2.bf16.msra.mxu0 %v1328
    %1549 = vmatprep.subr.bf16.mxu0 %v1325
    %1550 = vmatpush2.bf16.msra.mxu0 %v1324
    %1551 = vmatprep.subr.bf16.mxu0 %v1321
    %1552 = vmatpush2.bf16.msra.mxu0 %v1320
    %1553 = vmatprep.mubr.bf16.mxu0 %v689
    %1554 = vmatmul.mubr.bf16.gmra.mxu0 %v688
    %v1555 = vpop.f32.mrf.mxu0
    %v1556 = vadd.f32 %v1515, %v1555
    %v1557 = vpop.f32.mrf.mxu0
    %v1558 = vadd.f32 %v1517, %v1557
    %v1559 = vpop.f32.mrf.mxu0
    %v1560 = vpop.f32.mrf.mxu0
    %1561 = vdwg.mxu0
    %1562 = vmatprep.subr.bf16.mxu0 %v1255
    %1563 = vmatpush1.bf16.msra.mxu0 %v1254
    %1564 = vmatprep.subr.bf16.mxu0 %v1251
    %1565 = vmatpush1.bf16.msra.mxu0 %v1250
    %1566 = vmatprep.subr.bf16.mxu0 %v1247
    %1567 = vmatpush1.bf16.msra.mxu0 %v1246
    %1568 = vmatprep.subr.bf16.mxu0 %v1243
    %1569 = vmatpush1.bf16.msra.mxu0 %v1242
    %1570 = vmatprep.subr.bf16.mxu0 %v1239
    %1571 = vmatpush1.bf16.msra.mxu0 %v1238
    %1572 = vmatprep.subr.bf16.mxu0 %v1235
    %1573 = vmatpush1.bf16.msra.mxu0 %v1234
    %1574 = vmatprep.subr.bf16.mxu0 %v1231
    %1575 = vmatpush1.bf16.msra.mxu0 %v1230
    %1576 = vmatprep.subr.bf16.mxu0 %v1227
    %1577 = vmatpush1.bf16.msra.mxu0 %v1226
    %1578 = vmatprep.subr.bf16.mxu0 %v1287
    %1579 = vmatpush2.bf16.msra.mxu0 %v1286
    %1580 = vmatprep.subr.bf16.mxu0 %v1283
    %1581 = vmatpush2.bf16.msra.mxu0 %v1282
    %1582 = vmatprep.subr.bf16.mxu0 %v1279
    %1583 = vmatpush2.bf16.msra.mxu0 %v1278
    %1584 = vmatprep.subr.bf16.mxu0 %v1275
    %1585 = vmatpush2.bf16.msra.mxu0 %v1274
    %1586 = vmatprep.subr.bf16.mxu0 %v1271
    %1587 = vmatpush2.bf16.msra.mxu0 %v1270
    %1588 = vmatprep.subr.bf16.mxu0 %v1267
    %1589 = vmatpush2.bf16.msra.mxu0 %v1266
    %1590 = vmatprep.subr.bf16.mxu0 %v1263
    %1591 = vmatpush2.bf16.msra.mxu0 %v1262
    %1592 = vmatprep.subr.bf16.mxu0 %v1259
    %1593 = vmatpush2.bf16.msra.mxu0 %v1258
    %1594 = vmatprep.mubr.bf16.mxu0 %v687
    %1595 = vmatmul.mubr.bf16.gmra.mxu0 %v686
    %v1596 = vpop.f32.mrf.mxu0
    %v1597 = vadd.f32 %v831, %v1596
    %v1598 = vpop.f32.mrf.mxu0
    %v1599 = vadd.f32 %v835, %v1598
    %v1600 = vpop.f32.mrf.mxu0
    %v1601 = vpop.f32.mrf.mxu0
    %1602 = vdwg.mxu0
    %1603 = vmatprep.subr.bf16.mxu0 %v1319
    %1604 = vmatpush1.bf16.msra.mxu0 %v1318
    %1605 = vmatprep.subr.bf16.mxu0 %v1315
    %1606 = vmatpush1.bf16.msra.mxu0 %v1314
    %1607 = vmatprep.subr.bf16.mxu0 %v1311
    %1608 = vmatpush1.bf16.msra.mxu0 %v1310
    %1609 = vmatprep.subr.bf16.mxu0 %v1307
    %1610 = vmatpush1.bf16.msra.mxu0 %v1306
    %1611 = vmatprep.subr.bf16.mxu0 %v1303
    %1612 = vmatpush1.bf16.msra.mxu0 %v1302
    %1613 = vmatprep.subr.bf16.mxu0 %v1299
    %1614 = vmatpush1.bf16.msra.mxu0 %v1298
    %1615 = vmatprep.subr.bf16.mxu0 %v1295
    %1616 = vmatpush1.bf16.msra.mxu0 %v1294
    %1617 = vmatprep.subr.bf16.mxu0 %v1291
    %1618 = vmatpush1.bf16.msra.mxu0 %v1290
    %1619 = vmatprep.subr.bf16.mxu0 %v1351
    %1620 = vmatpush2.bf16.msra.mxu0 %v1350
    %1621 = vmatprep.subr.bf16.mxu0 %v1347
    %1622 = vmatpush2.bf16.msra.mxu0 %v1346
    %1623 = vmatprep.subr.bf16.mxu0 %v1343
    %1624 = vmatpush2.bf16.msra.mxu0 %v1342
    %1625 = vmatprep.subr.bf16.mxu0 %v1339
    %1626 = vmatpush2.bf16.msra.mxu0 %v1338
    %1627 = vmatprep.subr.bf16.mxu0 %v1335
    %1628 = vmatpush2.bf16.msra.mxu0 %v1334
    %1629 = vmatprep.subr.bf16.mxu0 %v1331
    %1630 = vmatpush2.bf16.msra.mxu0 %v1330
    %1631 = vmatprep.subr.bf16.mxu0 %v1327
    %1632 = vmatpush2.bf16.msra.mxu0 %v1326
    %1633 = vmatprep.subr.bf16.mxu0 %v1323
    %1634 = vmatpush2.bf16.msra.mxu0 %v1322
    %1635 = vmatprep.mubr.bf16.mxu0 %v689
    %1636 = vmatmul.mubr.bf16.gmra.mxu0 %v688
    %v1637 = vpop.f32.mrf.mxu0
    %v1638 = vadd.f32 %v1597, %v1637
    %v1639 = vpop.f32.mrf.mxu0
    %v1640 = vadd.f32 %v1599, %v1639
    %v1641 = vpop.f32.mrf.mxu0
    %v1642 = vpop.f32.mrf.mxu0
    %1643 = vdwg.mxu0
    %vm1644 = vcmp.gt.f32.partialorder %v1556, 0.0
    %vm1645 = vcmp.gt.f32.partialorder %v1558, 0.0
    %vm1646 = vcmp.gt.f32.partialorder %v1638, 0.0
    %vm1647 = vcmp.gt.f32.partialorder %v1640, 0.0
    %v1648 = vmul.f32 %v1556, 0.1
    %v1649 = vmul.f32 %v1558, 0.1
    %v1650 = vmul.f32 %v1638, 0.1
    %v1651 = vmul.f32 %v1640, 0.1
    %v1652 = vsel %vm1644, %v1556, %v1648
    %v1653 = vsel %vm1645, %v1558, %v1649
    %v1654 = vsel %vm1646, %v1638, %v1650
    %v1655 = vsel %vm1647, %v1640, %v1651
    %v1656 = vpack.c.bf16 %v1652, %v1652
    %v1657 = vpack.c.bf16 %v1653, %v1653
    %v1658 = vpack.c.bf16 %v1654, %v1654
    %v1659 = vpack.c.bf16 %v1655, %v1655
    %v1660 = vld [vmem:[#allocation10] sm:$0xff]
    %v1661 = vld [vmem:[#allocation10 + $0x8] sm:$0xff]
    %v1662 = vld [vmem:[#allocation10 + $0x10] sm:$0xff]
    %v1663 = vld [vmem:[#allocation10 + $0x18] sm:$0xff]
    %v1664 = vld [vmem:[#allocation10 + $0x20] sm:$0xff]
    %v1665 = vld [vmem:[#allocation10 + $0x28] sm:$0xff]
    %v1666 = vld [vmem:[#allocation10 + $0x30] sm:$0xff]
    %v1667 = vld [vmem:[#allocation10 + $0x38] sm:$0xff]
    %v1668 = vld [vmem:[#allocation10 + $0x40] sm:$0xff]
    %v1669 = vld [vmem:[#allocation10 + $0x48] sm:$0xff]
    %v1670 = vld [vmem:[#allocation10 + $0x50] sm:$0xff]
    %v1671 = vld [vmem:[#allocation10 + $0x58] sm:$0xff]
    %v1672 = vld [vmem:[#allocation10 + $0x60] sm:$0xff]
    %v1673 = vld [vmem:[#allocation10 + $0x68] sm:$0xff]
    %v1674 = vld [vmem:[#allocation10 + $0x70] sm:$0xff]
    %v1675 = vld [vmem:[#allocation10 + $0x78] sm:$0xff]
    %v1676 = vld [vmem:[#allocation10 + $0x80] sm:$0xff]
    %v1677 = vld [vmem:[#allocation10 + $0x88] sm:$0xff]
    %v1678 = vld [vmem:[#allocation10 + $0x90] sm:$0xff]
    %v1679 = vld [vmem:[#allocation10 + $0x98] sm:$0xff]
    %v1680 = vld [vmem:[#allocation10 + $0xa0] sm:$0xff]
    %v1681 = vld [vmem:[#allocation10 + $0xa8] sm:$0xff]
    %v1682 = vld [vmem:[#allocation10 + $0xb0] sm:$0xff]
    %v1683 = vld [vmem:[#allocation10 + $0xb8] sm:$0xff]
    %v1684 = vld [vmem:[#allocation10 + $0xc0] sm:$0xff]
    %v1685 = vld [vmem:[#allocation10 + $0xc8] sm:$0xff]
    %v1686 = vld [vmem:[#allocation10 + $0xd0] sm:$0xff]
    %v1687 = vld [vmem:[#allocation10 + $0xd8] sm:$0xff]
    %v1688 = vld [vmem:[#allocation10 + $0xe0] sm:$0xff]
    %v1689 = vld [vmem:[#allocation10 + $0xe8] sm:$0xff]
    %v1690 = vld [vmem:[#allocation10 + $0xf0] sm:$0xff]
    %v1691 = vld [vmem:[#allocation10 + $0xf8] sm:$0xff]
    %v1692 = vld [vmem:[#allocation10 + $0x100] sm:$0xff]
    %v1693 = vld [vmem:[#allocation10 + $0x108] sm:$0xff]
    %v1694 = vld [vmem:[#allocation10 + $0x110] sm:$0xff]
    %v1695 = vld [vmem:[#allocation10 + $0x118] sm:$0xff]
    %v1696 = vld [vmem:[#allocation10 + $0x120] sm:$0xff]
    %v1697 = vld [vmem:[#allocation10 + $0x128] sm:$0xff]
    %v1698 = vld [vmem:[#allocation10 + $0x130] sm:$0xff]
    %v1699 = vld [vmem:[#allocation10 + $0x138] sm:$0xff]
    %v1700 = vld [vmem:[#allocation10 + $0x140] sm:$0xff]
    %v1701 = vld [vmem:[#allocation10 + $0x148] sm:$0xff]
    %v1702 = vld [vmem:[#allocation10 + $0x150] sm:$0xff]
    %v1703 = vld [vmem:[#allocation10 + $0x158] sm:$0xff]
    %v1704 = vld [vmem:[#allocation10 + $0x160] sm:$0xff]
    %v1705 = vld [vmem:[#allocation10 + $0x168] sm:$0xff]
    %v1706 = vld [vmem:[#allocation10 + $0x170] sm:$0xff]
    %v1707 = vld [vmem:[#allocation10 + $0x178] sm:$0xff]
    %v1708 = vld [vmem:[#allocation10 + $0x180] sm:$0xff]
    %v1709 = vld [vmem:[#allocation10 + $0x188] sm:$0xff]
    %v1710 = vld [vmem:[#allocation10 + $0x190] sm:$0xff]
    %v1711 = vld [vmem:[#allocation10 + $0x198] sm:$0xff]
    %v1712 = vld [vmem:[#allocation10 + $0x1a0] sm:$0xff]
    %v1713 = vld [vmem:[#allocation10 + $0x1a8] sm:$0xff]
    %v1714 = vld [vmem:[#allocation10 + $0x1b0] sm:$0xff]
    %v1715 = vld [vmem:[#allocation10 + $0x1b8] sm:$0xff]
    %v1716 = vld [vmem:[#allocation10 + $0x1c0] sm:$0xff]
    %v1717 = vld [vmem:[#allocation10 + $0x1c8] sm:$0xff]
    %v1718 = vld [vmem:[#allocation10 + $0x1d0] sm:$0xff]
    %v1719 = vld [vmem:[#allocation10 + $0x1d8] sm:$0xff]
    %v1720 = vld [vmem:[#allocation10 + $0x1e0] sm:$0xff]
    %v1721 = vld [vmem:[#allocation10 + $0x1e8] sm:$0xff]
    %v1722 = vld [vmem:[#allocation10 + $0x1f0] sm:$0xff]
    %v1723 = vld [vmem:[#allocation10 + $0x1f8] sm:$0xff]
    %v1724 = vld [vmem:[#allocation10 + $0x200] sm:$0xff]
    %v1725 = vld [vmem:[#allocation10 + $0x208] sm:$0xff]
    %v1726 = vld [vmem:[#allocation10 + $0x210] sm:$0xff]
    %v1727 = vld [vmem:[#allocation10 + $0x218] sm:$0xff]
    %v1728 = vld [vmem:[#allocation10 + $0x220] sm:$0xff]
    %v1729 = vld [vmem:[#allocation10 + $0x228] sm:$0xff]
    %v1730 = vld [vmem:[#allocation10 + $0x230] sm:$0xff]
    %v1731 = vld [vmem:[#allocation10 + $0x238] sm:$0xff]
    %v1732 = vld [vmem:[#allocation10 + $0x240] sm:$0xff]
    %v1733 = vld [vmem:[#allocation10 + $0x248] sm:$0xff]
    %v1734 = vld [vmem:[#allocation10 + $0x250] sm:$0xff]
    %v1735 = vld [vmem:[#allocation10 + $0x258] sm:$0xff]
    %v1736 = vld [vmem:[#allocation10 + $0x260] sm:$0xff]
    %v1737 = vld [vmem:[#allocation10 + $0x268] sm:$0xff]
    %v1738 = vld [vmem:[#allocation10 + $0x270] sm:$0xff]
    %v1739 = vld [vmem:[#allocation10 + $0x278] sm:$0xff]
    %v1740 = vld [vmem:[#allocation10 + $0x280] sm:$0xff]
    %v1741 = vld [vmem:[#allocation10 + $0x288] sm:$0xff]
    %v1742 = vld [vmem:[#allocation10 + $0x290] sm:$0xff]
    %v1743 = vld [vmem:[#allocation10 + $0x298] sm:$0xff]
    %v1744 = vld [vmem:[#allocation10 + $0x2a0] sm:$0xff]
    %v1745 = vld [vmem:[#allocation10 + $0x2a8] sm:$0xff]
    %v1746 = vld [vmem:[#allocation10 + $0x2b0] sm:$0xff]
    %v1747 = vld [vmem:[#allocation10 + $0x2b8] sm:$0xff]
    %v1748 = vld [vmem:[#allocation10 + $0x2c0] sm:$0xff]
    %v1749 = vld [vmem:[#allocation10 + $0x2c8] sm:$0xff]
    %v1750 = vld [vmem:[#allocation10 + $0x2d0] sm:$0xff]
    %v1751 = vld [vmem:[#allocation10 + $0x2d8] sm:$0xff]
    %v1752 = vld [vmem:[#allocation10 + $0x2e0] sm:$0xff]
    %v1753 = vld [vmem:[#allocation10 + $0x2e8] sm:$0xff]
    %v1754 = vld [vmem:[#allocation10 + $0x2f0] sm:$0xff]
    %v1755 = vld [vmem:[#allocation10 + $0x2f8] sm:$0xff]
    %v1756 = vld [vmem:[#allocation10 + $0x300] sm:$0xff]
    %v1757 = vld [vmem:[#allocation10 + $0x308] sm:$0xff]
    %v1758 = vld [vmem:[#allocation10 + $0x310] sm:$0xff]
    %v1759 = vld [vmem:[#allocation10 + $0x318] sm:$0xff]
    %v1760 = vld [vmem:[#allocation10 + $0x320] sm:$0xff]
    %v1761 = vld [vmem:[#allocation10 + $0x328] sm:$0xff]
    %v1762 = vld [vmem:[#allocation10 + $0x330] sm:$0xff]
    %v1763 = vld [vmem:[#allocation10 + $0x338] sm:$0xff]
    %v1764 = vld [vmem:[#allocation10 + $0x340] sm:$0xff]
    %v1765 = vld [vmem:[#allocation10 + $0x348] sm:$0xff]
    %v1766 = vld [vmem:[#allocation10 + $0x350] sm:$0xff]
    %v1767 = vld [vmem:[#allocation10 + $0x358] sm:$0xff]
    %v1768 = vld [vmem:[#allocation10 + $0x360] sm:$0xff]
    %v1769 = vld [vmem:[#allocation10 + $0x368] sm:$0xff]
    %v1770 = vld [vmem:[#allocation10 + $0x370] sm:$0xff]
    %v1771 = vld [vmem:[#allocation10 + $0x378] sm:$0xff]
    %v1772 = vld [vmem:[#allocation10 + $0x380] sm:$0xff]
    %v1773 = vld [vmem:[#allocation10 + $0x388] sm:$0xff]
    %v1774 = vld [vmem:[#allocation10 + $0x390] sm:$0xff]
    %v1775 = vld [vmem:[#allocation10 + $0x398] sm:$0xff]
    %v1776 = vld [vmem:[#allocation10 + $0x3a0] sm:$0xff]
    %v1777 = vld [vmem:[#allocation10 + $0x3a8] sm:$0xff]
    %v1778 = vld [vmem:[#allocation10 + $0x3b0] sm:$0xff]
    %v1779 = vld [vmem:[#allocation10 + $0x3b8] sm:$0xff]
    %v1780 = vld [vmem:[#allocation10 + $0x3c0] sm:$0xff]
    %v1781 = vld [vmem:[#allocation10 + $0x3c8] sm:$0xff]
    %v1782 = vld [vmem:[#allocation10 + $0x3d0] sm:$0xff]
    %v1783 = vld [vmem:[#allocation10 + $0x3d8] sm:$0xff]
    %v1784 = vld [vmem:[#allocation10 + $0x3e0] sm:$0xff]
    %v1785 = vld [vmem:[#allocation10 + $0x3e8] sm:$0xff]
    %v1786 = vld [vmem:[#allocation10 + $0x3f0] sm:$0xff]
    %v1787 = vld [vmem:[#allocation10 + $0x3f8] sm:$0xff]
    %v1788 = vld [vmem:[%s6] sm:$0xf]
    %v1790 = vlaneseq
    %v1791 = vshrl.u32 %v1790, 7
    %v1792 = vsub.s32 0, %v1791
    %v1793 = vrot.slane %v1788, %v1792
    %v1794 = vlaneseq
    %v1795 = vshrl.u32 %v1794, 7
    %v1796 = vsub.s32 1, %v1795
    %v1797 = vrot.slane %v1788, %v1796
    %v1798 = vlaneseq
    %v1799 = vshrl.u32 %v1798, 7
    %v1800 = vsub.s32 2, %v1799
    %v1801 = vrot.slane %v1788, %v1800
    %v1802 = vlaneseq
    %v1803 = vshrl.u32 %v1802, 7
    %v1804 = vsub.s32 3, %v1803
    %v1805 = vrot.slane %v1788, %v1804
    %v1938 = vunpack.c.l.b16 %v1660
    %v1939 = vunpack.c.h.b16 %v1660
    %v1940 = vunpack.c.l.b16 %v1661
    %v1941 = vunpack.c.h.b16 %v1661
    %v1942 = vunpack.c.l.b16 %v1662
    %v1943 = vunpack.c.h.b16 %v1662
    %v1944 = vunpack.c.l.b16 %v1663
    %v1945 = vunpack.c.h.b16 %v1663
    %v1946 = vunpack.c.l.b16 %v1664
    %v1947 = vunpack.c.h.b16 %v1664
    %v1948 = vunpack.c.l.b16 %v1665
    %v1949 = vunpack.c.h.b16 %v1665
    %v1950 = vunpack.c.l.b16 %v1666
    %v1951 = vunpack.c.h.b16 %v1666
    %v1952 = vunpack.c.l.b16 %v1667
    %v1953 = vunpack.c.h.b16 %v1667
    %v1954 = vunpack.c.l.b16 %v1668
    %v1955 = vunpack.c.h.b16 %v1668
    %v1956 = vunpack.c.l.b16 %v1669
    %v1957 = vunpack.c.h.b16 %v1669
    %v1958 = vunpack.c.l.b16 %v1670
    %v1959 = vunpack.c.h.b16 %v1670
    %v1960 = vunpack.c.l.b16 %v1671
    %v1961 = vunpack.c.h.b16 %v1671
    %v1962 = vunpack.c.l.b16 %v1672
    %v1963 = vunpack.c.h.b16 %v1672
    %v1964 = vunpack.c.l.b16 %v1673
    %v1965 = vunpack.c.h.b16 %v1673
    %v1966 = vunpack.c.l.b16 %v1674
    %v1967 = vunpack.c.h.b16 %v1674
    %v1968 = vunpack.c.l.b16 %v1675
    %v1969 = vunpack.c.h.b16 %v1675
    %v1970 = vunpack.c.l.b16 %v1676
    %v1971 = vunpack.c.h.b16 %v1676
    %v1972 = vunpack.c.l.b16 %v1677
    %v1973 = vunpack.c.h.b16 %v1677
    %v1974 = vunpack.c.l.b16 %v1678
    %v1975 = vunpack.c.h.b16 %v1678
    %v1976 = vunpack.c.l.b16 %v1679
    %v1977 = vunpack.c.h.b16 %v1679
    %v1978 = vunpack.c.l.b16 %v1680
    %v1979 = vunpack.c.h.b16 %v1680
    %v1980 = vunpack.c.l.b16 %v1681
    %v1981 = vunpack.c.h.b16 %v1681
    %v1982 = vunpack.c.l.b16 %v1682
    %v1983 = vunpack.c.h.b16 %v1682
    %v1984 = vunpack.c.l.b16 %v1683
    %v1985 = vunpack.c.h.b16 %v1683
    %v1986 = vunpack.c.l.b16 %v1684
    %v1987 = vunpack.c.h.b16 %v1684
    %v1988 = vunpack.c.l.b16 %v1685
    %v1989 = vunpack.c.h.b16 %v1685
    %v1990 = vunpack.c.l.b16 %v1686
    %v1991 = vunpack.c.h.b16 %v1686
    %v1992 = vunpack.c.l.b16 %v1687
    %v1993 = vunpack.c.h.b16 %v1687
    %v1994 = vunpack.c.l.b16 %v1688
    %v1995 = vunpack.c.h.b16 %v1688
    %v1996 = vunpack.c.l.b16 %v1689
    %v1997 = vunpack.c.h.b16 %v1689
    %v1998 = vunpack.c.l.b16 %v1690
    %v1999 = vunpack.c.h.b16 %v1690
    %v2000 = vunpack.c.l.b16 %v1691
    %v2001 = vunpack.c.h.b16 %v1691
    %v2002 = vunpack.c.l.b16 %v1692
    %v2003 = vunpack.c.h.b16 %v1692
    %v2004 = vunpack.c.l.b16 %v1693
    %v2005 = vunpack.c.h.b16 %v1693
    %v2006 = vunpack.c.l.b16 %v1694
    %v2007 = vunpack.c.h.b16 %v1694
    %v2008 = vunpack.c.l.b16 %v1695
    %v2009 = vunpack.c.h.b16 %v1695
    %v2010 = vunpack.c.l.b16 %v1696
    %v2011 = vunpack.c.h.b16 %v1696
    %v2012 = vunpack.c.l.b16 %v1697
    %v2013 = vunpack.c.h.b16 %v1697
    %v2014 = vunpack.c.l.b16 %v1698
    %v2015 = vunpack.c.h.b16 %v1698
    %v2016 = vunpack.c.l.b16 %v1699
    %v2017 = vunpack.c.h.b16 %v1699
    %v2018 = vunpack.c.l.b16 %v1700
    %v2019 = vunpack.c.h.b16 %v1700
    %v2020 = vunpack.c.l.b16 %v1701
    %v2021 = vunpack.c.h.b16 %v1701
    %v2022 = vunpack.c.l.b16 %v1702
    %v2023 = vunpack.c.h.b16 %v1702
    %v2024 = vunpack.c.l.b16 %v1703
    %v2025 = vunpack.c.h.b16 %v1703
    %v2026 = vunpack.c.l.b16 %v1704
    %v2027 = vunpack.c.h.b16 %v1704
    %v2028 = vunpack.c.l.b16 %v1705
    %v2029 = vunpack.c.h.b16 %v1705
    %v2030 = vunpack.c.l.b16 %v1706
    %v2031 = vunpack.c.h.b16 %v1706
    %v2032 = vunpack.c.l.b16 %v1707
    %v2033 = vunpack.c.h.b16 %v1707
    %v2034 = vunpack.c.l.b16 %v1708
    %v2035 = vunpack.c.h.b16 %v1708
    %v2036 = vunpack.c.l.b16 %v1709
    %v2037 = vunpack.c.h.b16 %v1709
    %v2038 = vunpack.c.l.b16 %v1710
    %v2039 = vunpack.c.h.b16 %v1710
    %v2040 = vunpack.c.l.b16 %v1711
    %v2041 = vunpack.c.h.b16 %v1711
    %v2042 = vunpack.c.l.b16 %v1712
    %v2043 = vunpack.c.h.b16 %v1712
    %v2044 = vunpack.c.l.b16 %v1713
    %v2045 = vunpack.c.h.b16 %v1713
    %v2046 = vunpack.c.l.b16 %v1714
    %v2047 = vunpack.c.h.b16 %v1714
    %v2048 = vunpack.c.l.b16 %v1715
    %v2049 = vunpack.c.h.b16 %v1715
    %v2050 = vunpack.c.l.b16 %v1716
    %v2051 = vunpack.c.h.b16 %v1716
    %v2052 = vunpack.c.l.b16 %v1717
    %v2053 = vunpack.c.h.b16 %v1717
    %v2054 = vunpack.c.l.b16 %v1718
    %v2055 = vunpack.c.h.b16 %v1718
    %v2056 = vunpack.c.l.b16 %v1719
    %v2057 = vunpack.c.h.b16 %v1719
    %v2058 = vunpack.c.l.b16 %v1720
    %v2059 = vunpack.c.h.b16 %v1720
    %v2060 = vunpack.c.l.b16 %v1721
    %v2061 = vunpack.c.h.b16 %v1721
    %v2062 = vunpack.c.l.b16 %v1722
    %v2063 = vunpack.c.h.b16 %v1722
    %v2064 = vunpack.c.l.b16 %v1723
    %v2065 = vunpack.c.h.b16 %v1723
    %v2066 = vunpack.c.l.b16 %v1724
    %v2067 = vunpack.c.h.b16 %v1724
    %v2068 = vunpack.c.l.b16 %v1725
    %v2069 = vunpack.c.h.b16 %v1725
    %v2070 = vunpack.c.l.b16 %v1726
    %v2071 = vunpack.c.h.b16 %v1726
    %v2072 = vunpack.c.l.b16 %v1727
    %v2073 = vunpack.c.h.b16 %v1727
    %v2074 = vunpack.c.l.b16 %v1728
    %v2075 = vunpack.c.h.b16 %v1728
    %v2076 = vunpack.c.l.b16 %v1729
    %v2077 = vunpack.c.h.b16 %v1729
    %v2078 = vunpack.c.l.b16 %v1730
    %v2079 = vunpack.c.h.b16 %v1730
    %v2080 = vunpack.c.l.b16 %v1731
    %v2081 = vunpack.c.h.b16 %v1731
    %v2082 = vunpack.c.l.b16 %v1732
    %v2083 = vunpack.c.h.b16 %v1732
    %v2084 = vunpack.c.l.b16 %v1733
    %v2085 = vunpack.c.h.b16 %v1733
    %v2086 = vunpack.c.l.b16 %v1734
    %v2087 = vunpack.c.h.b16 %v1734
    %v2088 = vunpack.c.l.b16 %v1735
    %v2089 = vunpack.c.h.b16 %v1735
    %v2090 = vunpack.c.l.b16 %v1736
    %v2091 = vunpack.c.h.b16 %v1736
    %v2092 = vunpack.c.l.b16 %v1737
    %v2093 = vunpack.c.h.b16 %v1737
    %v2094 = vunpack.c.l.b16 %v1738
    %v2095 = vunpack.c.h.b16 %v1738
    %v2096 = vunpack.c.l.b16 %v1739
    %v2097 = vunpack.c.h.b16 %v1739
    %v2098 = vunpack.c.l.b16 %v1740
    %v2099 = vunpack.c.h.b16 %v1740
    %v2100 = vunpack.c.l.b16 %v1741
    %v2101 = vunpack.c.h.b16 %v1741
    %v2102 = vunpack.c.l.b16 %v1742
    %v2103 = vunpack.c.h.b16 %v1742
    %v2104 = vunpack.c.l.b16 %v1743
    %v2105 = vunpack.c.h.b16 %v1743
    %v2106 = vunpack.c.l.b16 %v1744
    %v2107 = vunpack.c.h.b16 %v1744
    %v2108 = vunpack.c.l.b16 %v1745
    %v2109 = vunpack.c.h.b16 %v1745
    %v2110 = vunpack.c.l.b16 %v1746
    %v2111 = vunpack.c.h.b16 %v1746
    %v2112 = vunpack.c.l.b16 %v1747
    %v2113 = vunpack.c.h.b16 %v1747
    %v2114 = vunpack.c.l.b16 %v1748
    %v2115 = vunpack.c.h.b16 %v1748
    %v2116 = vunpack.c.l.b16 %v1749
    %v2117 = vunpack.c.h.b16 %v1749
    %v2118 = vunpack.c.l.b16 %v1750
    %v2119 = vunpack.c.h.b16 %v1750
    %v2120 = vunpack.c.l.b16 %v1751
    %v2121 = vunpack.c.h.b16 %v1751
    %v2122 = vunpack.c.l.b16 %v1752
    %v2123 = vunpack.c.h.b16 %v1752
    %v2124 = vunpack.c.l.b16 %v1753
    %v2125 = vunpack.c.h.b16 %v1753
    %v2126 = vunpack.c.l.b16 %v1754
    %v2127 = vunpack.c.h.b16 %v1754
    %v2128 = vunpack.c.l.b16 %v1755
    %v2129 = vunpack.c.h.b16 %v1755
    %v2130 = vunpack.c.l.b16 %v1756
    %v2131 = vunpack.c.h.b16 %v1756
    %v2132 = vunpack.c.l.b16 %v1757
    %v2133 = vunpack.c.h.b16 %v1757
    %v2134 = vunpack.c.l.b16 %v1758
    %v2135 = vunpack.c.h.b16 %v1758
    %v2136 = vunpack.c.l.b16 %v1759
    %v2137 = vunpack.c.h.b16 %v1759
    %v2138 = vunpack.c.l.b16 %v1760
    %v2139 = vunpack.c.h.b16 %v1760
    %v2140 = vunpack.c.l.b16 %v1761
    %v2141 = vunpack.c.h.b16 %v1761
    %v2142 = vunpack.c.l.b16 %v1762
    %v2143 = vunpack.c.h.b16 %v1762
    %v2144 = vunpack.c.l.b16 %v1763
    %v2145 = vunpack.c.h.b16 %v1763
    %v2146 = vunpack.c.l.b16 %v1764
    %v2147 = vunpack.c.h.b16 %v1764
    %v2148 = vunpack.c.l.b16 %v1765
    %v2149 = vunpack.c.h.b16 %v1765
    %v2150 = vunpack.c.l.b16 %v1766
    %v2151 = vunpack.c.h.b16 %v1766
    %v2152 = vunpack.c.l.b16 %v1767
    %v2153 = vunpack.c.h.b16 %v1767
    %v2154 = vunpack.c.l.b16 %v1768
    %v2155 = vunpack.c.h.b16 %v1768
    %v2156 = vunpack.c.l.b16 %v1769
    %v2157 = vunpack.c.h.b16 %v1769
    %v2158 = vunpack.c.l.b16 %v1770
    %v2159 = vunpack.c.h.b16 %v1770
    %v2160 = vunpack.c.l.b16 %v1771
    %v2161 = vunpack.c.h.b16 %v1771
    %v2162 = vunpack.c.l.b16 %v1772
    %v2163 = vunpack.c.h.b16 %v1772
    %v2164 = vunpack.c.l.b16 %v1773
    %v2165 = vunpack.c.h.b16 %v1773
    %v2166 = vunpack.c.l.b16 %v1774
    %v2167 = vunpack.c.h.b16 %v1774
    %v2168 = vunpack.c.l.b16 %v1775
    %v2169 = vunpack.c.h.b16 %v1775
    %v2170 = vunpack.c.l.b16 %v1776
    %v2171 = vunpack.c.h.b16 %v1776
    %v2172 = vunpack.c.l.b16 %v1777
    %v2173 = vunpack.c.h.b16 %v1777
    %v2174 = vunpack.c.l.b16 %v1778
    %v2175 = vunpack.c.h.b16 %v1778
    %v2176 = vunpack.c.l.b16 %v1779
    %v2177 = vunpack.c.h.b16 %v1779
    %v2178 = vunpack.c.l.b16 %v1780
    %v2179 = vunpack.c.h.b16 %v1780
    %v2180 = vunpack.c.l.b16 %v1781
    %v2181 = vunpack.c.h.b16 %v1781
    %v2182 = vunpack.c.l.b16 %v1782
    %v2183 = vunpack.c.h.b16 %v1782
    %v2184 = vunpack.c.l.b16 %v1783
    %v2185 = vunpack.c.h.b16 %v1783
    %v2186 = vunpack.c.l.b16 %v1784
    %v2187 = vunpack.c.h.b16 %v1784
    %v2188 = vunpack.c.l.b16 %v1785
    %v2189 = vunpack.c.h.b16 %v1785
    %v2190 = vunpack.c.l.b16 %v1786
    %v2191 = vunpack.c.h.b16 %v1786
    %v2192 = vunpack.c.l.b16 %v1787
    %v2193 = vunpack.c.h.b16 %v1787
    %v2194 = vpack.c.b16 %v1942, %v1938
    %v2195 = vpack.c.b16 %v1943, %v1939
    %v2196 = vpack.c.b16 %v1944, %v1940
    %v2197 = vpack.c.b16 %v1945, %v1941
    %v2198 = vpack.c.b16 %v1950, %v1946
    %v2199 = vpack.c.b16 %v1951, %v1947
    %v2200 = vpack.c.b16 %v1952, %v1948
    %v2201 = vpack.c.b16 %v1953, %v1949
    %v2202 = vpack.c.b16 %v1958, %v1954
    %v2203 = vpack.c.b16 %v1959, %v1955
    %v2204 = vpack.c.b16 %v1960, %v1956
    %v2205 = vpack.c.b16 %v1961, %v1957
    %v2206 = vpack.c.b16 %v1966, %v1962
    %v2207 = vpack.c.b16 %v1967, %v1963
    %v2208 = vpack.c.b16 %v1968, %v1964
    %v2209 = vpack.c.b16 %v1969, %v1965
    %v2210 = vpack.c.b16 %v1974, %v1970
    %v2211 = vpack.c.b16 %v1975, %v1971
    %v2212 = vpack.c.b16 %v1976, %v1972
    %v2213 = vpack.c.b16 %v1977, %v1973
    %v2214 = vpack.c.b16 %v1982, %v1978
    %v2215 = vpack.c.b16 %v1983, %v1979
    %v2216 = vpack.c.b16 %v1984, %v1980
    %v2217 = vpack.c.b16 %v1985, %v1981
    %v2218 = vpack.c.b16 %v1990, %v1986
    %v2219 = vpack.c.b16 %v1991, %v1987
    %v2220 = vpack.c.b16 %v1992, %v1988
    %v2221 = vpack.c.b16 %v1993, %v1989
    %v2222 = vpack.c.b16 %v1998, %v1994
    %v2223 = vpack.c.b16 %v1999, %v1995
    %v2224 = vpack.c.b16 %v2000, %v1996
    %v2225 = vpack.c.b16 %v2001, %v1997
    %v2226 = vpack.c.b16 %v2006, %v2002
    %v2227 = vpack.c.b16 %v2007, %v2003
    %v2228 = vpack.c.b16 %v2008, %v2004
    %v2229 = vpack.c.b16 %v2009, %v2005
    %v2230 = vpack.c.b16 %v2014, %v2010
    %v2231 = vpack.c.b16 %v2015, %v2011
    %v2232 = vpack.c.b16 %v2016, %v2012
    %v2233 = vpack.c.b16 %v2017, %v2013
    %v2234 = vpack.c.b16 %v2022, %v2018
    %v2235 = vpack.c.b16 %v2023, %v2019
    %v2236 = vpack.c.b16 %v2024, %v2020
    %v2237 = vpack.c.b16 %v2025, %v2021
    %v2238 = vpack.c.b16 %v2030, %v2026
    %v2239 = vpack.c.b16 %v2031, %v2027
    %v2240 = vpack.c.b16 %v2032, %v2028
    %v2241 = vpack.c.b16 %v2033, %v2029
    %v2242 = vpack.c.b16 %v2038, %v2034
    %v2243 = vpack.c.b16 %v2039, %v2035
    %v2244 = vpack.c.b16 %v2040, %v2036
    %v2245 = vpack.c.b16 %v2041, %v2037
    %v2246 = vpack.c.b16 %v2046, %v2042
    %v2247 = vpack.c.b16 %v2047, %v2043
    %v2248 = vpack.c.b16 %v2048, %v2044
    %v2249 = vpack.c.b16 %v2049, %v2045
    %v2250 = vpack.c.b16 %v2054, %v2050
    %v2251 = vpack.c.b16 %v2055, %v2051
    %v2252 = vpack.c.b16 %v2056, %v2052
    %v2253 = vpack.c.b16 %v2057, %v2053
    %v2254 = vpack.c.b16 %v2062, %v2058
    %v2255 = vpack.c.b16 %v2063, %v2059
    %v2256 = vpack.c.b16 %v2064, %v2060
    %v2257 = vpack.c.b16 %v2065, %v2061
    %v2258 = vpack.c.b16 %v2070, %v2066
    %v2259 = vpack.c.b16 %v2071, %v2067
    %v2260 = vpack.c.b16 %v2072, %v2068
    %v2261 = vpack.c.b16 %v2073, %v2069
    %v2262 = vpack.c.b16 %v2078, %v2074
    %v2263 = vpack.c.b16 %v2079, %v2075
    %v2264 = vpack.c.b16 %v2080, %v2076
    %v2265 = vpack.c.b16 %v2081, %v2077
    %v2266 = vpack.c.b16 %v2086, %v2082
    %v2267 = vpack.c.b16 %v2087, %v2083
    %v2268 = vpack.c.b16 %v2088, %v2084
    %v2269 = vpack.c.b16 %v2089, %v2085
    %v2270 = vpack.c.b16 %v2094, %v2090
    %v2271 = vpack.c.b16 %v2095, %v2091
    %v2272 = vpack.c.b16 %v2096, %v2092
    %v2273 = vpack.c.b16 %v2097, %v2093
    %v2274 = vpack.c.b16 %v2102, %v2098
    %v2275 = vpack.c.b16 %v2103, %v2099
    %v2276 = vpack.c.b16 %v2104, %v2100
    %v2277 = vpack.c.b16 %v2105, %v2101
    %v2278 = vpack.c.b16 %v2110, %v2106
    %v2279 = vpack.c.b16 %v2111, %v2107
    %v2280 = vpack.c.b16 %v2112, %v2108
    %v2281 = vpack.c.b16 %v2113, %v2109
    %v2282 = vpack.c.b16 %v2118, %v2114
    %v2283 = vpack.c.b16 %v2119, %v2115
    %v2284 = vpack.c.b16 %v2120, %v2116
    %v2285 = vpack.c.b16 %v2121, %v2117
    %v2286 = vpack.c.b16 %v2126, %v2122
    %v2287 = vpack.c.b16 %v2127, %v2123
    %v2288 = vpack.c.b16 %v2128, %v2124
    %v2289 = vpack.c.b16 %v2129, %v2125
    %v2290 = vpack.c.b16 %v2134, %v2130
    %v2291 = vpack.c.b16 %v2135, %v2131
    %v2292 = vpack.c.b16 %v2136, %v2132
    %v2293 = vpack.c.b16 %v2137, %v2133
    %v2294 = vpack.c.b16 %v2142, %v2138
    %v2295 = vpack.c.b16 %v2143, %v2139
    %v2296 = vpack.c.b16 %v2144, %v2140
    %v2297 = vpack.c.b16 %v2145, %v2141
    %v2298 = vpack.c.b16 %v2150, %v2146
    %v2299 = vpack.c.b16 %v2151, %v2147
    %v2300 = vpack.c.b16 %v2152, %v2148
    %v2301 = vpack.c.b16 %v2153, %v2149
    %v2302 = vpack.c.b16 %v2158, %v2154
    %v2303 = vpack.c.b16 %v2159, %v2155
    %v2304 = vpack.c.b16 %v2160, %v2156
    %v2305 = vpack.c.b16 %v2161, %v2157
    %v2306 = vpack.c.b16 %v2166, %v2162
    %v2307 = vpack.c.b16 %v2167, %v2163
    %v2308 = vpack.c.b16 %v2168, %v2164
    %v2309 = vpack.c.b16 %v2169, %v2165
    %v2310 = vpack.c.b16 %v2174, %v2170
    %v2311 = vpack.c.b16 %v2175, %v2171
    %v2312 = vpack.c.b16 %v2176, %v2172
    %v2313 = vpack.c.b16 %v2177, %v2173
    %v2314 = vpack.c.b16 %v2182, %v2178
    %v2315 = vpack.c.b16 %v2183, %v2179
    %v2316 = vpack.c.b16 %v2184, %v2180
    %v2317 = vpack.c.b16 %v2185, %v2181
    %v2318 = vpack.c.b16 %v2190, %v2186
    %v2319 = vpack.c.b16 %v2191, %v2187
    %v2320 = vpack.c.b16 %v2192, %v2188
    %v2321 = vpack.c.b16 %v2193, %v2189
    %2450 = vmatprep.subr.bf16.mxu0 %v2223
    %2451 = vmatpush1.bf16.msra.mxu0 %v2222
    %2452 = vmatprep.subr.bf16.mxu0 %v2219
    %2453 = vmatpush1.bf16.msra.mxu0 %v2218
    %2454 = vmatprep.subr.bf16.mxu0 %v2215
    %2455 = vmatpush1.bf16.msra.mxu0 %v2214
    %2456 = vmatprep.subr.bf16.mxu0 %v2211
    %2457 = vmatpush1.bf16.msra.mxu0 %v2210
    %2458 = vmatprep.subr.bf16.mxu0 %v2207
    %2459 = vmatpush1.bf16.msra.mxu0 %v2206
    %2460 = vmatprep.subr.bf16.mxu0 %v2203
    %2461 = vmatpush1.bf16.msra.mxu0 %v2202
    %2462 = vmatprep.subr.bf16.mxu0 %v2199
    %2463 = vmatpush1.bf16.msra.mxu0 %v2198
    %2464 = vmatprep.subr.bf16.mxu0 %v2195
    %2465 = vmatpush1.bf16.msra.mxu0 %v2194
    %2466 = vmatprep.subr.bf16.mxu0 %v2255
    %2467 = vmatpush2.bf16.msra.mxu0 %v2254
    %2468 = vmatprep.subr.bf16.mxu0 %v2251
    %2469 = vmatpush2.bf16.msra.mxu0 %v2250
    %2470 = vmatprep.subr.bf16.mxu0 %v2247
    %2471 = vmatpush2.bf16.msra.mxu0 %v2246
    %2472 = vmatprep.subr.bf16.mxu0 %v2243
    %2473 = vmatpush2.bf16.msra.mxu0 %v2242
    %2474 = vmatprep.subr.bf16.mxu0 %v2239
    %2475 = vmatpush2.bf16.msra.mxu0 %v2238
    %2476 = vmatprep.subr.bf16.mxu0 %v2235
    %2477 = vmatpush2.bf16.msra.mxu0 %v2234
    %2478 = vmatprep.subr.bf16.mxu0 %v2231
    %2479 = vmatpush2.bf16.msra.mxu0 %v2230
    %2480 = vmatprep.subr.bf16.mxu0 %v2227
    %2481 = vmatpush2.bf16.msra.mxu0 %v2226
    %2482 = vmatprep.mubr.bf16.mxu0 %v1657
    %2483 = vmatmul.mubr.bf16.gmra.mxu0 %v1656
    %v2484 = vpop.f32.mrf.mxu0
    %v2485 = vadd.f32 %v1793, %v2484
    %v2486 = vpop.f32.mrf.mxu0
    %v2487 = vadd.f32 %v1797, %v2486
    %v2488 = vpop.f32.mrf.mxu0
    %v2489 = vpop.f32.mrf.mxu0
    %2490 = vdwg.mxu0
    %2491 = vmatprep.subr.bf16.mxu0 %v2287
    %2492 = vmatpush1.bf16.msra.mxu0 %v2286
    %2493 = vmatprep.subr.bf16.mxu0 %v2283
    %2494 = vmatpush1.bf16.msra.mxu0 %v2282
    %2495 = vmatprep.subr.bf16.mxu0 %v2279
    %2496 = vmatpush1.bf16.msra.mxu0 %v2278
    %2497 = vmatprep.subr.bf16.mxu0 %v2275
    %2498 = vmatpush1.bf16.msra.mxu0 %v2274
    %2499 = vmatprep.subr.bf16.mxu0 %v2271
    %2500 = vmatpush1.bf16.msra.mxu0 %v2270
    %2501 = vmatprep.subr.bf16.mxu0 %v2267
    %2502 = vmatpush1.bf16.msra.mxu0 %v2266
    %2503 = vmatprep.subr.bf16.mxu0 %v2263
    %2504 = vmatpush1.bf16.msra.mxu0 %v2262
    %2505 = vmatprep.subr.bf16.mxu0 %v2259
    %2506 = vmatpush1.bf16.msra.mxu0 %v2258
    %2507 = vmatprep.subr.bf16.mxu0 %v2319
    %2508 = vmatpush2.bf16.msra.mxu0 %v2318
    %2509 = vmatprep.subr.bf16.mxu0 %v2315
    %2510 = vmatpush2.bf16.msra.mxu0 %v2314
    %2511 = vmatprep.subr.bf16.mxu0 %v2311
    %2512 = vmatpush2.bf16.msra.mxu0 %v2310
    %2513 = vmatprep.subr.bf16.mxu0 %v2307
    %2514 = vmatpush2.bf16.msra.mxu0 %v2306
    %2515 = vmatprep.subr.bf16.mxu0 %v2303
    %2516 = vmatpush2.bf16.msra.mxu0 %v2302
    %2517 = vmatprep.subr.bf16.mxu0 %v2299
    %2518 = vmatpush2.bf16.msra.mxu0 %v2298
    %2519 = vmatprep.subr.bf16.mxu0 %v2295
    %2520 = vmatpush2.bf16.msra.mxu0 %v2294
    %2521 = vmatprep.subr.bf16.mxu0 %v2291
    %2522 = vmatpush2.bf16.msra.mxu0 %v2290
    %2523 = vmatprep.mubr.bf16.mxu0 %v1659
    %2524 = vmatmul.mubr.bf16.gmra.mxu0 %v1658
    %v2525 = vpop.f32.mrf.mxu0
    %v2526 = vadd.f32 %v2485, %v2525
    %v2527 = vpop.f32.mrf.mxu0
    %v2528 = vadd.f32 %v2487, %v2527
    %v2529 = vpop.f32.mrf.mxu0
    %v2530 = vpop.f32.mrf.mxu0
    %2531 = vdwg.mxu0
    %2532 = vmatprep.subr.bf16.mxu0 %v2225
    %2533 = vmatpush1.bf16.msra.mxu0 %v2224
    %2534 = vmatprep.subr.bf16.mxu0 %v2221
    %2535 = vmatpush1.bf16.msra.mxu0 %v2220
    %2536 = vmatprep.subr.bf16.mxu0 %v2217
    %2537 = vmatpush1.bf16.msra.mxu0 %v2216
    %2538 = vmatprep.subr.bf16.mxu0 %v2213
    %2539 = vmatpush1.bf16.msra.mxu0 %v2212
    %2540 = vmatprep.subr.bf16.mxu0 %v2209
    %2541 = vmatpush1.bf16.msra.mxu0 %v2208
    %2542 = vmatprep.subr.bf16.mxu0 %v2205
    %2543 = vmatpush1.bf16.msra.mxu0 %v2204
    %2544 = vmatprep.subr.bf16.mxu0 %v2201
    %2545 = vmatpush1.bf16.msra.mxu0 %v2200
    %2546 = vmatprep.subr.bf16.mxu0 %v2197
    %2547 = vmatpush1.bf16.msra.mxu0 %v2196
    %2548 = vmatprep.subr.bf16.mxu0 %v2257
    %2549 = vmatpush2.bf16.msra.mxu0 %v2256
    %2550 = vmatprep.subr.bf16.mxu0 %v2253
    %2551 = vmatpush2.bf16.msra.mxu0 %v2252
    %2552 = vmatprep.subr.bf16.mxu0 %v2249
    %2553 = vmatpush2.bf16.msra.mxu0 %v2248
    %2554 = vmatprep.subr.bf16.mxu0 %v2245
    %2555 = vmatpush2.bf16.msra.mxu0 %v2244
    %2556 = vmatprep.subr.bf16.mxu0 %v2241
    %2557 = vmatpush2.bf16.msra.mxu0 %v2240
    %2558 = vmatprep.subr.bf16.mxu0 %v2237
    %2559 = vmatpush2.bf16.msra.mxu0 %v2236
    %2560 = vmatprep.subr.bf16.mxu0 %v2233
    %2561 = vmatpush2.bf16.msra.mxu0 %v2232
    %2562 = vmatprep.subr.bf16.mxu0 %v2229
    %2563 = vmatpush2.bf16.msra.mxu0 %v2228
    %2564 = vmatprep.mubr.bf16.mxu0 %v1657
    %2565 = vmatmul.mubr.bf16.gmra.mxu0 %v1656
    %v2566 = vpop.f32.mrf.mxu0
    %v2567 = vadd.f32 %v1801, %v2566
    %v2568 = vpop.f32.mrf.mxu0
    %v2569 = vadd.f32 %v1805, %v2568
    %v2570 = vpop.f32.mrf.mxu0
    %v2571 = vpop.f32.mrf.mxu0
    %2572 = vdwg.mxu0
    %2573 = vmatprep.subr.bf16.mxu0 %v2289
    %2574 = vmatpush1.bf16.msra.mxu0 %v2288
    %2575 = vmatprep.subr.bf16.mxu0 %v2285
    %2576 = vmatpush1.bf16.msra.mxu0 %v2284
    %2577 = vmatprep.subr.bf16.mxu0 %v2281
    %2578 = vmatpush1.bf16.msra.mxu0 %v2280
    %2579 = vmatprep.subr.bf16.mxu0 %v2277
    %2580 = vmatpush1.bf16.msra.mxu0 %v2276
    %2581 = vmatprep.subr.bf16.mxu0 %v2273
    %2582 = vmatpush1.bf16.msra.mxu0 %v2272
    %2583 = vmatprep.subr.bf16.mxu0 %v2269
    %2584 = vmatpush1.bf16.msra.mxu0 %v2268
    %2585 = vmatprep.subr.bf16.mxu0 %v2265
    %2586 = vmatpush1.bf16.msra.mxu0 %v2264
    %2587 = vmatprep.subr.bf16.mxu0 %v2261
    %2588 = vmatpush1.bf16.msra.mxu0 %v2260
    %2589 = vmatprep.subr.bf16.mxu0 %v2321
    %2590 = vmatpush2.bf16.msra.mxu0 %v2320
    %2591 = vmatprep.subr.bf16.mxu0 %v2317
    %2592 = vmatpush2.bf16.msra.mxu0 %v2316
    %2593 = vmatprep.subr.bf16.mxu0 %v2313
    %2594 = vmatpush2.bf16.msra.mxu0 %v2312
    %2595 = vmatprep.subr.bf16.mxu0 %v2309
    %2596 = vmatpush2.bf16.msra.mxu0 %v2308
    %2597 = vmatprep.subr.bf16.mxu0 %v2305
    %2598 = vmatpush2.bf16.msra.mxu0 %v2304
    %2599 = vmatprep.subr.bf16.mxu0 %v2301
    %2600 = vmatpush2.bf16.msra.mxu0 %v2300
    %2601 = vmatprep.subr.bf16.mxu0 %v2297
    %2602 = vmatpush2.bf16.msra.mxu0 %v2296
    %2603 = vmatprep.subr.bf16.mxu0 %v2293
    %2604 = vmatpush2.bf16.msra.mxu0 %v2292
    %2605 = vmatprep.mubr.bf16.mxu0 %v1659
    %2606 = vmatmul.mubr.bf16.gmra.mxu0 %v1658
    %v2607 = vpop.f32.mrf.mxu0
    %v2608 = vadd.f32 %v2567, %v2607
    %v2609 = vpop.f32.mrf.mxu0
    %v2610 = vadd.f32 %v2569, %v2609
    %v2611 = vpop.f32.mrf.mxu0
    %v2612 = vpop.f32.mrf.mxu0
    %2613 = vdwg.mxu0
    %vm2614 = vcmp.gt.f32.partialorder %v2526, 0.0
    %vm2615 = vcmp.gt.f32.partialorder %v2528, 0.0
    %vm2616 = vcmp.gt.f32.partialorder %v2608, 0.0
    %vm2617 = vcmp.gt.f32.partialorder %v2610, 0.0
    %v2618 = vmul.f32 %v2526, 0.1
    %v2619 = vmul.f32 %v2528, 0.1
    %v2620 = vmul.f32 %v2608, 0.1
    %v2621 = vmul.f32 %v2610, 0.1
    %v2622 = vsel %vm2614, %v2526, %v2618
    %v2623 = vsel %vm2615, %v2528, %v2619
    %v2624 = vsel %vm2616, %v2608, %v2620
    %v2625 = vsel %vm2617, %v2610, %v2621
    %v2626 = vpack.c.bf16 %v2622, %v2622
    %v2627 = vpack.c.bf16 %v2623, %v2623
    %v2628 = vpack.c.bf16 %v2624, %v2624
    %v2629 = vpack.c.bf16 %v2625, %v2625
    %v2630 = vld [vmem:[#allocation11] sm:$0xff]
    %v2631 = vld [vmem:[#allocation11 + $0x8] sm:$0xff]
    %v2632 = vld [vmem:[#allocation11 + $0x10] sm:$0xff]
    %v2633 = vld [vmem:[#allocation11 + $0x18] sm:$0xff]
    %v2634 = vld [vmem:[#allocation11 + $0x20] sm:$0xff]
    %v2635 = vld [vmem:[#allocation11 + $0x28] sm:$0xff]
    %v2636 = vld [vmem:[#allocation11 + $0x30] sm:$0xff]
    %v2637 = vld [vmem:[#allocation11 + $0x38] sm:$0xff]
    %v2638 = vld [vmem:[#allocation11 + $0x40] sm:$0xff]
    %v2639 = vld [vmem:[#allocation11 + $0x48] sm:$0xff]
    %v2640 = vld [vmem:[#allocation11 + $0x50] sm:$0xff]
    %v2641 = vld [vmem:[#allocation11 + $0x58] sm:$0xff]
    %v2642 = vld [vmem:[#allocation11 + $0x60] sm:$0xff]
    %v2643 = vld [vmem:[#allocation11 + $0x68] sm:$0xff]
    %v2644 = vld [vmem:[#allocation11 + $0x70] sm:$0xff]
    %v2645 = vld [vmem:[#allocation11 + $0x78] sm:$0xff]
    %v2646 = vld [vmem:[#allocation11 + $0x80] sm:$0xff]
    %v2647 = vld [vmem:[#allocation11 + $0x88] sm:$0xff]
    %v2648 = vld [vmem:[#allocation11 + $0x90] sm:$0xff]
    %v2649 = vld [vmem:[#allocation11 + $0x98] sm:$0xff]
    %v2650 = vld [vmem:[#allocation11 + $0xa0] sm:$0xff]
    %v2651 = vld [vmem:[#allocation11 + $0xa8] sm:$0xff]
    %v2652 = vld [vmem:[#allocation11 + $0xb0] sm:$0xff]
    %v2653 = vld [vmem:[#allocation11 + $0xb8] sm:$0xff]
    %v2654 = vld [vmem:[#allocation11 + $0xc0] sm:$0xff]
    %v2655 = vld [vmem:[#allocation11 + $0xc8] sm:$0xff]
    %v2656 = vld [vmem:[#allocation11 + $0xd0] sm:$0xff]
    %v2657 = vld [vmem:[#allocation11 + $0xd8] sm:$0xff]
    %v2658 = vld [vmem:[#allocation11 + $0xe0] sm:$0xff]
    %v2659 = vld [vmem:[#allocation11 + $0xe8] sm:$0xff]
    %v2660 = vld [vmem:[#allocation11 + $0xf0] sm:$0xff]
    %v2661 = vld [vmem:[#allocation11 + $0xf8] sm:$0xff]
    %v2662 = vld [vmem:[#allocation11 + $0x100] sm:$0xff]
    %v2663 = vld [vmem:[#allocation11 + $0x108] sm:$0xff]
    %v2664 = vld [vmem:[#allocation11 + $0x110] sm:$0xff]
    %v2665 = vld [vmem:[#allocation11 + $0x118] sm:$0xff]
    %v2666 = vld [vmem:[#allocation11 + $0x120] sm:$0xff]
    %v2667 = vld [vmem:[#allocation11 + $0x128] sm:$0xff]
    %v2668 = vld [vmem:[#allocation11 + $0x130] sm:$0xff]
    %v2669 = vld [vmem:[#allocation11 + $0x138] sm:$0xff]
    %v2670 = vld [vmem:[#allocation11 + $0x140] sm:$0xff]
    %v2671 = vld [vmem:[#allocation11 + $0x148] sm:$0xff]
    %v2672 = vld [vmem:[#allocation11 + $0x150] sm:$0xff]
    %v2673 = vld [vmem:[#allocation11 + $0x158] sm:$0xff]
    %v2674 = vld [vmem:[#allocation11 + $0x160] sm:$0xff]
    %v2675 = vld [vmem:[#allocation11 + $0x168] sm:$0xff]
    %v2676 = vld [vmem:[#allocation11 + $0x170] sm:$0xff]
    %v2677 = vld [vmem:[#allocation11 + $0x178] sm:$0xff]
    %v2678 = vld [vmem:[#allocation11 + $0x180] sm:$0xff]
    %v2679 = vld [vmem:[#allocation11 + $0x188] sm:$0xff]
    %v2680 = vld [vmem:[#allocation11 + $0x190] sm:$0xff]
    %v2681 = vld [vmem:[#allocation11 + $0x198] sm:$0xff]
    %v2682 = vld [vmem:[#allocation11 + $0x1a0] sm:$0xff]
    %v2683 = vld [vmem:[#allocation11 + $0x1a8] sm:$0xff]
    %v2684 = vld [vmem:[#allocation11 + $0x1b0] sm:$0xff]
    %v2685 = vld [vmem:[#allocation11 + $0x1b8] sm:$0xff]
    %v2686 = vld [vmem:[#allocation11 + $0x1c0] sm:$0xff]
    %v2687 = vld [vmem:[#allocation11 + $0x1c8] sm:$0xff]
    %v2688 = vld [vmem:[#allocation11 + $0x1d0] sm:$0xff]
    %v2689 = vld [vmem:[#allocation11 + $0x1d8] sm:$0xff]
    %v2690 = vld [vmem:[#allocation11 + $0x1e0] sm:$0xff]
    %v2691 = vld [vmem:[#allocation11 + $0x1e8] sm:$0xff]
    %v2692 = vld [vmem:[#allocation11 + $0x1f0] sm:$0xff]
    %v2693 = vld [vmem:[#allocation11 + $0x1f8] sm:$0xff]
    %v2694 = vld [vmem:[#allocation11 + $0x200] sm:$0xff]
    %v2695 = vld [vmem:[#allocation11 + $0x208] sm:$0xff]
    %v2696 = vld [vmem:[#allocation11 + $0x210] sm:$0xff]
    %v2697 = vld [vmem:[#allocation11 + $0x218] sm:$0xff]
    %v2698 = vld [vmem:[#allocation11 + $0x220] sm:$0xff]
    %v2699 = vld [vmem:[#allocation11 + $0x228] sm:$0xff]
    %v2700 = vld [vmem:[#allocation11 + $0x230] sm:$0xff]
    %v2701 = vld [vmem:[#allocation11 + $0x238] sm:$0xff]
    %v2702 = vld [vmem:[#allocation11 + $0x240] sm:$0xff]
    %v2703 = vld [vmem:[#allocation11 + $0x248] sm:$0xff]
    %v2704 = vld [vmem:[#allocation11 + $0x250] sm:$0xff]
    %v2705 = vld [vmem:[#allocation11 + $0x258] sm:$0xff]
    %v2706 = vld [vmem:[#allocation11 + $0x260] sm:$0xff]
    %v2707 = vld [vmem:[#allocation11 + $0x268] sm:$0xff]
    %v2708 = vld [vmem:[#allocation11 + $0x270] sm:$0xff]
    %v2709 = vld [vmem:[#allocation11 + $0x278] sm:$0xff]
    %v2710 = vld [vmem:[#allocation11 + $0x280] sm:$0xff]
    %v2711 = vld [vmem:[#allocation11 + $0x288] sm:$0xff]
    %v2712 = vld [vmem:[#allocation11 + $0x290] sm:$0xff]
    %v2713 = vld [vmem:[#allocation11 + $0x298] sm:$0xff]
    %v2714 = vld [vmem:[#allocation11 + $0x2a0] sm:$0xff]
    %v2715 = vld [vmem:[#allocation11 + $0x2a8] sm:$0xff]
    %v2716 = vld [vmem:[#allocation11 + $0x2b0] sm:$0xff]
    %v2717 = vld [vmem:[#allocation11 + $0x2b8] sm:$0xff]
    %v2718 = vld [vmem:[#allocation11 + $0x2c0] sm:$0xff]
    %v2719 = vld [vmem:[#allocation11 + $0x2c8] sm:$0xff]
    %v2720 = vld [vmem:[#allocation11 + $0x2d0] sm:$0xff]
    %v2721 = vld [vmem:[#allocation11 + $0x2d8] sm:$0xff]
    %v2722 = vld [vmem:[#allocation11 + $0x2e0] sm:$0xff]
    %v2723 = vld [vmem:[#allocation11 + $0x2e8] sm:$0xff]
    %v2724 = vld [vmem:[#allocation11 + $0x2f0] sm:$0xff]
    %v2725 = vld [vmem:[#allocation11 + $0x2f8] sm:$0xff]
    %v2726 = vld [vmem:[#allocation11 + $0x300] sm:$0xff]
    %v2727 = vld [vmem:[#allocation11 + $0x308] sm:$0xff]
    %v2728 = vld [vmem:[#allocation11 + $0x310] sm:$0xff]
    %v2729 = vld [vmem:[#allocation11 + $0x318] sm:$0xff]
    %v2730 = vld [vmem:[#allocation11 + $0x320] sm:$0xff]
    %v2731 = vld [vmem:[#allocation11 + $0x328] sm:$0xff]
    %v2732 = vld [vmem:[#allocation11 + $0x330] sm:$0xff]
    %v2733 = vld [vmem:[#allocation11 + $0x338] sm:$0xff]
    %v2734 = vld [vmem:[#allocation11 + $0x340] sm:$0xff]
    %v2735 = vld [vmem:[#allocation11 + $0x348] sm:$0xff]
    %v2736 = vld [vmem:[#allocation11 + $0x350] sm:$0xff]
    %v2737 = vld [vmem:[#allocation11 + $0x358] sm:$0xff]
    %v2738 = vld [vmem:[#allocation11 + $0x360] sm:$0xff]
    %v2739 = vld [vmem:[#allocation11 + $0x368] sm:$0xff]
    %v2740 = vld [vmem:[#allocation11 + $0x370] sm:$0xff]
    %v2741 = vld [vmem:[#allocation11 + $0x378] sm:$0xff]
    %v2742 = vld [vmem:[#allocation11 + $0x380] sm:$0xff]
    %v2743 = vld [vmem:[#allocation11 + $0x388] sm:$0xff]
    %v2744 = vld [vmem:[#allocation11 + $0x390] sm:$0xff]
    %v2745 = vld [vmem:[#allocation11 + $0x398] sm:$0xff]
    %v2746 = vld [vmem:[#allocation11 + $0x3a0] sm:$0xff]
    %v2747 = vld [vmem:[#allocation11 + $0x3a8] sm:$0xff]
    %v2748 = vld [vmem:[#allocation11 + $0x3b0] sm:$0xff]
    %v2749 = vld [vmem:[#allocation11 + $0x3b8] sm:$0xff]
    %v2750 = vld [vmem:[#allocation11 + $0x3c0] sm:$0xff]
    %v2751 = vld [vmem:[#allocation11 + $0x3c8] sm:$0xff]
    %v2752 = vld [vmem:[#allocation11 + $0x3d0] sm:$0xff]
    %v2753 = vld [vmem:[#allocation11 + $0x3d8] sm:$0xff]
    %v2754 = vld [vmem:[#allocation11 + $0x3e0] sm:$0xff]
    %v2755 = vld [vmem:[#allocation11 + $0x3e8] sm:$0xff]
    %v2756 = vld [vmem:[#allocation11 + $0x3f0] sm:$0xff]
    %v2757 = vld [vmem:[#allocation11 + $0x3f8] sm:$0xff]
    %v2758 = vld [vmem:[%s8] sm:$0xf]
    %v2760 = vlaneseq
    %v2761 = vshrl.u32 %v2760, 7
    %v2762 = vsub.s32 0, %v2761
    %v2763 = vrot.slane %v2758, %v2762
    %v2764 = vlaneseq
    %v2765 = vshrl.u32 %v2764, 7
    %v2766 = vsub.s32 1, %v2765
    %v2767 = vrot.slane %v2758, %v2766
    %v2768 = vlaneseq
    %v2769 = vshrl.u32 %v2768, 7
    %v2770 = vsub.s32 2, %v2769
    %v2771 = vrot.slane %v2758, %v2770
    %v2772 = vlaneseq
    %v2773 = vshrl.u32 %v2772, 7
    %v2774 = vsub.s32 3, %v2773
    %v2775 = vrot.slane %v2758, %v2774
    %v2908 = vunpack.c.l.b16 %v2630
    %v2909 = vunpack.c.h.b16 %v2630
    %v2910 = vunpack.c.l.b16 %v2631
    %v2911 = vunpack.c.h.b16 %v2631
    %v2912 = vunpack.c.l.b16 %v2632
    %v2913 = vunpack.c.h.b16 %v2632
    %v2914 = vunpack.c.l.b16 %v2633
    %v2915 = vunpack.c.h.b16 %v2633
    %v2916 = vunpack.c.l.b16 %v2634
    %v2917 = vunpack.c.h.b16 %v2634
    %v2918 = vunpack.c.l.b16 %v2635
    %v2919 = vunpack.c.h.b16 %v2635
    %v2920 = vunpack.c.l.b16 %v2636
    %v2921 = vunpack.c.h.b16 %v2636
    %v2922 = vunpack.c.l.b16 %v2637
    %v2923 = vunpack.c.h.b16 %v2637
    %v2924 = vunpack.c.l.b16 %v2638
    %v2925 = vunpack.c.h.b16 %v2638
    %v2926 = vunpack.c.l.b16 %v2639
    %v2927 = vunpack.c.h.b16 %v2639
    %v2928 = vunpack.c.l.b16 %v2640
    %v2929 = vunpack.c.h.b16 %v2640
    %v2930 = vunpack.c.l.b16 %v2641
    %v2931 = vunpack.c.h.b16 %v2641
    %v2932 = vunpack.c.l.b16 %v2642
    %v2933 = vunpack.c.h.b16 %v2642
    %v2934 = vunpack.c.l.b16 %v2643
    %v2935 = vunpack.c.h.b16 %v2643
    %v2936 = vunpack.c.l.b16 %v2644
    %v2937 = vunpack.c.h.b16 %v2644
    %v2938 = vunpack.c.l.b16 %v2645
    %v2939 = vunpack.c.h.b16 %v2645
    %v2940 = vunpack.c.l.b16 %v2646
    %v2941 = vunpack.c.h.b16 %v2646
    %v2942 = vunpack.c.l.b16 %v2647
    %v2943 = vunpack.c.h.b16 %v2647
    %v2944 = vunpack.c.l.b16 %v2648
    %v2945 = vunpack.c.h.b16 %v2648
    %v2946 = vunpack.c.l.b16 %v2649
    %v2947 = vunpack.c.h.b16 %v2649
    %v2948 = vunpack.c.l.b16 %v2650
    %v2949 = vunpack.c.h.b16 %v2650
    %v2950 = vunpack.c.l.b16 %v2651
    %v2951 = vunpack.c.h.b16 %v2651
    %v2952 = vunpack.c.l.b16 %v2652
    %v2953 = vunpack.c.h.b16 %v2652
    %v2954 = vunpack.c.l.b16 %v2653
    %v2955 = vunpack.c.h.b16 %v2653
    %v2956 = vunpack.c.l.b16 %v2654
    %v2957 = vunpack.c.h.b16 %v2654
    %v2958 = vunpack.c.l.b16 %v2655
    %v2959 = vunpack.c.h.b16 %v2655
    %v2960 = vunpack.c.l.b16 %v2656
    %v2961 = vunpack.c.h.b16 %v2656
    %v2962 = vunpack.c.l.b16 %v2657
    %v2963 = vunpack.c.h.b16 %v2657
    %v2964 = vunpack.c.l.b16 %v2658
    %v2965 = vunpack.c.h.b16 %v2658
    %v2966 = vunpack.c.l.b16 %v2659
    %v2967 = vunpack.c.h.b16 %v2659
    %v2968 = vunpack.c.l.b16 %v2660
    %v2969 = vunpack.c.h.b16 %v2660
    %v2970 = vunpack.c.l.b16 %v2661
    %v2971 = vunpack.c.h.b16 %v2661
    %v2972 = vunpack.c.l.b16 %v2662
    %v2973 = vunpack.c.h.b16 %v2662
    %v2974 = vunpack.c.l.b16 %v2663
    %v2975 = vunpack.c.h.b16 %v2663
    %v2976 = vunpack.c.l.b16 %v2664
    %v2977 = vunpack.c.h.b16 %v2664
    %v2978 = vunpack.c.l.b16 %v2665
    %v2979 = vunpack.c.h.b16 %v2665
    %v2980 = vunpack.c.l.b16 %v2666
    %v2981 = vunpack.c.h.b16 %v2666
    %v2982 = vunpack.c.l.b16 %v2667
    %v2983 = vunpack.c.h.b16 %v2667
    %v2984 = vunpack.c.l.b16 %v2668
    %v2985 = vunpack.c.h.b16 %v2668
    %v2986 = vunpack.c.l.b16 %v2669
    %v2987 = vunpack.c.h.b16 %v2669
    %v2988 = vunpack.c.l.b16 %v2670
    %v2989 = vunpack.c.h.b16 %v2670
    %v2990 = vunpack.c.l.b16 %v2671
    %v2991 = vunpack.c.h.b16 %v2671
    %v2992 = vunpack.c.l.b16 %v2672
    %v2993 = vunpack.c.h.b16 %v2672
    %v2994 = vunpack.c.l.b16 %v2673
    %v2995 = vunpack.c.h.b16 %v2673
    %v2996 = vunpack.c.l.b16 %v2674
    %v2997 = vunpack.c.h.b16 %v2674
    %v2998 = vunpack.c.l.b16 %v2675
    %v2999 = vunpack.c.h.b16 %v2675
    %v3000 = vunpack.c.l.b16 %v2676
    %v3001 = vunpack.c.h.b16 %v2676
    %v3002 = vunpack.c.l.b16 %v2677
    %v3003 = vunpack.c.h.b16 %v2677
    %v3004 = vunpack.c.l.b16 %v2678
    %v3005 = vunpack.c.h.b16 %v2678
    %v3006 = vunpack.c.l.b16 %v2679
    %v3007 = vunpack.c.h.b16 %v2679
    %v3008 = vunpack.c.l.b16 %v2680
    %v3009 = vunpack.c.h.b16 %v2680
    %v3010 = vunpack.c.l.b16 %v2681
    %v3011 = vunpack.c.h.b16 %v2681
    %v3012 = vunpack.c.l.b16 %v2682
    %v3013 = vunpack.c.h.b16 %v2682
    %v3014 = vunpack.c.l.b16 %v2683
    %v3015 = vunpack.c.h.b16 %v2683
    %v3016 = vunpack.c.l.b16 %v2684
    %v3017 = vunpack.c.h.b16 %v2684
    %v3018 = vunpack.c.l.b16 %v2685
    %v3019 = vunpack.c.h.b16 %v2685
    %v3020 = vunpack.c.l.b16 %v2686
    %v3021 = vunpack.c.h.b16 %v2686
    %v3022 = vunpack.c.l.b16 %v2687
    %v3023 = vunpack.c.h.b16 %v2687
    %v3024 = vunpack.c.l.b16 %v2688
    %v3025 = vunpack.c.h.b16 %v2688
    %v3026 = vunpack.c.l.b16 %v2689
    %v3027 = vunpack.c.h.b16 %v2689
    %v3028 = vunpack.c.l.b16 %v2690
    %v3029 = vunpack.c.h.b16 %v2690
    %v3030 = vunpack.c.l.b16 %v2691
    %v3031 = vunpack.c.h.b16 %v2691
    %v3032 = vunpack.c.l.b16 %v2692
    %v3033 = vunpack.c.h.b16 %v2692
    %v3034 = vunpack.c.l.b16 %v2693
    %v3035 = vunpack.c.h.b16 %v2693
    %v3036 = vunpack.c.l.b16 %v2694
    %v3037 = vunpack.c.h.b16 %v2694
    %v3038 = vunpack.c.l.b16 %v2695
    %v3039 = vunpack.c.h.b16 %v2695
    %v3040 = vunpack.c.l.b16 %v2696
    %v3041 = vunpack.c.h.b16 %v2696
    %v3042 = vunpack.c.l.b16 %v2697
    %v3043 = vunpack.c.h.b16 %v2697
    %v3044 = vunpack.c.l.b16 %v2698
    %v3045 = vunpack.c.h.b16 %v2698
    %v3046 = vunpack.c.l.b16 %v2699
    %v3047 = vunpack.c.h.b16 %v2699
    %v3048 = vunpack.c.l.b16 %v2700
    %v3049 = vunpack.c.h.b16 %v2700
    %v3050 = vunpack.c.l.b16 %v2701
    %v3051 = vunpack.c.h.b16 %v2701
    %v3052 = vunpack.c.l.b16 %v2702
    %v3053 = vunpack.c.h.b16 %v2702
    %v3054 = vunpack.c.l.b16 %v2703
    %v3055 = vunpack.c.h.b16 %v2703
    %v3056 = vunpack.c.l.b16 %v2704
    %v3057 = vunpack.c.h.b16 %v2704
    %v3058 = vunpack.c.l.b16 %v2705
    %v3059 = vunpack.c.h.b16 %v2705
    %v3060 = vunpack.c.l.b16 %v2706
    %v3061 = vunpack.c.h.b16 %v2706
    %v3062 = vunpack.c.l.b16 %v2707
    %v3063 = vunpack.c.h.b16 %v2707
    %v3064 = vunpack.c.l.b16 %v2708
    %v3065 = vunpack.c.h.b16 %v2708
    %v3066 = vunpack.c.l.b16 %v2709
    %v3067 = vunpack.c.h.b16 %v2709
    %v3068 = vunpack.c.l.b16 %v2710
    %v3069 = vunpack.c.h.b16 %v2710
    %v3070 = vunpack.c.l.b16 %v2711
    %v3071 = vunpack.c.h.b16 %v2711
    %v3072 = vunpack.c.l.b16 %v2712
    %v3073 = vunpack.c.h.b16 %v2712
    %v3074 = vunpack.c.l.b16 %v2713
    %v3075 = vunpack.c.h.b16 %v2713
    %v3076 = vunpack.c.l.b16 %v2714
    %v3077 = vunpack.c.h.b16 %v2714
    %v3078 = vunpack.c.l.b16 %v2715
    %v3079 = vunpack.c.h.b16 %v2715
    %v3080 = vunpack.c.l.b16 %v2716
    %v3081 = vunpack.c.h.b16 %v2716
    %v3082 = vunpack.c.l.b16 %v2717
    %v3083 = vunpack.c.h.b16 %v2717
    %v3084 = vunpack.c.l.b16 %v2718
    %v3085 = vunpack.c.h.b16 %v2718
    %v3086 = vunpack.c.l.b16 %v2719
    %v3087 = vunpack.c.h.b16 %v2719
    %v3088 = vunpack.c.l.b16 %v2720
    %v3089 = vunpack.c.h.b16 %v2720
    %v3090 = vunpack.c.l.b16 %v2721
    %v3091 = vunpack.c.h.b16 %v2721
    %v3092 = vunpack.c.l.b16 %v2722
    %v3093 = vunpack.c.h.b16 %v2722
    %v3094 = vunpack.c.l.b16 %v2723
    %v3095 = vunpack.c.h.b16 %v2723
    %v3096 = vunpack.c.l.b16 %v2724
    %v3097 = vunpack.c.h.b16 %v2724
    %v3098 = vunpack.c.l.b16 %v2725
    %v3099 = vunpack.c.h.b16 %v2725
    %v3100 = vunpack.c.l.b16 %v2726
    %v3101 = vunpack.c.h.b16 %v2726
    %v3102 = vunpack.c.l.b16 %v2727
    %v3103 = vunpack.c.h.b16 %v2727
    %v3104 = vunpack.c.l.b16 %v2728
    %v3105 = vunpack.c.h.b16 %v2728
    %v3106 = vunpack.c.l.b16 %v2729
    %v3107 = vunpack.c.h.b16 %v2729
    %v3108 = vunpack.c.l.b16 %v2730
    %v3109 = vunpack.c.h.b16 %v2730
    %v3110 = vunpack.c.l.b16 %v2731
    %v3111 = vunpack.c.h.b16 %v2731
    %v3112 = vunpack.c.l.b16 %v2732
    %v3113 = vunpack.c.h.b16 %v2732
    %v3114 = vunpack.c.l.b16 %v2733
    %v3115 = vunpack.c.h.b16 %v2733
    %v3116 = vunpack.c.l.b16 %v2734
    %v3117 = vunpack.c.h.b16 %v2734
    %v3118 = vunpack.c.l.b16 %v2735
    %v3119 = vunpack.c.h.b16 %v2735
    %v3120 = vunpack.c.l.b16 %v2736
    %v3121 = vunpack.c.h.b16 %v2736
    %v3122 = vunpack.c.l.b16 %v2737
    %v3123 = vunpack.c.h.b16 %v2737
    %v3124 = vunpack.c.l.b16 %v2738
    %v3125 = vunpack.c.h.b16 %v2738
    %v3126 = vunpack.c.l.b16 %v2739
    %v3127 = vunpack.c.h.b16 %v2739
    %v3128 = vunpack.c.l.b16 %v2740
    %v3129 = vunpack.c.h.b16 %v2740
    %v3130 = vunpack.c.l.b16 %v2741
    %v3131 = vunpack.c.h.b16 %v2741
    %v3132 = vunpack.c.l.b16 %v2742
    %v3133 = vunpack.c.h.b16 %v2742
    %v3134 = vunpack.c.l.b16 %v2743
    %v3135 = vunpack.c.h.b16 %v2743
    %v3136 = vunpack.c.l.b16 %v2744
    %v3137 = vunpack.c.h.b16 %v2744
    %v3138 = vunpack.c.l.b16 %v2745
    %v3139 = vunpack.c.h.b16 %v2745
    %v3140 = vunpack.c.l.b16 %v2746
    %v3141 = vunpack.c.h.b16 %v2746
    %v3142 = vunpack.c.l.b16 %v2747
    %v3143 = vunpack.c.h.b16 %v2747
    %v3144 = vunpack.c.l.b16 %v2748
    %v3145 = vunpack.c.h.b16 %v2748
    %v3146 = vunpack.c.l.b16 %v2749
    %v3147 = vunpack.c.h.b16 %v2749
    %v3148 = vunpack.c.l.b16 %v2750
    %v3149 = vunpack.c.h.b16 %v2750
    %v3150 = vunpack.c.l.b16 %v2751
    %v3151 = vunpack.c.h.b16 %v2751
    %v3152 = vunpack.c.l.b16 %v2752
    %v3153 = vunpack.c.h.b16 %v2752
    %v3154 = vunpack.c.l.b16 %v2753
    %v3155 = vunpack.c.h.b16 %v2753
    %v3156 = vunpack.c.l.b16 %v2754
    %v3157 = vunpack.c.h.b16 %v2754
    %v3158 = vunpack.c.l.b16 %v2755
    %v3159 = vunpack.c.h.b16 %v2755
    %v3160 = vunpack.c.l.b16 %v2756
    %v3161 = vunpack.c.h.b16 %v2756
    %v3162 = vunpack.c.l.b16 %v2757
    %v3163 = vunpack.c.h.b16 %v2757
    %v3164 = vpack.c.b16 %v2912, %v2908
    %v3165 = vpack.c.b16 %v2913, %v2909
    %v3166 = vpack.c.b16 %v2914, %v2910
    %v3167 = vpack.c.b16 %v2915, %v2911
    %v3168 = vpack.c.b16 %v2920, %v2916
    %v3169 = vpack.c.b16 %v2921, %v2917
    %v3170 = vpack.c.b16 %v2922, %v2918
    %v3171 = vpack.c.b16 %v2923, %v2919
    %v3172 = vpack.c.b16 %v2928, %v2924
    %v3173 = vpack.c.b16 %v2929, %v2925
    %v3174 = vpack.c.b16 %v2930, %v2926
    %v3175 = vpack.c.b16 %v2931, %v2927
    %v3176 = vpack.c.b16 %v2936, %v2932
    %v3177 = vpack.c.b16 %v2937, %v2933
    %v3178 = vpack.c.b16 %v2938, %v2934
    %v3179 = vpack.c.b16 %v2939, %v2935
    %v3180 = vpack.c.b16 %v2944, %v2940
    %v3181 = vpack.c.b16 %v2945, %v2941
    %v3182 = vpack.c.b16 %v2946, %v2942
    %v3183 = vpack.c.b16 %v2947, %v2943
    %v3184 = vpack.c.b16 %v2952, %v2948
    %v3185 = vpack.c.b16 %v2953, %v2949
    %v3186 = vpack.c.b16 %v2954, %v2950
    %v3187 = vpack.c.b16 %v2955, %v2951
    %v3188 = vpack.c.b16 %v2960, %v2956
    %v3189 = vpack.c.b16 %v2961, %v2957
    %v3190 = vpack.c.b16 %v2962, %v2958
    %v3191 = vpack.c.b16 %v2963, %v2959
    %v3192 = vpack.c.b16 %v2968, %v2964
    %v3193 = vpack.c.b16 %v2969, %v2965
    %v3194 = vpack.c.b16 %v2970, %v2966
    %v3195 = vpack.c.b16 %v2971, %v2967
    %v3196 = vpack.c.b16 %v2976, %v2972
    %v3197 = vpack.c.b16 %v2977, %v2973
    %v3198 = vpack.c.b16 %v2978, %v2974
    %v3199 = vpack.c.b16 %v2979, %v2975
    %v3200 = vpack.c.b16 %v2984, %v2980
    %v3201 = vpack.c.b16 %v2985, %v2981
    %v3202 = vpack.c.b16 %v2986, %v2982
    %v3203 = vpack.c.b16 %v2987, %v2983
    %v3204 = vpack.c.b16 %v2992, %v2988
    %v3205 = vpack.c.b16 %v2993, %v2989
    %v3206 = vpack.c.b16 %v2994, %v2990
    %v3207 = vpack.c.b16 %v2995, %v2991
    %v3208 = vpack.c.b16 %v3000, %v2996
    %v3209 = vpack.c.b16 %v3001, %v2997
    %v3210 = vpack.c.b16 %v3002, %v2998
    %v3211 = vpack.c.b16 %v3003, %v2999
    %v3212 = vpack.c.b16 %v3008, %v3004
    %v3213 = vpack.c.b16 %v3009, %v3005
    %v3214 = vpack.c.b16 %v3010, %v3006
    %v3215 = vpack.c.b16 %v3011, %v3007
    %v3216 = vpack.c.b16 %v3016, %v3012
    %v3217 = vpack.c.b16 %v3017, %v3013
    %v3218 = vpack.c.b16 %v3018, %v3014
    %v3219 = vpack.c.b16 %v3019, %v3015
    %v3220 = vpack.c.b16 %v3024, %v3020
    %v3221 = vpack.c.b16 %v3025, %v3021
    %v3222 = vpack.c.b16 %v3026, %v3022
    %v3223 = vpack.c.b16 %v3027, %v3023
    %v3224 = vpack.c.b16 %v3032, %v3028
    %v3225 = vpack.c.b16 %v3033, %v3029
    %v3226 = vpack.c.b16 %v3034, %v3030
    %v3227 = vpack.c.b16 %v3035, %v3031
    %v3228 = vpack.c.b16 %v3040, %v3036
    %v3229 = vpack.c.b16 %v3041, %v3037
    %v3230 = vpack.c.b16 %v3042, %v3038
    %v3231 = vpack.c.b16 %v3043, %v3039
    %v3232 = vpack.c.b16 %v3048, %v3044
    %v3233 = vpack.c.b16 %v3049, %v3045
    %v3234 = vpack.c.b16 %v3050, %v3046
    %v3235 = vpack.c.b16 %v3051, %v3047
    %v3236 = vpack.c.b16 %v3056, %v3052
    %v3237 = vpack.c.b16 %v3057, %v3053
    %v3238 = vpack.c.b16 %v3058, %v3054
    %v3239 = vpack.c.b16 %v3059, %v3055
    %v3240 = vpack.c.b16 %v3064, %v3060
    %v3241 = vpack.c.b16 %v3065, %v3061
    %v3242 = vpack.c.b16 %v3066, %v3062
    %v3243 = vpack.c.b16 %v3067, %v3063
    %v3244 = vpack.c.b16 %v3072, %v3068
    %v3245 = vpack.c.b16 %v3073, %v3069
    %v3246 = vpack.c.b16 %v3074, %v3070
    %v3247 = vpack.c.b16 %v3075, %v3071
    %v3248 = vpack.c.b16 %v3080, %v3076
    %v3249 = vpack.c.b16 %v3081, %v3077
    %v3250 = vpack.c.b16 %v3082, %v3078
    %v3251 = vpack.c.b16 %v3083, %v3079
    %v3252 = vpack.c.b16 %v3088, %v3084
    %v3253 = vpack.c.b16 %v3089, %v3085
    %v3254 = vpack.c.b16 %v3090, %v3086
    %v3255 = vpack.c.b16 %v3091, %v3087
    %v3256 = vpack.c.b16 %v3096, %v3092
    %v3257 = vpack.c.b16 %v3097, %v3093
    %v3258 = vpack.c.b16 %v3098, %v3094
    %v3259 = vpack.c.b16 %v3099, %v3095
    %v3260 = vpack.c.b16 %v3104, %v3100
    %v3261 = vpack.c.b16 %v3105, %v3101
    %v3262 = vpack.c.b16 %v3106, %v3102
    %v3263 = vpack.c.b16 %v3107, %v3103
    %v3264 = vpack.c.b16 %v3112, %v3108
    %v3265 = vpack.c.b16 %v3113, %v3109
    %v3266 = vpack.c.b16 %v3114, %v3110
    %v3267 = vpack.c.b16 %v3115, %v3111
    %v3268 = vpack.c.b16 %v3120, %v3116
    %v3269 = vpack.c.b16 %v3121, %v3117
    %v3270 = vpack.c.b16 %v3122, %v3118
    %v3271 = vpack.c.b16 %v3123, %v3119
    %v3272 = vpack.c.b16 %v3128, %v3124
    %v3273 = vpack.c.b16 %v3129, %v3125
    %v3274 = vpack.c.b16 %v3130, %v3126
    %v3275 = vpack.c.b16 %v3131, %v3127
    %v3276 = vpack.c.b16 %v3136, %v3132
    %v3277 = vpack.c.b16 %v3137, %v3133
    %v3278 = vpack.c.b16 %v3138, %v3134
    %v3279 = vpack.c.b16 %v3139, %v3135
    %v3280 = vpack.c.b16 %v3144, %v3140
    %v3281 = vpack.c.b16 %v3145, %v3141
    %v3282 = vpack.c.b16 %v3146, %v3142
    %v3283 = vpack.c.b16 %v3147, %v3143
    %v3284 = vpack.c.b16 %v3152, %v3148
    %v3285 = vpack.c.b16 %v3153, %v3149
    %v3286 = vpack.c.b16 %v3154, %v3150
    %v3287 = vpack.c.b16 %v3155, %v3151
    %v3288 = vpack.c.b16 %v3160, %v3156
    %v3289 = vpack.c.b16 %v3161, %v3157
    %v3290 = vpack.c.b16 %v3162, %v3158
    %v3291 = vpack.c.b16 %v3163, %v3159
    %3420 = vmatprep.subr.bf16.mxu0 %v3193
    %3421 = vmatpush1.bf16.msra.mxu0 %v3192
    %3422 = vmatprep.subr.bf16.mxu0 %v3189
    %3423 = vmatpush1.bf16.msra.mxu0 %v3188
    %3424 = vmatprep.subr.bf16.mxu0 %v3185
    %3425 = vmatpush1.bf16.msra.mxu0 %v3184
    %3426 = vmatprep.subr.bf16.mxu0 %v3181
    %3427 = vmatpush1.bf16.msra.mxu0 %v3180
    %3428 = vmatprep.subr.bf16.mxu0 %v3177
    %3429 = vmatpush1.bf16.msra.mxu0 %v3176
    %3430 = vmatprep.subr.bf16.mxu0 %v3173
    %3431 = vmatpush1.bf16.msra.mxu0 %v3172
    %3432 = vmatprep.subr.bf16.mxu0 %v3169
    %3433 = vmatpush1.bf16.msra.mxu0 %v3168
    %3434 = vmatprep.subr.bf16.mxu0 %v3165
    %3435 = vmatpush1.bf16.msra.mxu0 %v3164
    %3436 = vmatprep.subr.bf16.mxu0 %v3225
    %3437 = vmatpush2.bf16.msra.mxu0 %v3224
    %3438 = vmatprep.subr.bf16.mxu0 %v3221
    %3439 = vmatpush2.bf16.msra.mxu0 %v3220
    %3440 = vmatprep.subr.bf16.mxu0 %v3217
    %3441 = vmatpush2.bf16.msra.mxu0 %v3216
    %3442 = vmatprep.subr.bf16.mxu0 %v3213
    %3443 = vmatpush2.bf16.msra.mxu0 %v3212
    %3444 = vmatprep.subr.bf16.mxu0 %v3209
    %3445 = vmatpush2.bf16.msra.mxu0 %v3208
    %3446 = vmatprep.subr.bf16.mxu0 %v3205
    %3447 = vmatpush2.bf16.msra.mxu0 %v3204
    %3448 = vmatprep.subr.bf16.mxu0 %v3201
    %3449 = vmatpush2.bf16.msra.mxu0 %v3200
    %3450 = vmatprep.subr.bf16.mxu0 %v3197
    %3451 = vmatpush2.bf16.msra.mxu0 %v3196
    %3452 = vmatprep.mubr.bf16.mxu0 %v2627
    %3453 = vmatmul.mubr.bf16.gmra.mxu0 %v2626
    %v3454 = vpop.f32.mrf.mxu0
    %v3455 = vadd.f32 %v2763, %v3454
    %v3456 = vpop.f32.mrf.mxu0
    %v3457 = vadd.f32 %v2767, %v3456
    %v3458 = vpop.f32.mrf.mxu0
    %v3459 = vpop.f32.mrf.mxu0
    %3460 = vdwg.mxu0
    %3461 = vmatprep.subr.bf16.mxu0 %v3257
    %3462 = vmatpush1.bf16.msra.mxu0 %v3256
    %3463 = vmatprep.subr.bf16.mxu0 %v3253
    %3464 = vmatpush1.bf16.msra.mxu0 %v3252
    %3465 = vmatprep.subr.bf16.mxu0 %v3249
    %3466 = vmatpush1.bf16.msra.mxu0 %v3248
    %3467 = vmatprep.subr.bf16.mxu0 %v3245
    %3468 = vmatpush1.bf16.msra.mxu0 %v3244
    %3469 = vmatprep.subr.bf16.mxu0 %v3241
    %3470 = vmatpush1.bf16.msra.mxu0 %v3240
    %3471 = vmatprep.subr.bf16.mxu0 %v3237
    %3472 = vmatpush1.bf16.msra.mxu0 %v3236
    %3473 = vmatprep.subr.bf16.mxu0 %v3233
    %3474 = vmatpush1.bf16.msra.mxu0 %v3232
    %3475 = vmatprep.subr.bf16.mxu0 %v3229
    %3476 = vmatpush1.bf16.msra.mxu0 %v3228
    %3477 = vmatprep.subr.bf16.mxu0 %v3289
    %3478 = vmatpush2.bf16.msra.mxu0 %v3288
    %3479 = vmatprep.subr.bf16.mxu0 %v3285
    %3480 = vmatpush2.bf16.msra.mxu0 %v3284
    %3481 = vmatprep.subr.bf16.mxu0 %v3281
    %3482 = vmatpush2.bf16.msra.mxu0 %v3280
    %3483 = vmatprep.subr.bf16.mxu0 %v3277
    %3484 = vmatpush2.bf16.msra.mxu0 %v3276
    %3485 = vmatprep.subr.bf16.mxu0 %v3273
    %3486 = vmatpush2.bf16.msra.mxu0 %v3272
    %3487 = vmatprep.subr.bf16.mxu0 %v3269
    %3488 = vmatpush2.bf16.msra.mxu0 %v3268
    %3489 = vmatprep.subr.bf16.mxu0 %v3265
    %3490 = vmatpush2.bf16.msra.mxu0 %v3264
    %3491 = vmatprep.subr.bf16.mxu0 %v3261
    %3492 = vmatpush2.bf16.msra.mxu0 %v3260
    %3493 = vmatprep.mubr.bf16.mxu0 %v2629
    %3494 = vmatmul.mubr.bf16.gmra.mxu0 %v2628
    %v3495 = vpop.f32.mrf.mxu0
    %v3496 = vadd.f32 %v3455, %v3495
    %v3497 = vpop.f32.mrf.mxu0
    %v3498 = vadd.f32 %v3457, %v3497
    %v3499 = vpop.f32.mrf.mxu0
    %v3500 = vpop.f32.mrf.mxu0
    %3501 = vdwg.mxu0
    %3502 = vmatprep.subr.bf16.mxu0 %v3195
    %3503 = vmatpush1.bf16.msra.mxu0 %v3194
    %3504 = vmatprep.subr.bf16.mxu0 %v3191
    %3505 = vmatpush1.bf16.msra.mxu0 %v3190
    %3506 = vmatprep.subr.bf16.mxu0 %v3187
    %3507 = vmatpush1.bf16.msra.mxu0 %v3186
    %3508 = vmatprep.subr.bf16.mxu0 %v3183
    %3509 = vmatpush1.bf16.msra.mxu0 %v3182
    %3510 = vmatprep.subr.bf16.mxu0 %v3179
    %3511 = vmatpush1.bf16.msra.mxu0 %v3178
    %3512 = vmatprep.subr.bf16.mxu0 %v3175
    %3513 = vmatpush1.bf16.msra.mxu0 %v3174
    %3514 = vmatprep.subr.bf16.mxu0 %v3171
    %3515 = vmatpush1.bf16.msra.mxu0 %v3170
    %3516 = vmatprep.subr.bf16.mxu0 %v3167
    %3517 = vmatpush1.bf16.msra.mxu0 %v3166
    %3518 = vmatprep.subr.bf16.mxu0 %v3227
    %3519 = vmatpush2.bf16.msra.mxu0 %v3226
    %3520 = vmatprep.subr.bf16.mxu0 %v3223
    %3521 = vmatpush2.bf16.msra.mxu0 %v3222
    %3522 = vmatprep.subr.bf16.mxu0 %v3219
    %3523 = vmatpush2.bf16.msra.mxu0 %v3218
    %3524 = vmatprep.subr.bf16.mxu0 %v3215
    %3525 = vmatpush2.bf16.msra.mxu0 %v3214
    %3526 = vmatprep.subr.bf16.mxu0 %v3211
    %3527 = vmatpush2.bf16.msra.mxu0 %v3210
    %3528 = vmatprep.subr.bf16.mxu0 %v3207
    %3529 = vmatpush2.bf16.msra.mxu0 %v3206
    %3530 = vmatprep.subr.bf16.mxu0 %v3203
    %3531 = vmatpush2.bf16.msra.mxu0 %v3202
    %3532 = vmatprep.subr.bf16.mxu0 %v3199
    %3533 = vmatpush2.bf16.msra.mxu0 %v3198
    %3534 = vmatprep.mubr.bf16.mxu0 %v2627
    %3535 = vmatmul.mubr.bf16.gmra.mxu0 %v2626
    %v3536 = vpop.f32.mrf.mxu0
    %v3537 = vadd.f32 %v2771, %v3536
    %v3538 = vpop.f32.mrf.mxu0
    %v3539 = vadd.f32 %v2775, %v3538
    %v3540 = vpop.f32.mrf.mxu0
    %v3541 = vpop.f32.mrf.mxu0
    %3542 = vdwg.mxu0
    %3543 = vmatprep.subr.bf16.mxu0 %v3259
    %3544 = vmatpush1.bf16.msra.mxu0 %v3258
    %3545 = vmatprep.subr.bf16.mxu0 %v3255
    %3546 = vmatpush1.bf16.msra.mxu0 %v3254
    %3547 = vmatprep.subr.bf16.mxu0 %v3251
    %3548 = vmatpush1.bf16.msra.mxu0 %v3250
    %3549 = vmatprep.subr.bf16.mxu0 %v3247
    %3550 = vmatpush1.bf16.msra.mxu0 %v3246
    %3551 = vmatprep.subr.bf16.mxu0 %v3243
    %3552 = vmatpush1.bf16.msra.mxu0 %v3242
    %3553 = vmatprep.subr.bf16.mxu0 %v3239
    %3554 = vmatpush1.bf16.msra.mxu0 %v3238
    %3555 = vmatprep.subr.bf16.mxu0 %v3235
    %3556 = vmatpush1.bf16.msra.mxu0 %v3234
    %3557 = vmatprep.subr.bf16.mxu0 %v3231
    %3558 = vmatpush1.bf16.msra.mxu0 %v3230
    %3559 = vmatprep.subr.bf16.mxu0 %v3291
    %3560 = vmatpush2.bf16.msra.mxu0 %v3290
    %3561 = vmatprep.subr.bf16.mxu0 %v3287
    %3562 = vmatpush2.bf16.msra.mxu0 %v3286
    %3563 = vmatprep.subr.bf16.mxu0 %v3283
    %3564 = vmatpush2.bf16.msra.mxu0 %v3282
    %3565 = vmatprep.subr.bf16.mxu0 %v3279
    %3566 = vmatpush2.bf16.msra.mxu0 %v3278
    %3567 = vmatprep.subr.bf16.mxu0 %v3275
    %3568 = vmatpush2.bf16.msra.mxu0 %v3274
    %3569 = vmatprep.subr.bf16.mxu0 %v3271
    %3570 = vmatpush2.bf16.msra.mxu0 %v3270
    %3571 = vmatprep.subr.bf16.mxu0 %v3267
    %3572 = vmatpush2.bf16.msra.mxu0 %v3266
    %3573 = vmatprep.subr.bf16.mxu0 %v3263
    %3574 = vmatpush2.bf16.msra.mxu0 %v3262
    %3575 = vmatprep.mubr.bf16.mxu0 %v2629
    %3576 = vmatmul.mubr.bf16.gmra.mxu0 %v2628
    %v3577 = vpop.f32.mrf.mxu0
    %v3578 = vadd.f32 %v3537, %v3577
    %v3579 = vpop.f32.mrf.mxu0
    %v3580 = vadd.f32 %v3539, %v3579
    %v3581 = vpop.f32.mrf.mxu0
    %v3582 = vpop.f32.mrf.mxu0
    %3583 = vdwg.mxu0
    %v3584 = vadd.f32 %v3496, %v639
    %v3585 = vadd.f32 %v3498, %v641
    %v3586 = vadd.f32 %v3578, %v680
    %v3587 = vadd.f32 %v3580, %v682
    %v3588 = vmax.f32 %v3584, 0.0
    %v3589 = vmax.f32 %v3585, 0.0
    %v3590 = vmax.f32 %v3586, 0.0
    %v3591 = vmax.f32 %v3587, 0.0
    %v3592 = vpack.c.bf16 %v3588, %v3588
    %v3593 = vpack.c.bf16 %v3589, %v3589
    %v3594 = vpack.c.bf16 %v3590, %v3590
    %v3595 = vpack.c.bf16 %v3591, %v3591
    %v3596 = vld [vmem:[#allocation13] sm:$0xf]
    %v3597 = vld [vmem:[#allocation13 + $0x4] sm:$0xf]
    %v3598 = vld [vmem:[#allocation13 + $0x8] sm:$0xf]
    %v3599 = vld [vmem:[#allocation13 + $0xc] sm:$0xf]
    %v3600 = vld [vmem:[#allocation13 + $0x10] sm:$0xf]
    %v3601 = vld [vmem:[#allocation13 + $0x14] sm:$0xf]
    %v3602 = vld [vmem:[#allocation13 + $0x18] sm:$0xf]
    %v3603 = vld [vmem:[#allocation13 + $0x1c] sm:$0xf]
    %v3604 = vld [vmem:[#allocation13 + $0x20] sm:$0xf]
    %v3605 = vld [vmem:[#allocation13 + $0x24] sm:$0xf]
    %v3606 = vld [vmem:[#allocation13 + $0x28] sm:$0xf]
    %v3607 = vld [vmem:[#allocation13 + $0x2c] sm:$0xf]
    %v3608 = vld [vmem:[#allocation13 + $0x30] sm:$0xf]
    %v3609 = vld [vmem:[#allocation13 + $0x34] sm:$0xf]
    %v3610 = vld [vmem:[#allocation13 + $0x38] sm:$0xf]
    %v3611 = vld [vmem:[#allocation13 + $0x3c] sm:$0xf]
    %v3612 = vld [vmem:[#allocation13 + $0x40] sm:$0xf]
    %v3613 = vld [vmem:[#allocation13 + $0x44] sm:$0xf]
    %v3614 = vld [vmem:[#allocation13 + $0x48] sm:$0xf]
    %v3615 = vld [vmem:[#allocation13 + $0x4c] sm:$0xf]
    %v3616 = vld [vmem:[#allocation13 + $0x50] sm:$0xf]
    %v3617 = vld [vmem:[#allocation13 + $0x54] sm:$0xf]
    %v3618 = vld [vmem:[#allocation13 + $0x58] sm:$0xf]
    %v3619 = vld [vmem:[#allocation13 + $0x5c] sm:$0xf]
    %v3620 = vld [vmem:[#allocation13 + $0x60] sm:$0xf]
    %v3621 = vld [vmem:[#allocation13 + $0x64] sm:$0xf]
    %v3622 = vld [vmem:[#allocation13 + $0x68] sm:$0xf]
    %v3623 = vld [vmem:[#allocation13 + $0x6c] sm:$0xf]
    %v3624 = vld [vmem:[#allocation13 + $0x70] sm:$0xf]
    %v3625 = vld [vmem:[#allocation13 + $0x74] sm:$0xf]
    %v3626 = vld [vmem:[#allocation13 + $0x78] sm:$0xf]
    %v3627 = vld [vmem:[#allocation13 + $0x7c] sm:$0xf]
    %v3628 = vld [vmem:[#allocation13 + $0x80] sm:$0xf]
    %v3629 = vld [vmem:[#allocation13 + $0x84] sm:$0xf]
    %v3630 = vld [vmem:[#allocation13 + $0x88] sm:$0xf]
    %v3631 = vld [vmem:[#allocation13 + $0x8c] sm:$0xf]
    %v3632 = vld [vmem:[#allocation13 + $0x90] sm:$0xf]
    %v3633 = vld [vmem:[#allocation13 + $0x94] sm:$0xf]
    %v3634 = vld [vmem:[#allocation13 + $0x98] sm:$0xf]
    %v3635 = vld [vmem:[#allocation13 + $0x9c] sm:$0xf]
    %v3636 = vld [vmem:[#allocation13 + $0xa0] sm:$0xf]
    %v3637 = vld [vmem:[#allocation13 + $0xa4] sm:$0xf]
    %v3638 = vld [vmem:[#allocation13 + $0xa8] sm:$0xf]
    %v3639 = vld [vmem:[#allocation13 + $0xac] sm:$0xf]
    %v3640 = vld [vmem:[#allocation13 + $0xb0] sm:$0xf]
    %v3641 = vld [vmem:[#allocation13 + $0xb4] sm:$0xf]
    %v3642 = vld [vmem:[#allocation13 + $0xb8] sm:$0xf]
    %v3643 = vld [vmem:[#allocation13 + $0xbc] sm:$0xf]
    %v3644 = vld [vmem:[#allocation13 + $0xc0] sm:$0xf]
    %v3645 = vld [vmem:[#allocation13 + $0xc4] sm:$0xf]
    %v3646 = vld [vmem:[#allocation13 + $0xc8] sm:$0xf]
    %v3647 = vld [vmem:[#allocation13 + $0xcc] sm:$0xf]
    %v3648 = vld [vmem:[#allocation13 + $0xd0] sm:$0xf]
    %v3649 = vld [vmem:[#allocation13 + $0xd4] sm:$0xf]
    %v3650 = vld [vmem:[#allocation13 + $0xd8] sm:$0xf]
    %v3651 = vld [vmem:[#allocation13 + $0xdc] sm:$0xf]
    %v3652 = vld [vmem:[#allocation13 + $0xe0] sm:$0xf]
    %v3653 = vld [vmem:[#allocation13 + $0xe4] sm:$0xf]
    %v3654 = vld [vmem:[#allocation13 + $0xe8] sm:$0xf]
    %v3655 = vld [vmem:[#allocation13 + $0xec] sm:$0xf]
    %v3656 = vld [vmem:[#allocation13 + $0xf0] sm:$0xf]
    %v3657 = vld [vmem:[#allocation13 + $0xf4] sm:$0xf]
    %v3658 = vld [vmem:[#allocation13 + $0xf8] sm:$0xf]
    %v3659 = vld [vmem:[#allocation13 + $0xfc] sm:$0xf]
    %v3660 = vld [vmem:[%s10] sm:$0x1]
    %v3662 = vlaneseq
    %v3663 = vshrl.u32 %v3662, 7
    %v3664 = vsub.s32 0, %v3663
    %v3665 = vrot.slane %v3660, %v3664
    %v3731 = vunpack.c.l.b16 %v3596
    %v3732 = vunpack.c.l.b16 %v3597
    %v3733 = vunpack.c.l.b16 %v3598
    %v3734 = vunpack.c.l.b16 %v3599
    %v3735 = vunpack.c.l.b16 %v3600
    %v3736 = vunpack.c.l.b16 %v3601
    %v3737 = vunpack.c.l.b16 %v3602
    %v3738 = vunpack.c.l.b16 %v3603
    %v3739 = vunpack.c.l.b16 %v3604
    %v3740 = vunpack.c.l.b16 %v3605
    %v3741 = vunpack.c.l.b16 %v3606
    %v3742 = vunpack.c.l.b16 %v3607
    %v3743 = vunpack.c.l.b16 %v3608
    %v3744 = vunpack.c.l.b16 %v3609
    %v3745 = vunpack.c.l.b16 %v3610
    %v3746 = vunpack.c.l.b16 %v3611
    %v3747 = vunpack.c.l.b16 %v3612
    %v3748 = vunpack.c.l.b16 %v3613
    %v3749 = vunpack.c.l.b16 %v3614
    %v3750 = vunpack.c.l.b16 %v3615
    %v3751 = vunpack.c.l.b16 %v3616
    %v3752 = vunpack.c.l.b16 %v3617
    %v3753 = vunpack.c.l.b16 %v3618
    %v3754 = vunpack.c.l.b16 %v3619
    %v3755 = vunpack.c.l.b16 %v3620
    %v3756 = vunpack.c.l.b16 %v3621
    %v3757 = vunpack.c.l.b16 %v3622
    %v3758 = vunpack.c.l.b16 %v3623
    %v3759 = vunpack.c.l.b16 %v3624
    %v3760 = vunpack.c.l.b16 %v3625
    %v3761 = vunpack.c.l.b16 %v3626
    %v3762 = vunpack.c.l.b16 %v3627
    %v3763 = vunpack.c.l.b16 %v3628
    %v3764 = vunpack.c.l.b16 %v3629
    %v3765 = vunpack.c.l.b16 %v3630
    %v3766 = vunpack.c.l.b16 %v3631
    %v3767 = vunpack.c.l.b16 %v3632
    %v3768 = vunpack.c.l.b16 %v3633
    %v3769 = vunpack.c.l.b16 %v3634
    %v3770 = vunpack.c.l.b16 %v3635
    %v3771 = vunpack.c.l.b16 %v3636
    %v3772 = vunpack.c.l.b16 %v3637
    %v3773 = vunpack.c.l.b16 %v3638
    %v3774 = vunpack.c.l.b16 %v3639
    %v3775 = vunpack.c.l.b16 %v3640
    %v3776 = vunpack.c.l.b16 %v3641
    %v3777 = vunpack.c.l.b16 %v3642
    %v3778 = vunpack.c.l.b16 %v3643
    %v3779 = vunpack.c.l.b16 %v3644
    %v3780 = vunpack.c.l.b16 %v3645
    %v3781 = vunpack.c.l.b16 %v3646
    %v3782 = vunpack.c.l.b16 %v3647
    %v3783 = vunpack.c.l.b16 %v3648
    %v3784 = vunpack.c.l.b16 %v3649
    %v3785 = vunpack.c.l.b16 %v3650
    %v3786 = vunpack.c.l.b16 %v3651
    %v3787 = vunpack.c.l.b16 %v3652
    %v3788 = vunpack.c.l.b16 %v3653
    %v3789 = vunpack.c.l.b16 %v3654
    %v3790 = vunpack.c.l.b16 %v3655
    %v3791 = vunpack.c.l.b16 %v3656
    %v3792 = vunpack.c.l.b16 %v3657
    %v3793 = vunpack.c.l.b16 %v3658
    %v3794 = vunpack.c.l.b16 %v3659
    %v3795 = vpack.c.b16 %v3732, %v3731
    %v3796 = vpack.c.b16 %v3734, %v3733
    %v3797 = vpack.c.b16 %v3736, %v3735
    %v3798 = vpack.c.b16 %v3738, %v3737
    %v3799 = vpack.c.b16 %v3740, %v3739
    %v3800 = vpack.c.b16 %v3742, %v3741
    %v3801 = vpack.c.b16 %v3744, %v3743
    %v3802 = vpack.c.b16 %v3746, %v3745
    %v3803 = vpack.c.b16 %v3748, %v3747
    %v3804 = vpack.c.b16 %v3750, %v3749
    %v3805 = vpack.c.b16 %v3752, %v3751
    %v3806 = vpack.c.b16 %v3754, %v3753
    %v3807 = vpack.c.b16 %v3756, %v3755
    %v3808 = vpack.c.b16 %v3758, %v3757
    %v3809 = vpack.c.b16 %v3760, %v3759
    %v3810 = vpack.c.b16 %v3762, %v3761
    %v3811 = vpack.c.b16 %v3764, %v3763
    %v3812 = vpack.c.b16 %v3766, %v3765
    %v3813 = vpack.c.b16 %v3768, %v3767
    %v3814 = vpack.c.b16 %v3770, %v3769
    %v3815 = vpack.c.b16 %v3772, %v3771
    %v3816 = vpack.c.b16 %v3774, %v3773
    %v3817 = vpack.c.b16 %v3776, %v3775
    %v3818 = vpack.c.b16 %v3778, %v3777
    %v3819 = vpack.c.b16 %v3780, %v3779
    %v3820 = vpack.c.b16 %v3782, %v3781
    %v3821 = vpack.c.b16 %v3784, %v3783
    %v3822 = vpack.c.b16 %v3786, %v3785
    %v3823 = vpack.c.b16 %v3788, %v3787
    %v3824 = vpack.c.b16 %v3790, %v3789
    %v3825 = vpack.c.b16 %v3792, %v3791
    %v3826 = vpack.c.b16 %v3794, %v3793
    %3859 = vmatprep.subr.bf16.mxu0 0
    %3860 = vmatpush1.bf16.msra.mxu0 %v3802
    %3861 = vmatprep.subr.bf16.mxu0 0
    %3862 = vmatpush1.bf16.msra.mxu0 %v3801
    %3863 = vmatprep.subr.bf16.mxu0 0
    %3864 = vmatpush1.bf16.msra.mxu0 %v3800
    %3865 = vmatprep.subr.bf16.mxu0 0
    %3866 = vmatpush1.bf16.msra.mxu0 %v3799
    %3867 = vmatprep.subr.bf16.mxu0 0
    %3868 = vmatpush1.bf16.msra.mxu0 %v3798
    %3869 = vmatprep.subr.bf16.mxu0 0
    %3870 = vmatpush1.bf16.msra.mxu0 %v3797
    %3871 = vmatprep.subr.bf16.mxu0 0
    %3872 = vmatpush1.bf16.msra.mxu0 %v3796
    %3873 = vmatprep.subr.bf16.mxu0 0
    %3874 = vmatpush1.bf16.msra.mxu0 %v3795
    %3875 = vmatprep.subr.bf16.mxu0 0
    %3876 = vmatpush2.bf16.msra.mxu0 %v3810
    %3877 = vmatprep.subr.bf16.mxu0 0
    %3878 = vmatpush2.bf16.msra.mxu0 %v3809
    %3879 = vmatprep.subr.bf16.mxu0 0
    %3880 = vmatpush2.bf16.msra.mxu0 %v3808
    %3881 = vmatprep.subr.bf16.mxu0 0
    %3882 = vmatpush2.bf16.msra.mxu0 %v3807
    %3883 = vmatprep.subr.bf16.mxu0 0
    %3884 = vmatpush2.bf16.msra.mxu0 %v3806
    %3885 = vmatprep.subr.bf16.mxu0 0
    %3886 = vmatpush2.bf16.msra.mxu0 %v3805
    %3887 = vmatprep.subr.bf16.mxu0 0
    %3888 = vmatpush2.bf16.msra.mxu0 %v3804
    %3889 = vmatprep.subr.bf16.mxu0 0
    %3890 = vmatpush2.bf16.msra.mxu0 %v3803
    %3891 = vmatprep.mubr.bf16.mxu0 %v3593
    %3892 = vmatmul.mubr.bf16.gmra.mxu0 %v3592
    %v3893 = vpop.f32.mrf.mxu0
    %v3894 = vadd.f32 %v3665, %v3893
    %v3895 = vpop.f32.mrf.mxu0
    %v3896 = vpop.f32.mrf.mxu0
    %v3897 = vpop.f32.mrf.mxu0
    %3898 = vdwg.mxu0
    %3899 = vmatprep.subr.bf16.mxu0 0
    %3900 = vmatpush1.bf16.msra.mxu0 %v3818
    %3901 = vmatprep.subr.bf16.mxu0 0
    %3902 = vmatpush1.bf16.msra.mxu0 %v3817
    %3903 = vmatprep.subr.bf16.mxu0 0
    %3904 = vmatpush1.bf16.msra.mxu0 %v3816
    %3905 = vmatprep.subr.bf16.mxu0 0
    %3906 = vmatpush1.bf16.msra.mxu0 %v3815
    %3907 = vmatprep.subr.bf16.mxu0 0
    %3908 = vmatpush1.bf16.msra.mxu0 %v3814
    %3909 = vmatprep.subr.bf16.mxu0 0
    %3910 = vmatpush1.bf16.msra.mxu0 %v3813
    %3911 = vmatprep.subr.bf16.mxu0 0
    %3912 = vmatpush1.bf16.msra.mxu0 %v3812
    %3913 = vmatprep.subr.bf16.mxu0 0
    %3914 = vmatpush1.bf16.msra.mxu0 %v3811
    %3915 = vmatprep.subr.bf16.mxu0 0
    %3916 = vmatpush2.bf16.msra.mxu0 %v3826
    %3917 = vmatprep.subr.bf16.mxu0 0
    %3918 = vmatpush2.bf16.msra.mxu0 %v3825
    %3919 = vmatprep.subr.bf16.mxu0 0
    %3920 = vmatpush2.bf16.msra.mxu0 %v3824
    %3921 = vmatprep.subr.bf16.mxu0 0
    %3922 = vmatpush2.bf16.msra.mxu0 %v3823
    %3923 = vmatprep.subr.bf16.mxu0 0
    %3924 = vmatpush2.bf16.msra.mxu0 %v3822
    %3925 = vmatprep.subr.bf16.mxu0 0
    %3926 = vmatpush2.bf16.msra.mxu0 %v3821
    %3927 = vmatprep.subr.bf16.mxu0 0
    %3928 = vmatpush2.bf16.msra.mxu0 %v3820
    %3929 = vmatprep.subr.bf16.mxu0 0
    %3930 = vmatpush2.bf16.msra.mxu0 %v3819
    %3931 = vmatprep.mubr.bf16.mxu0 %v3595
    %3932 = vmatmul.mubr.bf16.gmra.mxu0 %v3594
    %v3933 = vpop.f32.mrf.mxu0
    %v3934 = vadd.f32 %v3894, %v3933
    %v3935 = vpop.f32.mrf.mxu0
    %v3936 = vpop.f32.mrf.mxu0
    %v3937 = vpop.f32.mrf.mxu0
    %3938 = vdwg.mxu0
    %v3939 = vpack.c.bf16 %v3934, %v3934
    %v3940 = vld [vmem:[#allocation14] sm:$0xf]
    %v3941 = vld [vmem:[#allocation14 + $0x4] sm:$0xf]
    %v3942 = vld [vmem:[#allocation14 + $0x8] sm:$0xf]
    %v3943 = vld [vmem:[#allocation14 + $0xc] sm:$0xf]
    %v3944 = vld [vmem:[#allocation14 + $0x10] sm:$0xf]
    %v3945 = vld [vmem:[#allocation14 + $0x14] sm:$0xf]
    %v3946 = vld [vmem:[#allocation14 + $0x18] sm:$0xf]
    %v3947 = vld [vmem:[#allocation14 + $0x1c] sm:$0xf]
    %v3948 = vld [vmem:[#allocation14 + $0x20] sm:$0xf]
    %v3949 = vld [vmem:[#allocation14 + $0x24] sm:$0xf]
    %v3950 = vld [vmem:[#allocation14 + $0x28] sm:$0xf]
    %v3951 = vld [vmem:[#allocation14 + $0x2c] sm:$0xf]
    %v3952 = vld [vmem:[#allocation14 + $0x30] sm:$0xf]
    %v3953 = vld [vmem:[#allocation14 + $0x34] sm:$0xf]
    %v3954 = vld [vmem:[#allocation14 + $0x38] sm:$0xf]
    %v3955 = vld [vmem:[#allocation14 + $0x3c] sm:$0xf]
    %v3956 = vld [vmem:[%s12] sm:$0x1]
    %v3958 = vlaneseq
    %v3959 = vshrl.u32 %v3958, 7
    %v3960 = vsub.s32 0, %v3959
    %v3961 = vrot.slane %v3956, %v3960
    %v3979 = vunpack.c.l.b16 %v3940
    %v3980 = vunpack.c.l.b16 %v3941
    %v3981 = vunpack.c.l.b16 %v3942
    %v3982 = vunpack.c.l.b16 %v3943
    %v3983 = vunpack.c.l.b16 %v3944
    %v3984 = vunpack.c.l.b16 %v3945
    %v3985 = vunpack.c.l.b16 %v3946
    %v3986 = vunpack.c.l.b16 %v3947
    %v3987 = vunpack.c.l.b16 %v3948
    %v3988 = vunpack.c.l.b16 %v3949
    %v3989 = vunpack.c.l.b16 %v3950
    %v3990 = vunpack.c.l.b16 %v3951
    %v3991 = vunpack.c.l.b16 %v3952
    %v3992 = vunpack.c.l.b16 %v3953
    %v3993 = vunpack.c.l.b16 %v3954
    %v3994 = vunpack.c.l.b16 %v3955
    %v3995 = vpack.c.b16 %v3980, %v3979
    %v3996 = vpack.c.b16 %v3982, %v3981
    %v3997 = vpack.c.b16 %v3984, %v3983
    %v3998 = vpack.c.b16 %v3986, %v3985
    %v3999 = vpack.c.b16 %v3988, %v3987
    %v4000 = vpack.c.b16 %v3990, %v3989
    %v4001 = vpack.c.b16 %v3992, %v3991
    %v4002 = vpack.c.b16 %v3994, %v3993
    %4011 = vmatprep.subr.bf16.mxu0 0
    %4012 = vmatpush1.bf16.msra.mxu0 %v4002
    %4013 = vmatprep.subr.bf16.mxu0 0
    %4014 = vmatpush1.bf16.msra.mxu0 %v4001
    %4015 = vmatprep.subr.bf16.mxu0 0
    %4016 = vmatpush1.bf16.msra.mxu0 %v4000
    %4017 = vmatprep.subr.bf16.mxu0 0
    %4018 = vmatpush1.bf16.msra.mxu0 %v3999
    %4019 = vmatprep.subr.bf16.mxu0 0
    %4020 = vmatpush1.bf16.msra.mxu0 %v3998
    %4021 = vmatprep.subr.bf16.mxu0 0
    %4022 = vmatpush1.bf16.msra.mxu0 %v3997
    %4023 = vmatprep.subr.bf16.mxu0 0
    %4024 = vmatpush1.bf16.msra.mxu0 %v3996
    %4025 = vmatprep.subr.bf16.mxu0 0
    %4026 = vmatpush1.bf16.msra.mxu0 %v3995
    %4027 = vmatprep.subr.bf16.mxu0 0
    %4028 = vmatpush2.bf16.msra.mxu0 0
    %4029 = vmatprep.subr.bf16.mxu0 0
    %4030 = vmatpush2.bf16.msra.mxu0 0
    %4031 = vmatprep.subr.bf16.mxu0 0
    %4032 = vmatpush2.bf16.msra.mxu0 0
    %4033 = vmatprep.subr.bf16.mxu0 0
    %4034 = vmatpush2.bf16.msra.mxu0 0
    %4035 = vmatprep.subr.bf16.mxu0 0
    %4036 = vmatpush2.bf16.msra.mxu0 0
    %4037 = vmatprep.subr.bf16.mxu0 0
    %4038 = vmatpush2.bf16.msra.mxu0 0
    %4039 = vmatprep.subr.bf16.mxu0 0
    %4040 = vmatpush2.bf16.msra.mxu0 0
    %4041 = vmatprep.subr.bf16.mxu0 0
    %4042 = vmatpush2.bf16.msra.mxu0 0
    %4043 = vmatprep.mubr.bf16.mxu0 0
    %4044 = vmatmul.mubr.bf16.gmra.mxu0 %v3939
    %v4045 = vpop.f32.mrf.mxu0
    %v4046 = vadd.f32 %v3961, %v4045
    %v4047 = vpop.f32.mrf.mxu0
    %v4048 = vpop.f32.mrf.mxu0
    %v4049 = vpop.f32.mrf.mxu0
    %4050 = vdwg.mxu0
    %vm4051 = vcmp.gt.f32.partialorder %v4046, 0.0
    %v4052 = vmul.f32 %v4046, 0.01
    %v4053 = vsel %vm4051, %v4046, %v4052
    %v4054 = vpack.c.bf16 %v4053, %v4053
    %v4055 = vld [vmem:[#allocation16] sm:$0xf]
    %v4056 = vld [vmem:[#allocation16 + $0x4] sm:$0xf]
    %v4057 = vld [vmem:[#allocation16 + $0x8] sm:$0xf]
    %v4058 = vld [vmem:[#allocation16 + $0xc] sm:$0xf]
    %v4059 = vld [vmem:[#allocation16 + $0x10] sm:$0xf]
    %v4060 = vld [vmem:[#allocation16 + $0x14] sm:$0xf]
    %v4061 = vld [vmem:[#allocation16 + $0x18] sm:$0xf]
    %v4062 = vld [vmem:[#allocation16 + $0x1c] sm:$0xf]
    %v4063 = vld [vmem:[#allocation16 + $0x20] sm:$0xf]
    %v4064 = vld [vmem:[#allocation16 + $0x24] sm:$0xf]
    %v4065 = vld [vmem:[#allocation16 + $0x28] sm:$0xf]
    %v4066 = vld [vmem:[#allocation16 + $0x2c] sm:$0xf]
    %v4067 = vld [vmem:[#allocation16 + $0x30] sm:$0xf]
    %v4068 = vld [vmem:[#allocation16 + $0x34] sm:$0xf]
    %v4069 = vld [vmem:[#allocation16 + $0x38] sm:$0xf]
    %v4070 = vld [vmem:[#allocation16 + $0x3c] sm:$0xf]
    %v4071 = vld [vmem:[%s14] sm:$0x1]
    %v4073 = vlaneseq
    %v4074 = vshrl.u32 %v4073, 7
    %v4075 = vsub.s32 0, %v4074
    %v4076 = vrot.slane %v4071, %v4075
    %v4094 = vunpack.c.l.b16 %v4055
    %v4095 = vunpack.c.l.b16 %v4056
    %v4096 = vunpack.c.l.b16 %v4057
    %v4097 = vunpack.c.l.b16 %v4058
    %v4098 = vunpack.c.l.b16 %v4059
    %v4099 = vunpack.c.l.b16 %v4060
    %v4100 = vunpack.c.l.b16 %v4061
    %v4101 = vunpack.c.l.b16 %v4062
    %v4102 = vunpack.c.l.b16 %v4063
    %v4103 = vunpack.c.l.b16 %v4064
    %v4104 = vunpack.c.l.b16 %v4065
    %v4105 = vunpack.c.l.b16 %v4066
    %v4106 = vunpack.c.l.b16 %v4067
    %v4107 = vunpack.c.l.b16 %v4068
    %v4108 = vunpack.c.l.b16 %v4069
    %v4109 = vunpack.c.l.b16 %v4070
    %v4110 = vpack.c.b16 %v4095, %v4094
    %v4111 = vpack.c.b16 %v4097, %v4096
    %v4112 = vpack.c.b16 %v4099, %v4098
    %v4113 = vpack.c.b16 %v4101, %v4100
    %v4114 = vpack.c.b16 %v4103, %v4102
    %v4115 = vpack.c.b16 %v4105, %v4104
    %v4116 = vpack.c.b16 %v4107, %v4106
    %v4117 = vpack.c.b16 %v4109, %v4108
    %4126 = vmatprep.subr.bf16.mxu0 0
    %4127 = vmatpush1.bf16.msra.mxu0 %v4117
    %4128 = vmatprep.subr.bf16.mxu0 0
    %4129 = vmatpush1.bf16.msra.mxu0 %v4116
    %4130 = vmatprep.subr.bf16.mxu0 0
    %4131 = vmatpush1.bf16.msra.mxu0 %v4115
    %4132 = vmatprep.subr.bf16.mxu0 0
    %4133 = vmatpush1.bf16.msra.mxu0 %v4114
    %4134 = vmatprep.subr.bf16.mxu0 0
    %4135 = vmatpush1.bf16.msra.mxu0 %v4113
    %4136 = vmatprep.subr.bf16.mxu0 0
    %4137 = vmatpush1.bf16.msra.mxu0 %v4112
    %4138 = vmatprep.subr.bf16.mxu0 0
    %4139 = vmatpush1.bf16.msra.mxu0 %v4111
    %4140 = vmatprep.subr.bf16.mxu0 0
    %4141 = vmatpush1.bf16.msra.mxu0 %v4110
    %4142 = vmatprep.subr.bf16.mxu0 0
    %4143 = vmatpush2.bf16.msra.mxu0 0
    %4144 = vmatprep.subr.bf16.mxu0 0
    %4145 = vmatpush2.bf16.msra.mxu0 0
    %4146 = vmatprep.subr.bf16.mxu0 0
    %4147 = vmatpush2.bf16.msra.mxu0 0
    %4148 = vmatprep.subr.bf16.mxu0 0
    %4149 = vmatpush2.bf16.msra.mxu0 0
    %4150 = vmatprep.subr.bf16.mxu0 0
    %4151 = vmatpush2.bf16.msra.mxu0 0
    %4152 = vmatprep.subr.bf16.mxu0 0
    %4153 = vmatpush2.bf16.msra.mxu0 0
    %4154 = vmatprep.subr.bf16.mxu0 0
    %4155 = vmatpush2.bf16.msra.mxu0 0
    %4156 = vmatprep.subr.bf16.mxu0 0
    %4157 = vmatpush2.bf16.msra.mxu0 0
    %4158 = vmatprep.mubr.bf16.mxu0 0
    %4159 = vmatmul.mubr.bf16.gmra.mxu0 %v4054
    %v4160 = vpop.f32.mrf.mxu0
    %v4161 = vadd.f32 %v4076, %v4160
    %v4162 = vpop.f32.mrf.mxu0
    %v4163 = vpop.f32.mrf.mxu0
    %v4164 = vpop.f32.mrf.mxu0
    %4165 = vdwg.mxu0
    %v4166 = vpack.c.bf16 %v4161, %v4161
    %v4167 = vld [vmem:[#allocation17] sm:$0xf]
    %v4168 = vld [vmem:[#allocation17 + $0x4] sm:$0xf]
    %v4169 = vld [vmem:[#allocation17 + $0x8] sm:$0xf]
    %v4170 = vld [vmem:[#allocation17 + $0xc] sm:$0xf]
    %v4171 = vld [vmem:[#allocation17 + $0x10] sm:$0xf]
    %v4172 = vld [vmem:[#allocation17 + $0x14] sm:$0xf]
    %v4173 = vld [vmem:[#allocation17 + $0x18] sm:$0xf]
    %v4174 = vld [vmem:[#allocation17 + $0x1c] sm:$0xf]
    %v4175 = vld [vmem:[#allocation17 + $0x20] sm:$0xf]
    %v4176 = vld [vmem:[#allocation17 + $0x24] sm:$0xf]
    %v4177 = vld [vmem:[#allocation17 + $0x28] sm:$0xf]
    %v4178 = vld [vmem:[#allocation17 + $0x2c] sm:$0xf]
    %v4179 = vld [vmem:[#allocation17 + $0x30] sm:$0xf]
    %v4180 = vld [vmem:[#allocation17 + $0x34] sm:$0xf]
    %v4181 = vld [vmem:[#allocation17 + $0x38] sm:$0xf]
    %v4182 = vld [vmem:[#allocation17 + $0x3c] sm:$0xf]
    %v4183 = vld [vmem:[%s16] sm:$0x1]
    %v4185 = vlaneseq
    %v4186 = vshrl.u32 %v4185, 7
    %v4187 = vsub.s32 0, %v4186
    %v4188 = vrot.slane %v4183, %v4187
    %v4206 = vunpack.c.l.b16 %v4167
    %v4207 = vunpack.c.l.b16 %v4168
    %v4208 = vunpack.c.l.b16 %v4169
    %v4209 = vunpack.c.l.b16 %v4170
    %v4210 = vunpack.c.l.b16 %v4171
    %v4211 = vunpack.c.l.b16 %v4172
    %v4212 = vunpack.c.l.b16 %v4173
    %v4213 = vunpack.c.l.b16 %v4174
    %v4214 = vunpack.c.l.b16 %v4175
    %v4215 = vunpack.c.l.b16 %v4176
    %v4216 = vunpack.c.l.b16 %v4177
    %v4217 = vunpack.c.l.b16 %v4178
    %v4218 = vunpack.c.l.b16 %v4179
    %v4219 = vunpack.c.l.b16 %v4180
    %v4220 = vunpack.c.l.b16 %v4181
    %v4221 = vunpack.c.l.b16 %v4182
    %v4222 = vpack.c.b16 %v4207, %v4206
    %v4223 = vpack.c.b16 %v4209, %v4208
    %v4224 = vpack.c.b16 %v4211, %v4210
    %v4225 = vpack.c.b16 %v4213, %v4212
    %v4226 = vpack.c.b16 %v4215, %v4214
    %v4227 = vpack.c.b16 %v4217, %v4216
    %v4228 = vpack.c.b16 %v4219, %v4218
    %v4229 = vpack.c.b16 %v4221, %v4220
    %4238 = vmatprep.subr.bf16.mxu0 0
    %4239 = vmatpush1.bf16.msra.mxu0 %v4229
    %4240 = vmatprep.subr.bf16.mxu0 0
    %4241 = vmatpush1.bf16.msra.mxu0 %v4228
    %4242 = vmatprep.subr.bf16.mxu0 0
    %4243 = vmatpush1.bf16.msra.mxu0 %v4227
    %4244 = vmatprep.subr.bf16.mxu0 0
    %4245 = vmatpush1.bf16.msra.mxu0 %v4226
    %4246 = vmatprep.subr.bf16.mxu0 0
    %4247 = vmatpush1.bf16.msra.mxu0 %v4225
    %4248 = vmatprep.subr.bf16.mxu0 0
    %4249 = vmatpush1.bf16.msra.mxu0 %v4224
    %4250 = vmatprep.subr.bf16.mxu0 0
    %4251 = vmatpush1.bf16.msra.mxu0 %v4223
    %4252 = vmatprep.subr.bf16.mxu0 0
    %4253 = vmatpush1.bf16.msra.mxu0 %v4222
    %4254 = vmatprep.subr.bf16.mxu0 0
    %4255 = vmatpush2.bf16.msra.mxu0 0
    %4256 = vmatprep.subr.bf16.mxu0 0
    %4257 = vmatpush2.bf16.msra.mxu0 0
    %4258 = vmatprep.subr.bf16.mxu0 0
    %4259 = vmatpush2.bf16.msra.mxu0 0
    %4260 = vmatprep.subr.bf16.mxu0 0
    %4261 = vmatpush2.bf16.msra.mxu0 0
    %4262 = vmatprep.subr.bf16.mxu0 0
    %4263 = vmatpush2.bf16.msra.mxu0 0
    %4264 = vmatprep.subr.bf16.mxu0 0
    %4265 = vmatpush2.bf16.msra.mxu0 0
    %4266 = vmatprep.subr.bf16.mxu0 0
    %4267 = vmatpush2.bf16.msra.mxu0 0
    %4268 = vmatprep.subr.bf16.mxu0 0
    %4269 = vmatpush2.bf16.msra.mxu0 0
    %4270 = vmatprep.mubr.bf16.mxu0 0
    %4271 = vmatmul.mubr.bf16.gmra.mxu0 %v4166
    %v4272 = vpop.f32.mrf.mxu0
    %v4273 = vadd.f32 %v4188, %v4272
    %v4274 = vpop.f32.mrf.mxu0
    %v4275 = vpop.f32.mrf.mxu0
    %v4276 = vpop.f32.mrf.mxu0
    %4277 = vdwg.mxu0
    %v4278 = vtanh.pop %v4273
    %v4279 = vadd.f32 %v4278, 1.0
    %v4280 = vmul.f32 %v4279, 0.5
    %4281 = vst [vmem:[#allocation19] sm:$0xff] %v4280
    // Predicated region
    $region110: #{tpu_custom_call.1} parent=1 // pred_check
      _
    $region111: #{tpu_custom_call.1} parent=1 // pred_check_branch
      %4283 = sbr.rel (0) target = $region113
    $region112: #{tpu_custom_call.1} parent=1 // pred_region
      %s4285 = ssub.s32 128, 128
      %4286 = vsyncadd [#allocation4], %s4285
      %s4288 = sshll.u32 [#allocation19], 4
      %s4289 = int_to_ptr.vmem [resolvable:$true] %s4288
      %4291 = dma.vmem_to_hbm [thread:$0]  %s4289, 128, %s17, [#allocation4]
    $region113: #{tpu_custom_call.1} parent=1 // pred_fallthru
      _
    // Predicated region
    $region114: #{tpu_custom_call.1} parent=1 // pred_check
      _
    $region115: #{tpu_custom_call.1} parent=1 // pred_check_branch
      %4293 = sbr.rel (0) target = $region117
    $region116: #{tpu_custom_call.1} parent=1 // pred_region
      %4294 = dma.done [#allocation4], 128
    $region117: #{tpu_custom_call.1} parent=1 // pred_fallthru
      _
    %4295 = vsyncpa [#allocation3], 1
    %4296 = vsyncpa [#allocation6], 1
    %4297 = vsyncpa [#allocation9], 1
    %4298 = vsyncpa [#allocation12], 1
    %4299 = vsyncpa [#allocation15], 1
    %4300 = vsyncpa [#allocation18], 1
    %4301 = vsyncpa [#allocation4], 1

</llo_original>
